<compile_context>
chip_gen: v7x
topology: tpu7x:2x2x1
jax: 0.10.0
libtpu: 0.0.40
codegen_flags: <defaults>
</compile_context>

<pallas_src>
import functools
import math

import numpy as np

import jax
import jax.numpy as jnp
from jax import lax
from jax.experimental import pallas as pl
from jax.experimental.pallas import tpu as pltpu


def _round_up(x, m):
    return (x + m - 1) // m * m


# ------------------------------ Pallas kernel ------------------------------

def _encoder_kernel(*args, num_layers, oh_list, b_blk):
    """Fused conv stack + fc + LayerNorm for one block of B_BLK samples.

    args = [xg, W0, b0, W1, b1, ..., wf, b_fc, ln_g, ln_b, out]
      xg  : (1, OH0*B, KIN0)     tap-gathered conv0 input (3 H-taps on lanes)
      W0  : (KIN0, K0)           merged-tap block-Toeplitz conv0 weight (/255 folded)
      Wl  : (3, K_{l-1}, K_l)    per-H-tap block-Toeplitz weights, l >= 1
      bl  : (1, K_l)             width-tiled biases (padded cols are 0)
      wf  : (OH_last, K_last, F) fc weight, NCHW flatten permutation folded in
      b_fc, ln_g, ln_b : (1, F)
      out : (B, F)
    Activation rows are ordered (conv_row, sample) so stride-1 taps are
    contiguous row slices at sublane-aligned (multiple-of-B) offsets.
    """
    xg_ref = args[0]
    ws = [args[1 + 2 * l] for l in range(num_layers)]
    bs = [args[2 + 2 * l] for l in range(num_layers)]
    wf_ref, bfc_ref, g_ref, beta_ref, o_ref = args[1 + 2 * num_layers:]

    # ---- conv0 (stride 2): all three H-taps merged -> ONE full-K matmul ----
    x = xg_ref[0]                                          # (OH0*B, KIN0)
    cdt = x.dtype
    acc = jnp.dot(x, ws[0][...], preferred_element_type=jnp.float32)
    a = jnp.maximum(acc + bs[0][...], 0.0).astype(cdt)     # (OH0*B, K0)

    # ---- stride-1 conv layers: 3 full-K taps, rows shifted by i*B ----
    for l in range(1, num_layers):
        rows = oh_list[l] * b_blk
        acc = None
        for i in range(3):
            lhs = a[i * b_blk:i * b_blk + rows, :]
            t = jnp.dot(lhs, ws[l][i], preferred_element_type=jnp.float32)
            acc = t if acc is None else acc + t
        a = jnp.maximum(acc + bs[l][...], 0.0).astype(cdt)

    # ---- fc: sum over conv-row slabs, each a (B, K=256) @ (K, F) matmul ----
    y = None
    for r in range(oh_list[-1]):
        p = jnp.dot(a[r * b_blk:(r + 1) * b_blk, :], wf_ref[r],
                    preferred_element_type=jnp.float32)
        y = p if y is None else y + p
    y = y + bfc_ref[...]                                   # (B, F) f32

    # ---- LayerNorm (torch eps = 1e-5), statistics in f32 ----
    mean = jnp.mean(y, axis=-1, keepdims=True)
    var = jnp.mean((y - mean) ** 2, axis=-1, keepdims=True)
    y = (y - mean) * lax.rsqrt(var + 1e-5)
    o_ref[...] = y * g_ref[...] + beta_ref[...]


def _encoder_pallas(xg, prep, *, oh_list, b_blk, n_pad, single_buffer_weights):
    conv_w, conv_b = prep["conv_w"], prep["conv_b"]
    wf, bfc, g, beta = prep["fc_w"], prep["fc_b"], prep["ln_g"], prep["ln_b"]
    num_layers = len(conv_w)
    nb = xg.shape[0]
    feat = wf.shape[-1]

    kernel = functools.partial(_encoder_kernel, num_layers=num_layers,
                               oh_list=tuple(oh_list), b_blk=b_blk)

    # Weights / biases: constant index maps (DMA'd once).  Single-buffer them
    # (halves their VMEM footprint) when pl.Buffered is available.
    wkw = {}
    if single_buffer_weights and hasattr(pl, "Buffered"):
        wkw = {"pipeline_mode": pl.Buffered(1)}
    imap2 = lambda gi: (0, 0)
    imap3 = lambda gi: (0, 0, 0)

    def const_spec(a):
        return pl.BlockSpec(a.shape, imap2 if a.ndim == 2 else imap3, **wkw)

    in_specs = [pl.BlockSpec((1,) + tuple(xg.shape[1:]), lambda gi: (gi, 0, 0))]
    ops = [xg]
    for l in range(num_layers):
        in_specs += [const_spec(conv_w[l]), const_spec(conv_b[l])]
        ops += [conv_w[l], conv_b[l]]
    in_specs += [const_spec(wf), const_spec(bfc), const_spec(g), const_spec(beta)]
    ops += [wf, bfc, g, beta]

    out = pl.pallas_call(
        kernel,
        grid=(nb,),
        in_specs=in_specs,
        out_specs=pl.BlockSpec((b_blk, feat), lambda gi: (gi, 0)),
        out_shape=jax.ShapeDtypeStruct((n_pad, feat), jnp.float32),
        compiler_params=pltpu.CompilerParams(
            dimension_semantics=("parallel",)),
    )(*ops)
    return out


# ------------------------- weight preparation (once) ------------------------

def prepare_params(params, obs_shape, num_layers=2, num_filters=32,
                   compute_dtype=jnp.float32):
    """Pre-transform PyTorch-layout weights into kernel-ready Toeplitz form.

    Built with plain numpy (off the hot path), converted to device arrays once.
    """
    c, h, w = obs_shape
    nf = num_filters
    oh = [(h - 3) // 2 + 1]
    ow = [(w - 3) // 2 + 1]
    for _ in range(1, num_layers):
        oh.append(oh[-1] - 2)
        ow.append(ow[-1] - 2)
    lane_mult = max(1, 128 // math.gcd(128, nf))
    owp = [_round_up(o, lane_mult) for o in ow]       # lane-dense padded widths

    wc = w * c
    kin0 = _round_up(3 * wc, 128)                     # merged-tap K, lane padded

    conv_w, conv_b = [], []

    # layer 0 (stride 2): three H-taps stacked along K; /255 folded in.
    w0 = np.asarray(params["conv0_w"], np.float32)    # (nf, c, 3, 3)
    b0 = np.asarray(params["conv0_b"], np.float32)
    W0 = np.zeros((kin0, owp[0] * nf), np.float32)
    for i in range(3):
        for x in range(ow[0]):
            for j in range(3):
                w_in = 2 * x + j
                W0[i * wc + w_in * c:i * wc + (w_in + 1) * c,
                   x * nf:(x + 1) * nf] = w0[:, :, i, j].T / 255.0
    b0f = np.zeros((1, owp[0] * nf), np.float32)
    b0f[0, :ow[0] * nf] = np.tile(b0, ow[0])
    conv_w.append(W0)
    conv_b.append(b0f)

    # layers 1..L-1 (stride 1): per-H-tap block-Toeplitz over padded width.
    # TODO(synk): for much larger observations the dense width-Toeplitz blocks
    # waste ~3x MXU FLOPs / VMEM; switch to banded width tiles in that regime.
    for l in range(1, num_layers):
        wl = np.asarray(params[f"conv{l}_w"], np.float32)   # (nf, nf, 3, 3)
        bl = np.asarray(params[f"conv{l}_b"], np.float32)
        Wl = np.zeros((3, owp[l - 1] * nf, owp[l] * nf), np.float32)
        for i in range(3):
            for x in range(ow[l]):
                for j in range(3):
                    x_in = x + j
                    Wl[i, x_in * nf:(x_in + 1) * nf,
                       x * nf:(x + 1) * nf] = wl[:, :, i, j].T
        blf = np.zeros((1, owp[l] * nf), np.float32)
        blf[0, :ow[l] * nf] = np.tile(bl, ow[l])
        conv_w.append(Wl)
        conv_b.append(blf)

    # fc: fold torch's NCHW flatten (c, y, x) into rows (y) x lanes (x*nf + c).
    fcw = np.asarray(params["fc_w"], np.float32)
    feat = fcw.shape[0]
    fcw = fcw.reshape(feat, nf, oh[-1], ow[-1]).transpose(2, 3, 1, 0)
    fcw = fcw.reshape(oh[-1], ow[-1] * nf, feat)
    fcw_p = np.zeros((oh[-1], owp[-1] * nf, feat), np.float32)
    fcw_p[:, :ow[-1] * nf, :] = fcw

    return {
        "conv_w": [jnp.asarray(W, compute_dtype) for W in conv_w],
        "conv_b": [jnp.asarray(b) for b in conv_b],           # f32 (added post-matmul)
        "fc_w": jnp.asarray(fcw_p, compute_dtype),
        "fc_b": jnp.asarray(np.asarray(params["fc_b"], np.float32).reshape(1, feat)),
        "ln_g": jnp.asarray(np.asarray(params["ln_g"], np.float32).reshape(1, feat)),
        "ln_b": jnp.asarray(np.asarray(params["ln_b"], np.float32).reshape(1, feat)),
    }


# ------------------------------- forward ------------------------------------

def _gather_conv0_rows(obs, oh0, kin0, b_blk, compute_dtype):
    """NCHW obs -> (NB, OH0*B_BLK, KIN0).

    For conv0 output row y, input rows 2y, 2y+1, 2y+2 are each flattened as
    (w*C + c) and concatenated on lanes (zero-padded to KIN0).  Within a block
    rows are ordered (y, sample) so samples stack along the MXU M dimension.
    """
    n, c, h, w = obs.shape
    wc = w * c
    x = obs.transpose(0, 2, 3, 1).reshape(n, h, wc)            # (N, H, W*C)
    taps = [lax.slice_in_dim(x, i, i + 2 * (oh0 - 1) + 1, stride=2, axis=1)
            for i in range(3)]
    xg = jnp.concatenate(taps, axis=-1)                        # (N, OH0, 3*W*C)
    if kin0 > 3 * wc:
        xg = jnp.pad(xg, ((0, 0), (0, 0), (0, kin0 - 3 * wc)))
    n_pad = _round_up(n, b_blk)
    if n_pad > n:
        xg = jnp.pad(xg, ((0, n_pad - n), (0, 0), (0, 0)))
    nb = n_pad // b_blk
    xg = xg.reshape(nb, b_blk, oh0, kin0).transpose(0, 2, 1, 3)
    xg = xg.reshape(nb, oh0 * b_blk, kin0)
    return xg.astype(compute_dtype), n_pad


@functools.partial(jax.jit, static_argnames=("b_blk", "single_buffer_weights"))
def pixel_encoder_forward(obs, prep, b_blk=8, single_buffer_weights=True):
    """Equivalent of PixelEncoder.forward (detach=False, no softmax/max_norm)."""
    num_layers = len(prep["conv_w"])
    n, _, h, _ = obs.shape
    oh = [(h - 3) // 2 + 1]
    for _ in range(1, num_layers):
        oh.append(oh[-1] - 2)
    kin0 = prep["conv_w"][0].shape[0]
    cdt = prep["conv_w"][0].dtype
    xg, n_pad = _gather_conv0_rows(obs, oh[0], kin0, b_blk, cdt)
    out = _encoder_pallas(xg, prep, oh_list=oh, b_blk=b_blk, n_pad=n_pad,
                          single_buffer_weights=single_buffer_weights)
    return out[:n]


# ------------------------- params & reference ------------------------------

def init_params(key, obs_shape, feature_dim, num_layers=2, num_filters=32):
    c, h, w = obs_shape
    keys = jax.random.split(key, 2 * num_layers + 2)
    params = {}
    in_ch = c
    oh, ow = h, w
    for i in range(num_layers):
        stride = 2 if i == 0 else 1
        params[f"conv{i}_w"] = 0.1 * jax.random.normal(
            keys[2 * i], (num_filters, in_ch, 3, 3), jnp.float32)
        params[f"conv{i}_b"] = 0.01 * jax.random.normal(
            keys[2 * i + 1], (num_filters,), jnp.float32)
        oh = (oh - 3) // stride + 1
        ow = (ow - 3) // stride + 1
        in_ch = num_filters
    out_dim = num_filters * oh * ow
    params["fc_w"] = 0.05 * jax.random.normal(keys[-2], (feature_dim, out_dim), jnp.float32)
    params["fc_b"] = 0.01 * jax.random.normal(keys[-1], (feature_dim,), jnp.float32)
    params["ln_g"] = jnp.ones((feature_dim,), jnp.float32)
    params["ln_b"] = jnp.zeros((feature_dim,), jnp.float32)
    return params


def reference_forward(obs, params, num_layers=2):
    x = obs / 255.0
    for i in range(num_layers):
        stride = 2 if i == 0 else 1
        x = lax.conv_general_dilated(
            x, params[f"conv{i}_w"], (stride, stride), "VALID",
            dimension_numbers=("NCHW", "OIHW", "NCHW"),
            precision=lax.Precision.HIGHEST)
        x = jax.nn.relu(x + params[f"conv{i}_b"][None, :, None, None])
    h = x.reshape(x.shape[0], -1)
    y = jnp.dot(h, params["fc_w"].T, precision=lax.Precision.HIGHEST) + params["fc_b"]
    mean = y.mean(-1, keepdims=True)
    var = ((y - mean) ** 2).mean(-1, keepdims=True)
    return (y - mean) / jnp.sqrt(var + 1e-5) * params["ln_g"] + params["ln_b"]


# --------------------------------- main ------------------------------------

if __name__ == "__main__":
    obs_shape = (4, 16, 16)   # (C, H, W)
    feature_dim = 32
    num_layers = 2
    batch = 16                # 2 grid steps of B_BLK=8 (both v7x TCs get work)
    b_blk = 8

    key = jax.random.PRNGKey(0)
    k_obs, k_par = jax.random.split(key)
    obs = jax.random.uniform(k_obs, (batch,) + obs_shape,
                             minval=0.0, maxval=255.0, dtype=jnp.float32)
    params = init_params(k_par, obs_shape, feature_dim, num_layers=num_layers)
    # compute_dtype=jnp.bfloat16 is supported for v6e/v7x once MXU bound
    # (loosen the tolerance below to ~5e-2 in that case).
    prep = prepare_params(params, obs_shape, num_layers=num_layers,
                          compute_dtype=jnp.float32)

    try:
        out = pixel_encoder_forward(obs, prep, b_blk=b_blk)
    except Exception:
        # Fallback for JAX versions where single-buffered weight specs
        # (pipeline_mode=pl.Buffered(1)) are unsupported.
        out = pixel_encoder_forward(obs, prep, b_blk=b_blk,
                                    single_buffer_weights=False)
    out = jax.block_until_ready(out)

    ref = reference_forward(obs, params, num_layers=num_layers)
    assert out.shape == (batch, feature_dim), out.shape
    # Tolerance allows for possible reduced-precision MXU passes on f32 inputs.
    assert jnp.allclose(out, ref, atol=2e-2, rtol=2e-2), \
        float(jnp.abs(out - ref).max())

    print("KERNEL_OK")
</pallas_src>

<mosaic_0001>
module attributes {stable_mosaic.version = 11 : i64} {
  func.func @_encoder_kernel(%arg0: i32, %arg1: memref<1x56x256xf32, #tpu.memory_space<vmem>>, %arg2: memref<256x256xf32, #tpu.memory_space<vmem>>, %arg3: memref<1x256xf32, #tpu.memory_space<vmem>>, %arg4: memref<3x256x256xf32, #tpu.memory_space<vmem>>, %arg5: memref<1x256xf32, #tpu.memory_space<vmem>>, %arg6: memref<5x256x32xf32, #tpu.memory_space<vmem>>, %arg7: memref<1x32xf32, #tpu.memory_space<vmem>>, %arg8: memref<1x32xf32, #tpu.memory_space<vmem>>, %arg9: memref<1x32xf32, #tpu.memory_space<vmem>>, %arg10: memref<8x32xf32, #tpu.memory_space<vmem>>) attributes {dimension_semantics = [#tpu.dimension_semantics<parallel>], iteration_bounds = array<i64: 2>, scalar_prefetch = 0 : i64, scratch_operands = 0 : i64, tpu.core_type = #tpu.core_type<tc>, window_params = [{transform_indices = @transform_0, window_bounds = array<i64: 1, 56, 256>}, {pipeline_mode = #tpu.pipeline_mode<synchronous>, transform_indices = @transform_1, window_bounds = array<i64: 256, 256>}, {pipeline_mode = #tpu.pipeline_mode<synchronous>, transform_indices = @transform_2, window_bounds = array<i64: 1, 256>}, {pipeline_mode = #tpu.pipeline_mode<synchronous>, transform_indices = @transform_3, window_bounds = array<i64: 3, 256, 256>}, {pipeline_mode = #tpu.pipeline_mode<synchronous>, transform_indices = @transform_4, window_bounds = array<i64: 1, 256>}, {pipeline_mode = #tpu.pipeline_mode<synchronous>, transform_indices = @transform_5, window_bounds = array<i64: 5, 256, 32>}, {pipeline_mode = #tpu.pipeline_mode<synchronous>, transform_indices = @transform_6, window_bounds = array<i64: 1, 32>}, {pipeline_mode = #tpu.pipeline_mode<synchronous>, transform_indices = @transform_7, window_bounds = array<i64: 1, 32>}, {pipeline_mode = #tpu.pipeline_mode<synchronous>, transform_indices = @transform_8, window_bounds = array<i64: 1, 32>}, {transform_indices = @transform_9, window_bounds = array<i64: 8, 32>}]} {
    %c0 = arith.constant 0 : index
    %c0_0 = arith.constant 0 : index
    %c0_1 = arith.constant 0 : index
    %0 = vector.load %arg1[%c0, %c0_0, %c0_1] : memref<1x56x256xf32, #tpu.memory_space<vmem>>, vector<1x56x256xf32>
    %1 = vector.shape_cast %0 : vector<1x56x256xf32> to vector<56x256xf32>
    %c0_2 = arith.constant 0 : index
    %c0_3 = arith.constant 0 : index
    %2 = vector.load %arg2[%c0_2, %c0_3] : memref<256x256xf32, #tpu.memory_space<vmem>>, vector<256x256xf32>
    %cst = arith.constant dense<0.000000e+00> : vector<56x256xf32>
    %3 = tpu.matmul %1, %2, %cst {dimension_numbers = #tpu.dot_dimension_numbers<[1], [0], [0], [1], [0, 0, 1, 1], [], []>} : vector<56x256xf32>, vector<256x256xf32>, vector<56x256xf32> -> vector<56x256xf32>
    %c0_4 = arith.constant 0 : index
    %c0_5 = arith.constant 0 : index
    %4 = vector.load %arg3[%c0_4, %c0_5] : memref<1x256xf32, #tpu.memory_space<vmem>>, vector<1x256xf32>
    %5 = vector.broadcast %4 : vector<1x256xf32> to vector<56x256xf32>
    %6 = arith.addf %3, %5 : vector<56x256xf32>
    %cst_6 = arith.constant 0.000000e+00 : f32
    %7 = vector.broadcast %cst_6 : f32 to vector<56x256xf32>
    %8 = arith.maximumf %6, %7 : vector<56x256xf32>
    %9 = vector.extract_strided_slice %8 {offsets = [0, 0], sizes = [40, 256], strides = [1, 1]} : vector<56x256xf32> to vector<40x256xf32>
    %c0_7 = arith.constant 0 : index
    %c0_8 = arith.constant 0 : index
    %c0_9 = arith.constant 0 : index
    %10 = vector.load %arg4[%c0_7, %c0_8, %c0_9] : memref<3x256x256xf32, #tpu.memory_space<vmem>>, vector<1x256x256xf32>
    %11 = vector.shape_cast %10 : vector<1x256x256xf32> to vector<256x256xf32>
    %cst_10 = arith.constant dense<0.000000e+00> : vector<40x256xf32>
    %12 = tpu.matmul %9, %11, %cst_10 {dimension_numbers = #tpu.dot_dimension_numbers<[1], [0], [0], [1], [0, 0, 1, 1], [], []>} : vector<40x256xf32>, vector<256x256xf32>, vector<40x256xf32> -> vector<40x256xf32>
    %13 = vector.extract_strided_slice %8 {offsets = [8, 0], sizes = [40, 256], strides = [1, 1]} : vector<56x256xf32> to vector<40x256xf32>
    %c1 = arith.constant 1 : index
    %c0_11 = arith.constant 0 : index
    %c0_12 = arith.constant 0 : index
    %14 = vector.load %arg4[%c1, %c0_11, %c0_12] : memref<3x256x256xf32, #tpu.memory_space<vmem>>, vector<1x256x256xf32>
    %15 = vector.shape_cast %14 : vector<1x256x256xf32> to vector<256x256xf32>
    %cst_13 = arith.constant dense<0.000000e+00> : vector<40x256xf32>
    %16 = tpu.matmul %13, %15, %cst_13 {dimension_numbers = #tpu.dot_dimension_numbers<[1], [0], [0], [1], [0, 0, 1, 1], [], []>} : vector<40x256xf32>, vector<256x256xf32>, vector<40x256xf32> -> vector<40x256xf32>
    %17 = arith.addf %12, %16 : vector<40x256xf32>
    %18 = vector.extract_strided_slice %8 {offsets = [16, 0], sizes = [40, 256], strides = [1, 1]} : vector<56x256xf32> to vector<40x256xf32>
    %c2 = arith.constant 2 : index
    %c0_14 = arith.constant 0 : index
    %c0_15 = arith.constant 0 : index
    %19 = vector.load %arg4[%c2, %c0_14, %c0_15] : memref<3x256x256xf32, #tpu.memory_space<vmem>>, vector<1x256x256xf32>
    %20 = vector.shape_cast %19 : vector<1x256x256xf32> to vector<256x256xf32>
    %cst_16 = arith.constant dense<0.000000e+00> : vector<40x256xf32>
    %21 = tpu.matmul %18, %20, %cst_16 {dimension_numbers = #tpu.dot_dimension_numbers<[1], [0], [0], [1], [0, 0, 1, 1], [], []>} : vector<40x256xf32>, vector<256x256xf32>, vector<40x256xf32> -> vector<40x256xf32>
    %22 = arith.addf %17, %21 : vector<40x256xf32>
    %c0_17 = arith.constant 0 : index
    %c0_18 = arith.constant 0 : index
    %23 = vector.load %arg5[%c0_17, %c0_18] : memref<1x256xf32, #tpu.memory_space<vmem>>, vector<1x256xf32>
    %24 = vector.broadcast %23 : vector<1x256xf32> to vector<40x256xf32>
    %25 = arith.addf %22, %24 : vector<40x256xf32>
    %cst_19 = arith.constant 0.000000e+00 : f32
    %26 = vector.broadcast %cst_19 : f32 to vector<40x256xf32>
    %27 = arith.maximumf %25, %26 : vector<40x256xf32>
    %28 = vector.extract_strided_slice %27 {offsets = [0, 0], sizes = [8, 256], strides = [1, 1]} : vector<40x256xf32> to vector<8x256xf32>
    %c0_20 = arith.constant 0 : index
    %c0_21 = arith.constant 0 : index
    %c0_22 = arith.constant 0 : index
    %29 = vector.load %arg6[%c0_20, %c0_21, %c0_22] : memref<5x256x32xf32, #tpu.memory_space<vmem>>, vector<1x256x32xf32>
    %30 = vector.shape_cast %29 : vector<1x256x32xf32> to vector<256x32xf32>
    %cst_23 = arith.constant dense<0.000000e+00> : vector<8x32xf32>
    %31 = tpu.matmul %28, %30, %cst_23 {dimension_numbers = #tpu.dot_dimension_numbers<[1], [0], [0], [1], [0, 0, 1, 1], [], []>} : vector<8x256xf32>, vector<256x32xf32>, vector<8x32xf32> -> vector<8x32xf32>
    %32 = vector.extract_strided_slice %27 {offsets = [8, 0], sizes = [8, 256], strides = [1, 1]} : vector<40x256xf32> to vector<8x256xf32>
    %c1_24 = arith.constant 1 : index
    %c0_25 = arith.constant 0 : index
    %c0_26 = arith.constant 0 : index
    %33 = vector.load %arg6[%c1_24, %c0_25, %c0_26] : memref<5x256x32xf32, #tpu.memory_space<vmem>>, vector<1x256x32xf32>
    %34 = vector.shape_cast %33 : vector<1x256x32xf32> to vector<256x32xf32>
    %cst_27 = arith.constant dense<0.000000e+00> : vector<8x32xf32>
    %35 = tpu.matmul %32, %34, %cst_27 {dimension_numbers = #tpu.dot_dimension_numbers<[1], [0], [0], [1], [0, 0, 1, 1], [], []>} : vector<8x256xf32>, vector<256x32xf32>, vector<8x32xf32> -> vector<8x32xf32>
    %36 = arith.addf %31, %35 : vector<8x32xf32>
    %37 = vector.extract_strided_slice %27 {offsets = [16, 0], sizes = [8, 256], strides = [1, 1]} : vector<40x256xf32> to vector<8x256xf32>
    %c2_28 = arith.constant 2 : index
    %c0_29 = arith.constant 0 : index
    %c0_30 = arith.constant 0 : index
    %38 = vector.load %arg6[%c2_28, %c0_29, %c0_30] : memref<5x256x32xf32, #tpu.memory_space<vmem>>, vector<1x256x32xf32>
    %39 = vector.shape_cast %38 : vector<1x256x32xf32> to vector<256x32xf32>
    %cst_31 = arith.constant dense<0.000000e+00> : vector<8x32xf32>
    %40 = tpu.matmul %37, %39, %cst_31 {dimension_numbers = #tpu.dot_dimension_numbers<[1], [0], [0], [1], [0, 0, 1, 1], [], []>} : vector<8x256xf32>, vector<256x32xf32>, vector<8x32xf32> -> vector<8x32xf32>
    %41 = arith.addf %36, %40 : vector<8x32xf32>
    %42 = vector.extract_strided_slice %27 {offsets = [24, 0], sizes = [8, 256], strides = [1, 1]} : vector<40x256xf32> to vector<8x256xf32>
    %c3 = arith.constant 3 : index
    %c0_32 = arith.constant 0 : index
    %c0_33 = arith.constant 0 : index
    %43 = vector.load %arg6[%c3, %c0_32, %c0_33] : memref<5x256x32xf32, #tpu.memory_space<vmem>>, vector<1x256x32xf32>
    %44 = vector.shape_cast %43 : vector<1x256x32xf32> to vector<256x32xf32>
    %cst_34 = arith.constant dense<0.000000e+00> : vector<8x32xf32>
    %45 = tpu.matmul %42, %44, %cst_34 {dimension_numbers = #tpu.dot_dimension_numbers<[1], [0], [0], [1], [0, 0, 1, 1], [], []>} : vector<8x256xf32>, vector<256x32xf32>, vector<8x32xf32> -> vector<8x32xf32>
    %46 = arith.addf %41, %45 : vector<8x32xf32>
    %47 = vector.extract_strided_slice %27 {offsets = [32, 0], sizes = [8, 256], strides = [1, 1]} : vector<40x256xf32> to vector<8x256xf32>
    %c4 = arith.constant 4 : index
    %c0_35 = arith.constant 0 : index
    %c0_36 = arith.constant 0 : index
    %48 = vector.load %arg6[%c4, %c0_35, %c0_36] : memref<5x256x32xf32, #tpu.memory_space<vmem>>, vector<1x256x32xf32>
    %49 = vector.shape_cast %48 : vector<1x256x32xf32> to vector<256x32xf32>
    %cst_37 = arith.constant dense<0.000000e+00> : vector<8x32xf32>
    %50 = tpu.matmul %47, %49, %cst_37 {dimension_numbers = #tpu.dot_dimension_numbers<[1], [0], [0], [1], [0, 0, 1, 1], [], []>} : vector<8x256xf32>, vector<256x32xf32>, vector<8x32xf32> -> vector<8x32xf32>
    %51 = arith.addf %46, %50 : vector<8x32xf32>
    %c0_38 = arith.constant 0 : index
    %c0_39 = arith.constant 0 : index
    %52 = vector.load %arg7[%c0_38, %c0_39] : memref<1x32xf32, #tpu.memory_space<vmem>>, vector<1x32xf32>
    %53 = vector.broadcast %52 : vector<1x32xf32> to vector<8x32xf32>
    %54 = arith.addf %51, %53 : vector<8x32xf32>
    %cst_40 = arith.constant dense<0.000000e+00> : vector<8xf32>
    %55 = vector.multi_reduction <add>, %54, %cst_40 [1] : vector<8x32xf32> to vector<8xf32>
    %56 = vector.shape_cast %55 : vector<8xf32> to vector<8x1xf32>
    %cst_41 = arith.constant 3.200000e+01 : f32
    %57 = vector.broadcast %cst_41 : f32 to vector<8x1xf32>
    %58 = arith.divf %56, %57 : vector<8x1xf32>
    %59 = vector.broadcast %58 : vector<8x1xf32> to vector<8x32xf32>
    %60 = arith.subf %54, %59 : vector<8x32xf32>
    %61 = arith.mulf %60, %60 : vector<8x32xf32>
    %cst_42 = arith.constant dense<0.000000e+00> : vector<8xf32>
    %62 = vector.multi_reduction <add>, %61, %cst_42 [1] : vector<8x32xf32> to vector<8xf32>
    %63 = vector.shape_cast %62 : vector<8xf32> to vector<8x1xf32>
    %cst_43 = arith.constant 3.200000e+01 : f32
    %64 = vector.broadcast %cst_43 : f32 to vector<8x1xf32>
    %65 = arith.divf %63, %64 : vector<8x1xf32>
    %66 = vector.broadcast %58 : vector<8x1xf32> to vector<8x32xf32>
    %67 = arith.subf %54, %66 : vector<8x32xf32>
    %cst_44 = arith.constant 9.99999974E-6 : f32
    %68 = vector.broadcast %cst_44 : f32 to vector<8x1xf32>
    %69 = arith.addf %65, %68 : vector<8x1xf32>
    %70 = math.rsqrt %69 : vector<8x1xf32>
    %71 = vector.broadcast %70 : vector<8x1xf32> to vector<8x32xf32>
    %72 = arith.mulf %67, %71 : vector<8x32xf32>
    %c0_45 = arith.constant 0 : index
    %c0_46 = arith.constant 0 : index
    %73 = vector.load %arg8[%c0_45, %c0_46] : memref<1x32xf32, #tpu.memory_space<vmem>>, vector<1x32xf32>
    %74 = vector.broadcast %73 : vector<1x32xf32> to vector<8x32xf32>
    %75 = arith.mulf %72, %74 : vector<8x32xf32>
    %c0_47 = arith.constant 0 : index
    %c0_48 = arith.constant 0 : index
    %76 = vector.load %arg9[%c0_47, %c0_48] : memref<1x32xf32, #tpu.memory_space<vmem>>, vector<1x32xf32>
    %77 = vector.broadcast %76 : vector<1x32xf32> to vector<8x32xf32>
    %78 = arith.addf %75, %77 : vector<8x32xf32>
    %c0_49 = arith.constant 0 : index
    %c0_50 = arith.constant 0 : index
    %79 = vector.load %arg10[%c0_49, %c0_50] : memref<8x32xf32, #tpu.memory_space<vmem>>, vector<8x32xf32>
    tpu.vector_store %arg10[%c0_49, %c0_50], %78 {strides = array<i32>} : memref<8x32xf32, #tpu.memory_space<vmem>>, vector<8x32xf32>,
    return
  }
  func.func @transform_0(%arg0: i32) -> (i32, i32, i32) {
    %c0_i32 = arith.constant 0 : i32
    %c0_i32_0 = arith.constant 0 : i32
    %c0_i32_1 = arith.constant 0 : i32
    return %arg0, %c0_i32, %c0_i32_0 : i32, i32, i32
  }
  func.func @transform_1(%arg0: i32) -> (i32, i32) {
    %c0_i32 = arith.constant 0 : i32
    %c0_i32_0 = arith.constant 0 : i32
    %c0_i32_1 = arith.constant 0 : i32
    return %c0_i32, %c0_i32_0 : i32, i32
  }
  func.func @transform_2(%arg0: i32) -> (i32, i32) {
    %c0_i32 = arith.constant 0 : i32
    %c0_i32_0 = arith.constant 0 : i32
    %c0_i32_1 = arith.constant 0 : i32
    return %c0_i32, %c0_i32_0 : i32, i32
  }
  func.func @transform_3(%arg0: i32) -> (i32, i32, i32) {
    %c0_i32 = arith.constant 0 : i32
    %c0_i32_0 = arith.constant 0 : i32
    %c0_i32_1 = arith.constant 0 : i32
    %c0_i32_2 = arith.constant 0 : i32
    return %c0_i32, %c0_i32_0, %c0_i32_1 : i32, i32, i32
  }
  func.func @transform_4(%arg0: i32) -> (i32, i32) {
    %c0_i32 = arith.constant 0 : i32
    %c0_i32_0 = arith.constant 0 : i32
    %c0_i32_1 = arith.constant 0 : i32
    return %c0_i32, %c0_i32_0 : i32, i32
  }
  func.func @transform_5(%arg0: i32) -> (i32, i32, i32) {
    %c0_i32 = arith.constant 0 : i32
    %c0_i32_0 = arith.constant 0 : i32
    %c0_i32_1 = arith.constant 0 : i32
    %c0_i32_2 = arith.constant 0 : i32
    return %c0_i32, %c0_i32_0, %c0_i32_1 : i32, i32, i32
  }
  func.func @transform_6(%arg0: i32) -> (i32, i32) {
    %c0_i32 = arith.constant 0 : i32
    %c0_i32_0 = arith.constant 0 : i32
    %c0_i32_1 = arith.constant 0 : i32
    return %c0_i32, %c0_i32_0 : i32, i32
  }
  func.func @transform_7(%arg0: i32) -> (i32, i32) {
    %c0_i32 = arith.constant 0 : i32
    %c0_i32_0 = arith.constant 0 : i32
    %c0_i32_1 = arith.constant 0 : i32
    return %c0_i32, %c0_i32_0 : i32, i32
  }
  func.func @transform_8(%arg0: i32) -> (i32, i32) {
    %c0_i32 = arith.constant 0 : i32
    %c0_i32_0 = arith.constant 0 : i32
    %c0_i32_1 = arith.constant 0 : i32
    return %c0_i32, %c0_i32_0 : i32, i32
  }
  func.func @transform_9(%arg0: i32) -> (i32, i32) {
    %c0_i32 = arith.constant 0 : i32
    %c0_i32_0 = arith.constant 0 : i32
    return %arg0, %c0_i32 : i32, i32
  }
}

module attributes {stable_mosaic.version = 11 : i64} {
  func.func @_encoder_kernel(%arg0: i32, %arg1: memref<1x56x256xf32, #tpu.memory_space<vmem>>, %arg2: memref<256x256xf32, #tpu.memory_space<vmem>>, %arg3: memref<1x256xf32, #tpu.memory_space<vmem>>, %arg4: memref<3x256x256xf32, #tpu.memory_space<vmem>>, %arg5: memref<1x256xf32, #tpu.memory_space<vmem>>, %arg6: memref<5x256x32xf32, #tpu.memory_space<vmem>>, %arg7: memref<1x32xf32, #tpu.memory_space<vmem>>, %arg8: memref<1x32xf32, #tpu.memory_space<vmem>>, %arg9: memref<1x32xf32, #tpu.memory_space<vmem>>, %arg10: memref<8x32xf32, #tpu.memory_space<vmem>>) attributes {dimension_semantics = [#tpu.dimension_semantics<parallel>], iteration_bounds = array<i64: 2>, scalar_prefetch = 0 : i64, scratch_operands = 0 : i64, tpu.core_type = #tpu.core_type<tc>, window_params = [{transform_indices = @transform_0, window_bounds = array<i64: 1, 56, 256>}, {pipeline_mode = #tpu.pipeline_mode<synchronous>, transform_indices = @transform_1, window_bounds = array<i64: 256, 256>}, {pipeline_mode = #tpu.pipeline_mode<synchronous>, transform_indices = @transform_2, window_bounds = array<i64: 1, 256>}, {pipeline_mode = #tpu.pipeline_mode<synchronous>, transform_indices = @transform_3, window_bounds = array<i64: 3, 256, 256>}, {pipeline_mode = #tpu.pipeline_mode<synchronous>, transform_indices = @transform_4, window_bounds = array<i64: 1, 256>}, {pipeline_mode = #tpu.pipeline_mode<synchronous>, transform_indices = @transform_5, window_bounds = array<i64: 5, 256, 32>}, {pipeline_mode = #tpu.pipeline_mode<synchronous>, transform_indices = @transform_6, window_bounds = array<i64: 1, 32>}, {pipeline_mode = #tpu.pipeline_mode<synchronous>, transform_indices = @transform_7, window_bounds = array<i64: 1, 32>}, {pipeline_mode = #tpu.pipeline_mode<synchronous>, transform_indices = @transform_8, window_bounds = array<i64: 1, 32>}, {transform_indices = @transform_9, window_bounds = array<i64: 8, 32>}]} {
    %c0 = arith.constant 0 : index
    %c0_0 = arith.constant 0 : index
    %c0_1 = arith.constant 0 : index
    %0 = vector.load %arg1[%c0, %c0_0, %c0_1] : memref<1x56x256xf32, #tpu.memory_space<vmem>>, vector<1x56x256xf32>
    %1 = vector.shape_cast %0 : vector<1x56x256xf32> to vector<56x256xf32>
    %c0_2 = arith.constant 0 : index
    %c0_3 = arith.constant 0 : index
    %2 = vector.load %arg2[%c0_2, %c0_3] : memref<256x256xf32, #tpu.memory_space<vmem>>, vector<256x256xf32>
    %cst = arith.constant dense<0.000000e+00> : vector<56x256xf32>
    %3 = tpu.matmul %1, %2, %cst {dimension_numbers = #tpu.dot_dimension_numbers<[1], [0], [0], [1], [0, 0, 1, 1], [], []>} : vector<56x256xf32>, vector<256x256xf32>, vector<56x256xf32> -> vector<56x256xf32>
    %c0_4 = arith.constant 0 : index
    %c0_5 = arith.constant 0 : index
    %4 = vector.load %arg3[%c0_4, %c0_5] : memref<1x256xf32, #tpu.memory_space<vmem>>, vector<1x256xf32>
    %5 = vector.broadcast %4 : vector<1x256xf32> to vector<56x256xf32>
    %6 = arith.addf %3, %5 : vector<56x256xf32>
    %cst_6 = arith.constant 0.000000e+00 : f32
    %7 = vector.broadcast %cst_6 : f32 to vector<56x256xf32>
    %8 = arith.maximumf %6, %7 : vector<56x256xf32>
    %9 = vector.extract_strided_slice %8 {offsets = [0, 0], sizes = [40, 256], strides = [1, 1]} : vector<56x256xf32> to vector<40x256xf32>
    %c0_7 = arith.constant 0 : index
    %c0_8 = arith.constant 0 : index
    %c0_9 = arith.constant 0 : index
    %10 = vector.load %arg4[%c0_7, %c0_8, %c0_9] : memref<3x256x256xf32, #tpu.memory_space<vmem>>, vector<1x256x256xf32>
    %11 = vector.shape_cast %10 : vector<1x256x256xf32> to vector<256x256xf32>
    %cst_10 = arith.constant dense<0.000000e+00> : vector<40x256xf32>
    %12 = tpu.matmul %9, %11, %cst_10 {dimension_numbers = #tpu.dot_dimension_numbers<[1], [0], [0], [1], [0, 0, 1, 1], [], []>} : vector<40x256xf32>, vector<256x256xf32>, vector<40x256xf32> -> vector<40x256xf32>
    %13 = vector.extract_strided_slice %8 {offsets = [8, 0], sizes = [40, 256], strides = [1, 1]} : vector<56x256xf32> to vector<40x256xf32>
    %c1 = arith.constant 1 : index
    %c0_11 = arith.constant 0 : index
    %c0_12 = arith.constant 0 : index
    %14 = vector.load %arg4[%c1, %c0_11, %c0_12] : memref<3x256x256xf32, #tpu.memory_space<vmem>>, vector<1x256x256xf32>
    %15 = vector.shape_cast %14 : vector<1x256x256xf32> to vector<256x256xf32>
    %cst_13 = arith.constant dense<0.000000e+00> : vector<40x256xf32>
    %16 = tpu.matmul %13, %15, %cst_13 {dimension_numbers = #tpu.dot_dimension_numbers<[1], [0], [0], [1], [0, 0, 1, 1], [], []>} : vector<40x256xf32>, vector<256x256xf32>, vector<40x256xf32> -> vector<40x256xf32>
    %17 = arith.addf %12, %16 : vector<40x256xf32>
    %18 = vector.extract_strided_slice %8 {offsets = [16, 0], sizes = [40, 256], strides = [1, 1]} : vector<56x256xf32> to vector<40x256xf32>
    %c2 = arith.constant 2 : index
    %c0_14 = arith.constant 0 : index
    %c0_15 = arith.constant 0 : index
    %19 = vector.load %arg4[%c2, %c0_14, %c0_15] : memref<3x256x256xf32, #tpu.memory_space<vmem>>, vector<1x256x256xf32>
    %20 = vector.shape_cast %19 : vector<1x256x256xf32> to vector<256x256xf32>
    %cst_16 = arith.constant dense<0.000000e+00> : vector<40x256xf32>
    %21 = tpu.matmul %18, %20, %cst_16 {dimension_numbers = #tpu.dot_dimension_numbers<[1], [0], [0], [1], [0, 0, 1, 1], [], []>} : vector<40x256xf32>, vector<256x256xf32>, vector<40x256xf32> -> vector<40x256xf32>
    %22 = arith.addf %17, %21 : vector<40x256xf32>
    %c0_17 = arith.constant 0 : index
    %c0_18 = arith.constant 0 : index
    %23 = vector.load %arg5[%c0_17, %c0_18] : memref<1x256xf32, #tpu.memory_space<vmem>>, vector<1x256xf32>
    %24 = vector.broadcast %23 : vector<1x256xf32> to vector<40x256xf32>
    %25 = arith.addf %22, %24 : vector<40x256xf32>
    %cst_19 = arith.constant 0.000000e+00 : f32
    %26 = vector.broadcast %cst_19 : f32 to vector<40x256xf32>
    %27 = arith.maximumf %25, %26 : vector<40x256xf32>
    %28 = vector.extract_strided_slice %27 {offsets = [0, 0], sizes = [8, 256], strides = [1, 1]} : vector<40x256xf32> to vector<8x256xf32>
    %c0_20 = arith.constant 0 : index
    %c0_21 = arith.constant 0 : index
    %c0_22 = arith.constant 0 : index
    %29 = vector.load %arg6[%c0_20, %c0_21, %c0_22] : memref<5x256x32xf32, #tpu.memory_space<vmem>>, vector<1x256x32xf32>
    %30 = vector.shape_cast %29 : vector<1x256x32xf32> to vector<256x32xf32>
    %cst_23 = arith.constant dense<0.000000e+00> : vector<8x32xf32>
    %31 = tpu.matmul %28, %30, %cst_23 {dimension_numbers = #tpu.dot_dimension_numbers<[1], [0], [0], [1], [0, 0, 1, 1], [], []>} : vector<8x256xf32>, vector<256x32xf32>, vector<8x32xf32> -> vector<8x32xf32>
    %32 = vector.extract_strided_slice %27 {offsets = [8, 0], sizes = [8, 256], strides = [1, 1]} : vector<40x256xf32> to vector<8x256xf32>
    %c1_24 = arith.constant 1 : index
    %c0_25 = arith.constant 0 : index
    %c0_26 = arith.constant 0 : index
    %33 = vector.load %arg6[%c1_24, %c0_25, %c0_26] : memref<5x256x32xf32, #tpu.memory_space<vmem>>, vector<1x256x32xf32>
    %34 = vector.shape_cast %33 : vector<1x256x32xf32> to vector<256x32xf32>
    %cst_27 = arith.constant dense<0.000000e+00> : vector<8x32xf32>
    %35 = tpu.matmul %32, %34, %cst_27 {dimension_numbers = #tpu.dot_dimension_numbers<[1], [0], [0], [1], [0, 0, 1, 1], [], []>} : vector<8x256xf32>, vector<256x32xf32>, vector<8x32xf32> -> vector<8x32xf32>
    %36 = arith.addf %31, %35 : vector<8x32xf32>
    %37 = vector.extract_strided_slice %27 {offsets = [16, 0], sizes = [8, 256], strides = [1, 1]} : vector<40x256xf32> to vector<8x256xf32>
    %c2_28 = arith.constant 2 : index
    %c0_29 = arith.constant 0 : index
    %c0_30 = arith.constant 0 : index
    %38 = vector.load %arg6[%c2_28, %c0_29, %c0_30] : memref<5x256x32xf32, #tpu.memory_space<vmem>>, vector<1x256x32xf32>
    %39 = vector.shape_cast %38 : vector<1x256x32xf32> to vector<256x32xf32>
    %cst_31 = arith.constant dense<0.000000e+00> : vector<8x32xf32>
    %40 = tpu.matmul %37, %39, %cst_31 {dimension_numbers = #tpu.dot_dimension_numbers<[1], [0], [0], [1], [0, 0, 1, 1], [], []>} : vector<8x256xf32>, vector<256x32xf32>, vector<8x32xf32> -> vector<8x32xf32>
    %41 = arith.addf %36, %40 : vector<8x32xf32>
    %42 = vector.extract_strided_slice %27 {offsets = [24, 0], sizes = [8, 256], strides = [1, 1]} : vector<40x256xf32> to vector<8x256xf32>
    %c3 = arith.constant 3 : index
    %c0_32 = arith.constant 0 : index
    %c0_33 = arith.constant 0 : index
    %43 = vector.load %arg6[%c3, %c0_32, %c0_33] : memref<5x256x32xf32, #tpu.memory_space<vmem>>, vector<1x256x32xf32>
    %44 = vector.shape_cast %43 : vector<1x256x32xf32> to vector<256x32xf32>
    %cst_34 = arith.constant dense<0.000000e+00> : vector<8x32xf32>
    %45 = tpu.matmul %42, %44, %cst_34 {dimension_numbers = #tpu.dot_dimension_numbers<[1], [0], [0], [1], [0, 0, 1, 1], [], []>} : vector<8x256xf32>, vector<256x32xf32>, vector<8x32xf32> -> vector<8x32xf32>
    %46 = arith.addf %41, %45 : vector<8x32xf32>
    %47 = vector.extract_strided_slice %27 {offsets = [32, 0], sizes = [8, 256], strides = [1, 1]} : vector<40x256xf32> to vector<8x256xf32>
    %c4 = arith.constant 4 : index
    %c0_35 = arith.constant 0 : index
    %c0_36 = arith.constant 0 : index
    %48 = vector.load %arg6[%c4, %c0_35, %c0_36] : memref<5x256x32xf32, #tpu.memory_space<vmem>>, vector<1x256x32xf32>
    %49 = vector.shape_cast %48 : vector<1x256x32xf32> to vector<256x32xf32>
    %cst_37 = arith.constant dense<0.000000e+00> : vector<8x32xf32>
    %50 = tpu.matmul %47, %49, %cst_37 {dimension_numbers = #tpu.dot_dimension_numbers<[1], [0], [0], [1], [0, 0, 1, 1], [], []>} : vector<8x256xf32>, vector<256x32xf32>, vector<8x32xf32> -> vector<8x32xf32>
    %51 = arith.addf %46, %50 : vector<8x32xf32>
    %c0_38 = arith.constant 0 : index
    %c0_39 = arith.constant 0 : index
    %52 = vector.load %arg7[%c0_38, %c0_39] : memref<1x32xf32, #tpu.memory_space<vmem>>, vector<1x32xf32>
    %53 = vector.broadcast %52 : vector<1x32xf32> to vector<8x32xf32>
    %54 = arith.addf %51, %53 : vector<8x32xf32>
    %cst_40 = arith.constant dense<0.000000e+00> : vector<8xf32>
    %55 = vector.multi_reduction <add>, %54, %cst_40 [1] : vector<8x32xf32> to vector<8xf32>
    %56 = vector.shape_cast %55 : vector<8xf32> to vector<8x1xf32>
    %cst_41 = arith.constant 3.200000e+01 : f32
    %57 = vector.broadcast %cst_41 : f32 to vector<8x1xf32>
    %58 = arith.divf %56, %57 : vector<8x1xf32>
    %59 = vector.broadcast %58 : vector<8x1xf32> to vector<8x32xf32>
    %60 = arith.subf %54, %59 : vector<8x32xf32>
    %61 = arith.mulf %60, %60 : vector<8x32xf32>
    %cst_42 = arith.constant dense<0.000000e+00> : vector<8xf32>
    %62 = vector.multi_reduction <add>, %61, %cst_42 [1] : vector<8x32xf32> to vector<8xf32>
    %63 = vector.shape_cast %62 : vector<8xf32> to vector<8x1xf32>
    %cst_43 = arith.constant 3.200000e+01 : f32
    %64 = vector.broadcast %cst_43 : f32 to vector<8x1xf32>
    %65 = arith.divf %63, %64 : vector<8x1xf32>
    %66 = vector.broadcast %58 : vector<8x1xf32> to vector<8x32xf32>
    %67 = arith.subf %54, %66 : vector<8x32xf32>
    %cst_44 = arith.constant 9.99999974E-6 : f32
    %68 = vector.broadcast %cst_44 : f32 to vector<8x1xf32>
    %69 = arith.addf %65, %68 : vector<8x1xf32>
    %70 = math.rsqrt %69 : vector<8x1xf32>
    %71 = vector.broadcast %70 : vector<8x1xf32> to vector<8x32xf32>
    %72 = arith.mulf %67, %71 : vector<8x32xf32>
    %c0_45 = arith.constant 0 : index
    %c0_46 = arith.constant 0 : index
    %73 = vector.load %arg8[%c0_45, %c0_46] : memref<1x32xf32, #tpu.memory_space<vmem>>, vector<1x32xf32>
    %74 = vector.broadcast %73 : vector<1x32xf32> to vector<8x32xf32>
    %75 = arith.mulf %72, %74 : vector<8x32xf32>
    %c0_47 = arith.constant 0 : index
    %c0_48 = arith.constant 0 : index
    %76 = vector.load %arg9[%c0_47, %c0_48] : memref<1x32xf32, #tpu.memory_space<vmem>>, vector<1x32xf32>
    %77 = vector.broadcast %76 : vector<1x32xf32> to vector<8x32xf32>
    %78 = arith.addf %75, %77 : vector<8x32xf32>
    %c0_49 = arith.constant 0 : index
    %c0_50 = arith.constant 0 : index
    %79 = vector.load %arg10[%c0_49, %c0_50] : memref<8x32xf32, #tpu.memory_space<vmem>>, vector<8x32xf32>
    tpu.vector_store %arg10[%c0_49, %c0_50], %78 {strides = array<i32>} : memref<8x32xf32, #tpu.memory_space<vmem>>, vector<8x32xf32>,
    return
  }
  func.func @transform_0(%arg0: i32) -> (i32, i32, i32) {
    %c0_i32 = arith.constant 0 : i32
    %c0_i32_0 = arith.constant 0 : i32
    %c0_i32_1 = arith.constant 0 : i32
    return %arg0, %c0_i32, %c0_i32_0 : i32, i32, i32
  }
  func.func @transform_1(%arg0: i32) -> (i32, i32) {
    %c0_i32 = arith.constant 0 : i32
    %c0_i32_0 = arith.constant 0 : i32
    %c0_i32_1 = arith.constant 0 : i32
    return %c0_i32, %c0_i32_0 : i32, i32
  }
  func.func @transform_2(%arg0: i32) -> (i32, i32) {
    %c0_i32 = arith.constant 0 : i32
    %c0_i32_0 = arith.constant 0 : i32
    %c0_i32_1 = arith.constant 0 : i32
    return %c0_i32, %c0_i32_0 : i32, i32
  }
  func.func @transform_3(%arg0: i32) -> (i32, i32, i32) {
    %c0_i32 = arith.constant 0 : i32
    %c0_i32_0 = arith.constant 0 : i32
    %c0_i32_1 = arith.constant 0 : i32
    %c0_i32_2 = arith.constant 0 : i32
    return %c0_i32, %c0_i32_0, %c0_i32_1 : i32, i32, i32
  }
  func.func @transform_4(%arg0: i32) -> (i32, i32) {
    %c0_i32 = arith.constant 0 : i32
    %c0_i32_0 = arith.constant 0 : i32
    %c0_i32_1 = arith.constant 0 : i32
    return %c0_i32, %c0_i32_0 : i32, i32
  }
  func.func @transform_5(%arg0: i32) -> (i32, i32, i32) {
    %c0_i32 = arith.constant 0 : i32
    %c0_i32_0 = arith.constant 0 : i32
    %c0_i32_1 = arith.constant 0 : i32
    %c0_i32_2 = arith.constant 0 : i32
    return %c0_i32, %c0_i32_0, %c0_i32_1 : i32, i32, i32
  }
  func.func @transform_6(%arg0: i32) -> (i32, i32) {
    %c0_i32 = arith.constant 0 : i32
    %c0_i32_0 = arith.constant 0 : i32
    %c0_i32_1 = arith.constant 0 : i32
    return %c0_i32, %c0_i32_0 : i32, i32
  }
  func.func @transform_7(%arg0: i32) -> (i32, i32) {
    %c0_i32 = arith.constant 0 : i32
    %c0_i32_0 = arith.constant 0 : i32
    %c0_i32_1 = arith.constant 0 : i32
    return %c0_i32, %c0_i32_0 : i32, i32
  }
  func.func @transform_8(%arg0: i32) -> (i32, i32) {
    %c0_i32 = arith.constant 0 : i32
    %c0_i32_0 = arith.constant 0 : i32
    %c0_i32_1 = arith.constant 0 : i32
    return %c0_i32, %c0_i32_0 : i32, i32
  }
  func.func @transform_9(%arg0: i32) -> (i32, i32) {
    %c0_i32 = arith.constant 0 : i32
    %c0_i32_0 = arith.constant 0 : i32
    return %arg0, %c0_i32 : i32, i32
  }
}

</mosaic_0001>

<llo_original>
// kernel: pixel_encoder_forward.1
$region0: #{pixel_encoder_forward.1}
  #allocation0 [shape = 'u32[]', space=smem, size = 0x4, offset = 0x4, fixed_abs, tag = 'smem constant byte address 0x4 - core index']
  #allocation1 [shape = 'u32[144,128]{1,0:T(1,128)}', space=vmem, size = 0x12000, scoped, tag = 'internal scratch']
  %s0 = inlined_call_operand.vmem [shape: f32[2,56,256], index: 0, kind: input, shape index: {}]
  %s1 = inlined_call_operand.vmem [shape: f32[256,256], index: 1, kind: input, shape index: {}]
  %s2 = inlined_call_operand.vmem [shape: f32[1,256], index: 2, kind: input, shape index: {}]
  %s3 = inlined_call_operand.vmem [shape: f32[3,256,256], index: 3, kind: input, shape index: {}]
  %s4 = inlined_call_operand.vmem [shape: f32[1,256], index: 4, kind: input, shape index: {}]
  %s5 = inlined_call_operand.vmem [shape: f32[5,256,32], index: 5, kind: input, shape index: {}]
  %s6 = inlined_call_operand.vmem [shape: f32[1,32], index: 6, kind: input, shape index: {}]
  %s7 = inlined_call_operand.vmem [shape: f32[1,32], index: 7, kind: input, shape index: {}]
  %s8 = inlined_call_operand.vmem [shape: f32[1,32], index: 8, kind: input, shape index: {}]
  %s9 = inlined_call_operand.hbm [shape: f32[16,32], index: 9, kind: output, shape index: {}]
  %s10 = sld [smem:[#allocation0]]
  $region69: #{pixel_encoder_forward.1} parent=0
    _
  %s12 = ssub.s32 1, %s10
  %s13 = scalar_select 0, %s12, %s10
  $region1: #{pixel_encoder_forward.1} parent=0
    #allocation2 [shape = 'u8[8192]{0}', space=vmem, size = 0x2000, scoped, tag = 'output window, operand 0']
    #allocation3 [shape = 's32[2]{0}', space=sflag, size = 0x8, scoped, tag = 'scoped memory for pixel_encoder_forward.1']
    %14 = vsyncpa [#allocation3], 0
    %s15 = scalar_lea.sflag [#allocation3], 1
    %16 = vsyncpa %s15, 0
    loop: start=0, step=1, limit=4
    $region2: #{pixel_encoder_forward.1} parent=1 // loop_pre_header
      _
    $region3: #{pixel_encoder_forward.1} parent=1 // loop_header
      %s18 = sphi 0, %s22
      %p19 = scmp.ge.s32.totalorder %s18, 4
      %s28 = sphi 0, %s30
      %s31 = sphi 0, %s28
      %s32 = sphi 0, %s31
      %s48 = sphi 0, %s32
      %s52 = sphi 0, %s52
      %s54 = sphi 0, %s52
      %s55 = sphi 0, %s54
      %s69 = sphi 0, %s55
      %s73 = sphi 0, %s73
      %s75 = sphi 0, %s73
      %s76 = sphi 0, %s75
      %s90 = sphi 0, %s76
      %s94 = sphi 0, %s94
      %s96 = sphi 0, %s94
      %s97 = sphi 0, %s96
      %s111 = sphi 0, %s97
      %s115 = sphi 0, %s115
      %s117 = sphi 0, %s115
      %s118 = sphi 0, %s117
      %s132 = sphi 0, %s118
      %s136 = sphi 0, %s136
      %s138 = sphi 0, %s136
      %s139 = sphi 0, %s138
      %s153 = sphi 0, %s139
      %s157 = sphi 0, %s157
      %s159 = sphi 0, %s157
      %s160 = sphi 0, %s159
      %s174 = sphi 0, %s160
      %s178 = sphi 0, %s178
      %s180 = sphi 0, %s178
      %s181 = sphi 0, %s180
      %s195 = sphi 0, %s181
      %s199 = sphi 0, %s199
      %s201 = sphi 0, %s199
      %s202 = sphi 0, %s201
      %s216 = sphi 0, %s202
      %s222 = sphi 0, %s224
      %s225 = sphi 0, %s222
      %s226 = sphi 0, %s225
      %s242 = sphi 0, %s226
    $region4: #{pixel_encoder_forward.1} parent=1 // loop_header_branch
      %21 = sbr.rel (%p19) target = $region8
    $region5: #{pixel_encoder_forward.1} parent=1 // loop_body
      %s23 = ssub.s32 %s18, 1
      %s24 = ssub.s32 %s18, 2
      %s25 = sadd.s32 %s18, 1
      %s26 = ssub.s32 %s18, %s25
      %p27 = scmp.eq.s32.totalorder %s26, 0
      %s29 = sadd.s32 %s28, 1
      %s30 = scalar_select %p27, %s28, %s29
      %p33 = pneg %p27
      %p34 = scmp.eq.s32.totalorder %s18, 1
      %p35 = por %p33, %p34
      %p36 = scmp.ne.s32.totalorder %s28, %s31
      %p37 = scmp.eq.s32.totalorder %s18, 0
      %p38 = por %p36, %p37
      %p39 = scmp.ne.s32.totalorder %s28, %s31
      %p40 = scmp.eq.s32.totalorder %s23, 1
      %p41 = por %p39, %p40
      %p42 = scmp.ne.s32.totalorder %s31, %s32
      %p43 = scmp.eq.s32.totalorder %s23, 0
      %p44 = por %p42, %p43
      %p45 = scmp.ne.s32.totalorder %s31, %s32
      %p46 = scmp.eq.s32.totalorder %s24, 1
      %p47 = por %p45, %p46
      %p49 = scmp.ne.s32.totalorder %s32, %s48
      %p50 = scmp.eq.s32.totalorder %s24, 0
      %p51 = por %p49, %p50
      %s53 = sadd.s32 %s52, 1
      %p56 = scmp.eq.s32.totalorder %s18, 1
      %p57 = scmp.ne.s32.totalorder %s52, %s54
      %p58 = scmp.eq.s32.totalorder %s18, 0
      %p59 = por %p57, %p58
      %p60 = scmp.ne.s32.totalorder %s52, %s54
      %p61 = scmp.eq.s32.totalorder %s23, 1
      %p62 = por %p60, %p61
      %p63 = scmp.ne.s32.totalorder %s54, %s55
      %p64 = scmp.eq.s32.totalorder %s23, 0
      %p65 = por %p63, %p64
      %p66 = scmp.ne.s32.totalorder %s54, %s55
      %p67 = scmp.eq.s32.totalorder %s24, 1
      %p68 = por %p66, %p67
      %p70 = scmp.ne.s32.totalorder %s55, %s69
      %p71 = scmp.eq.s32.totalorder %s24, 0
      %p72 = por %p70, %p71
      %s74 = sadd.s32 %s73, 1
      %p77 = scmp.eq.s32.totalorder %s18, 1
      %p78 = scmp.ne.s32.totalorder %s73, %s75
      %p79 = scmp.eq.s32.totalorder %s18, 0
      %p80 = por %p78, %p79
      %p81 = scmp.ne.s32.totalorder %s73, %s75
      %p82 = scmp.eq.s32.totalorder %s23, 1
      %p83 = por %p81, %p82
      %p84 = scmp.ne.s32.totalorder %s75, %s76
      %p85 = scmp.eq.s32.totalorder %s23, 0
      %p86 = por %p84, %p85
      %p87 = scmp.ne.s32.totalorder %s75, %s76
      %p88 = scmp.eq.s32.totalorder %s24, 1
      %p89 = por %p87, %p88
      %p91 = scmp.ne.s32.totalorder %s76, %s90
      %p92 = scmp.eq.s32.totalorder %s24, 0
      %p93 = por %p91, %p92
      %s95 = sadd.s32 %s94, 1
      %p98 = scmp.eq.s32.totalorder %s18, 1
      %p99 = scmp.ne.s32.totalorder %s94, %s96
      %p100 = scmp.eq.s32.totalorder %s18, 0
      %p101 = por %p99, %p100
      %p102 = scmp.ne.s32.totalorder %s94, %s96
      %p103 = scmp.eq.s32.totalorder %s23, 1
      %p104 = por %p102, %p103
      %p105 = scmp.ne.s32.totalorder %s96, %s97
      %p106 = scmp.eq.s32.totalorder %s23, 0
      %p107 = por %p105, %p106
      %p108 = scmp.ne.s32.totalorder %s96, %s97
      %p109 = scmp.eq.s32.totalorder %s24, 1
      %p110 = por %p108, %p109
      %p112 = scmp.ne.s32.totalorder %s97, %s111
      %p113 = scmp.eq.s32.totalorder %s24, 0
      %p114 = por %p112, %p113
      %s116 = sadd.s32 %s115, 1
      %p119 = scmp.eq.s32.totalorder %s18, 1
      %p120 = scmp.ne.s32.totalorder %s115, %s117
      %p121 = scmp.eq.s32.totalorder %s18, 0
      %p122 = por %p120, %p121
      %p123 = scmp.ne.s32.totalorder %s115, %s117
      %p124 = scmp.eq.s32.totalorder %s23, 1
      %p125 = por %p123, %p124
      %p126 = scmp.ne.s32.totalorder %s117, %s118
      %p127 = scmp.eq.s32.totalorder %s23, 0
      %p128 = por %p126, %p127
      %p129 = scmp.ne.s32.totalorder %s117, %s118
      %p130 = scmp.eq.s32.totalorder %s24, 1
      %p131 = por %p129, %p130
      %p133 = scmp.ne.s32.totalorder %s118, %s132
      %p134 = scmp.eq.s32.totalorder %s24, 0
      %p135 = por %p133, %p134
      %s137 = sadd.s32 %s136, 1
      %p140 = scmp.eq.s32.totalorder %s18, 1
      %p141 = scmp.ne.s32.totalorder %s136, %s138
      %p142 = scmp.eq.s32.totalorder %s18, 0
      %p143 = por %p141, %p142
      %p144 = scmp.ne.s32.totalorder %s136, %s138
      %p145 = scmp.eq.s32.totalorder %s23, 1
      %p146 = por %p144, %p145
      %p147 = scmp.ne.s32.totalorder %s138, %s139
      %p148 = scmp.eq.s32.totalorder %s23, 0
      %p149 = por %p147, %p148
      %p150 = scmp.ne.s32.totalorder %s138, %s139
      %p151 = scmp.eq.s32.totalorder %s24, 1
      %p152 = por %p150, %p151
      %p154 = scmp.ne.s32.totalorder %s139, %s153
      %p155 = scmp.eq.s32.totalorder %s24, 0
      %p156 = por %p154, %p155
      %s158 = sadd.s32 %s157, 1
      %p161 = scmp.eq.s32.totalorder %s18, 1
      %p162 = scmp.ne.s32.totalorder %s157, %s159
      %p163 = scmp.eq.s32.totalorder %s18, 0
      %p164 = por %p162, %p163
      %p165 = scmp.ne.s32.totalorder %s157, %s159
      %p166 = scmp.eq.s32.totalorder %s23, 1
      %p167 = por %p165, %p166
      %p168 = scmp.ne.s32.totalorder %s159, %s160
      %p169 = scmp.eq.s32.totalorder %s23, 0
      %p170 = por %p168, %p169
      %p171 = scmp.ne.s32.totalorder %s159, %s160
      %p172 = scmp.eq.s32.totalorder %s24, 1
      %p173 = por %p171, %p172
      %p175 = scmp.ne.s32.totalorder %s160, %s174
      %p176 = scmp.eq.s32.totalorder %s24, 0
      %p177 = por %p175, %p176
      %s179 = sadd.s32 %s178, 1
      %p182 = scmp.eq.s32.totalorder %s18, 1
      %p183 = scmp.ne.s32.totalorder %s178, %s180
      %p184 = scmp.eq.s32.totalorder %s18, 0
      %p185 = por %p183, %p184
      %p186 = scmp.ne.s32.totalorder %s178, %s180
      %p187 = scmp.eq.s32.totalorder %s23, 1
      %p188 = por %p186, %p187
      %p189 = scmp.ne.s32.totalorder %s180, %s181
      %p190 = scmp.eq.s32.totalorder %s23, 0
      %p191 = por %p189, %p190
      %p192 = scmp.ne.s32.totalorder %s180, %s181
      %p193 = scmp.eq.s32.totalorder %s24, 1
      %p194 = por %p192, %p193
      %p196 = scmp.ne.s32.totalorder %s181, %s195
      %p197 = scmp.eq.s32.totalorder %s24, 0
      %p198 = por %p196, %p197
      %s200 = sadd.s32 %s199, 1
      %p203 = scmp.eq.s32.totalorder %s18, 1
      %p204 = scmp.ne.s32.totalorder %s199, %s201
      %p205 = scmp.eq.s32.totalorder %s18, 0
      %p206 = por %p204, %p205
      %p207 = scmp.ne.s32.totalorder %s199, %s201
      %p208 = scmp.eq.s32.totalorder %s23, 1
      %p209 = por %p207, %p208
      %p210 = scmp.ne.s32.totalorder %s201, %s202
      %p211 = scmp.eq.s32.totalorder %s23, 0
      %p212 = por %p210, %p211
      %p213 = scmp.ne.s32.totalorder %s201, %s202
      %p214 = scmp.eq.s32.totalorder %s24, 1
      %p215 = por %p213, %p214
      %p217 = scmp.ne.s32.totalorder %s202, %s216
      %p218 = scmp.eq.s32.totalorder %s24, 0
      %p219 = por %p217, %p218
      %s220 = ssub.s32 %s18, %s25
      %p221 = scmp.eq.s32.totalorder %s220, 0
      %s223 = sadd.s32 %s222, 1
      %s224 = scalar_select %p221, %s222, %s223
      %p227 = pneg %p221
      %p228 = scmp.eq.s32.totalorder %s18, 1
      %p229 = por %p227, %p228
      %p230 = scmp.ne.s32.totalorder %s222, %s225
      %p231 = scmp.eq.s32.totalorder %s18, 0
      %p232 = por %p230, %p231
      %p233 = scmp.ne.s32.totalorder %s222, %s225
      %p234 = scmp.eq.s32.totalorder %s23, 1
      %p235 = por %p233, %p234
      %p236 = scmp.ne.s32.totalorder %s225, %s226
      %p237 = scmp.eq.s32.totalorder %s23, 0
      %p238 = por %p236, %p237
      %p239 = scmp.ne.s32.totalorder %s225, %s226
      %p240 = scmp.eq.s32.totalorder %s24, 1
      %p241 = por %p239, %p240
      %p243 = scmp.ne.s32.totalorder %s226, %s242
      %p244 = scmp.eq.s32.totalorder %s24, 0
      %p245 = por %p243, %p244
      %p246 = scmp.le.s32.totalorder 1, %s18
      %p247 = scmp.lt.s32.totalorder %s18, 3
      %p248 = pnand %p246, %p247
      %p249 = pneg %p248
      // Predicated region
      $region9: #{pixel_encoder_forward.1} parent=5 // pred_check
        _
      $region10: #{pixel_encoder_forward.1} parent=5 // pred_check_branch
        %251 = sbr.rel (%p248) target = $region12
      $region11: #{pixel_encoder_forward.1} parent=5 // pred_region
        %s252 = ssub.s32 %s18, 1
        // Predicated region
        $region13: #{pixel_encoder_forward.1} parent=11 // pred_check
          %p253 = pneg %p65
        $region14: #{pixel_encoder_forward.1} parent=11 // pred_check_branch
          %255 = sbr.rel (%p253) target = $region16
        $region15: #{pixel_encoder_forward.1} parent=11 // pred_region
          _
        $region16: #{pixel_encoder_forward.1} parent=11 // pred_fallthru
          _
        // Predicated region
        $region17: #{pixel_encoder_forward.1} parent=11 // pred_check
          %p256 = pneg %p86
        $region18: #{pixel_encoder_forward.1} parent=11 // pred_check_branch
          %258 = sbr.rel (%p256) target = $region20
        $region19: #{pixel_encoder_forward.1} parent=11 // pred_region
          _
        $region20: #{pixel_encoder_forward.1} parent=11 // pred_fallthru
          _
        // Predicated region
        $region21: #{pixel_encoder_forward.1} parent=11 // pred_check
          %p259 = pneg %p107
        $region22: #{pixel_encoder_forward.1} parent=11 // pred_check_branch
          %261 = sbr.rel (%p259) target = $region24
        $region23: #{pixel_encoder_forward.1} parent=11 // pred_region
          _
        $region24: #{pixel_encoder_forward.1} parent=11 // pred_fallthru
          _
        // Predicated region
        $region25: #{pixel_encoder_forward.1} parent=11 // pred_check
          %p262 = pneg %p128
        $region26: #{pixel_encoder_forward.1} parent=11 // pred_check_branch
          %264 = sbr.rel (%p262) target = $region28
        $region27: #{pixel_encoder_forward.1} parent=11 // pred_region
          _
        $region28: #{pixel_encoder_forward.1} parent=11 // pred_fallthru
          _
        // Predicated region
        $region29: #{pixel_encoder_forward.1} parent=11 // pred_check
          %p265 = pneg %p149
        $region30: #{pixel_encoder_forward.1} parent=11 // pred_check_branch
          %267 = sbr.rel (%p265) target = $region32
        $region31: #{pixel_encoder_forward.1} parent=11 // pred_region
          _
        $region32: #{pixel_encoder_forward.1} parent=11 // pred_fallthru
          _
        // Predicated region
        $region33: #{pixel_encoder_forward.1} parent=11 // pred_check
          %p268 = pneg %p170
        $region34: #{pixel_encoder_forward.1} parent=11 // pred_check_branch
          %270 = sbr.rel (%p268) target = $region36
        $region35: #{pixel_encoder_forward.1} parent=11 // pred_region
          _
        $region36: #{pixel_encoder_forward.1} parent=11 // pred_fallthru
          _
        // Predicated region
        $region37: #{pixel_encoder_forward.1} parent=11 // pred_check
          %p271 = pneg %p191
        $region38: #{pixel_encoder_forward.1} parent=11 // pred_check_branch
          %273 = sbr.rel (%p271) target = $region40
        $region39: #{pixel_encoder_forward.1} parent=11 // pred_region
          _
        $region40: #{pixel_encoder_forward.1} parent=11 // pred_fallthru
          _
        // Predicated region
        $region41: #{pixel_encoder_forward.1} parent=11 // pred_check
          %p274 = pneg %p212
        $region42: #{pixel_encoder_forward.1} parent=11 // pred_check_branch
          %276 = sbr.rel (%p274) target = $region44
        $region43: #{pixel_encoder_forward.1} parent=11 // pred_region
          _
        $region44: #{pixel_encoder_forward.1} parent=11 // pred_fallthru
          _
      $region12: #{pixel_encoder_forward.1} parent=5 // pred_fallthru
        _
      %p277 = scmp.lt.s32.totalorder %s18, 2
      // Predicated region
      $region45: #{pixel_encoder_forward.1} parent=5 // pred_check
        %p278 = pneg %p277
      $region46: #{pixel_encoder_forward.1} parent=5 // pred_check_branch
        %280 = sbr.rel (%p278) target = $region48
      $region47: #{pixel_encoder_forward.1} parent=5 // pred_region
        // Predicated region
        $region49: #{pixel_encoder_forward.1} parent=47 // pred_check
          %p281 = pneg %p38
        $region50: #{pixel_encoder_forward.1} parent=47 // pred_check_branch
          %283 = sbr.rel (%p281) target = $region52
        $region51: #{pixel_encoder_forward.1} parent=47 // pred_region
          %p284 = scmp.lt.s32.totalorder %s18, 1
          %s285 = scalar_select %p284, %s18, 1
          %s286 = smul.addr %s285, 14
          %s287 = smul.addr %s286, 8
          %s288 = scalar_lea.vmem %s0, %s287
        $region52: #{pixel_encoder_forward.1} parent=47 // pred_fallthru
          _
      $region48: #{pixel_encoder_forward.1} parent=5 // pred_fallthru
        _
      %p289 = scmp.le.s32.totalorder 1, %s18
      %p290 = scmp.lt.s32.totalorder %s18, 3
      %p291 = pnand %p289, %p290
      %p292 = pneg %p291
      // Predicated region
      $region53: #{pixel_encoder_forward.1} parent=5 // pred_check
        _
      $region54: #{pixel_encoder_forward.1} parent=5 // pred_check_branch
        %294 = sbr.rel (%p291) target = $region56
      $region55: #{pixel_encoder_forward.1} parent=5 // pred_region
        %s295 = ssub.s32 %s18, 1
        %p296 = scmp.lt.s32.totalorder %s23, 1
        %s297 = scalar_select %p296, %s23, 1
        %s298 = smul.addr %s297, 14
        %s299 = smul.addr %s298, 8
        %s300 = scalar_lea.vmem %s0, %s299
        %p301 = pneg %p44
        %p302 = pneg %p41
        %p303 = pneg %p65
        %p304 = pneg %p62
        %p305 = pneg %p86
        %p306 = pneg %p83
        %p307 = pneg %p107
        %p308 = pneg %p104
        %p309 = pneg %p128
        %p310 = pneg %p125
        %p311 = pneg %p149
        %p312 = pneg %p146
        %p313 = pneg %p170
        %p314 = pneg %p167
        %p315 = pneg %p191
        %p316 = pneg %p188
        %p317 = pneg %p212
        %p318 = pneg %p209
        %p319 = pneg %p238
        %p320 = pneg %p235
        %s321 = sand.u32 %s225, 1
        %s322 = scalar_lea.sflag [#allocation3], %s321
        %s323 = sand.u32 %s225, 1
        %s324 = smul.addr %s323, 8
        %s325 = scalar_lea.vmem [#allocation2], %s324
        %p326 = scmp.lt.s32.totalorder %s23, 1
        %s327 = scalar_select %p326, %s23, 1
        %s328 = smul.addr %s327, 14
        %s329 = smul.addr %s328, 8
        %s330 = scalar_lea.vmem %s0, %s329
        %v331 = vld [vmem:[%s330] sm:$0xff]
        %v332 = vld [vmem:[%s330 + $0x8] sm:$0xff]
        %v333 = vld [vmem:[%s330 + $0x10] sm:$0xff]
        %v334 = vld [vmem:[%s330 + $0x18] sm:$0xff]
        %v335 = vld [vmem:[%s330 + $0x20] sm:$0xff]
        %v336 = vld [vmem:[%s330 + $0x28] sm:$0xff]
        %v337 = vld [vmem:[%s330 + $0x30] sm:$0xff]
        %v338 = vld [vmem:[%s330 + $0x38] sm:$0xff]
        %v339 = vld [vmem:[%s330 + $0x40] sm:$0xff]
        %v340 = vld [vmem:[%s330 + $0x48] sm:$0xff]
        %v341 = vld [vmem:[%s330 + $0x50] sm:$0xff]
        %v342 = vld [vmem:[%s330 + $0x58] sm:$0xff]
        %v343 = vld [vmem:[%s330 + $0x60] sm:$0xff]
        %v344 = vld [vmem:[%s330 + $0x68] sm:$0xff]
        %v345 = vld [vmem:[%s1] sm:$0xff]
        %v346 = vld [vmem:[%s1 + $0x8] sm:$0xff]
        %v347 = vld [vmem:[%s1 + $0x10] sm:$0xff]
        %v348 = vld [vmem:[%s1 + $0x18] sm:$0xff]
        %v349 = vld [vmem:[%s1 + $0x20] sm:$0xff]
        %v350 = vld [vmem:[%s1 + $0x28] sm:$0xff]
        %v351 = vld [vmem:[%s1 + $0x30] sm:$0xff]
        %v352 = vld [vmem:[%s1 + $0x38] sm:$0xff]
        %v353 = vld [vmem:[%s1 + $0x40] sm:$0xff]
        %v354 = vld [vmem:[%s1 + $0x48] sm:$0xff]
        %v355 = vld [vmem:[%s1 + $0x50] sm:$0xff]
        %v356 = vld [vmem:[%s1 + $0x58] sm:$0xff]
        %v357 = vld [vmem:[%s1 + $0x60] sm:$0xff]
        %v358 = vld [vmem:[%s1 + $0x68] sm:$0xff]
        %v359 = vld [vmem:[%s1 + $0x70] sm:$0xff]
        %v360 = vld [vmem:[%s1 + $0x78] sm:$0xff]
        %v361 = vld [vmem:[%s1 + $0x80] sm:$0xff]
        %v362 = vld [vmem:[%s1 + $0x88] sm:$0xff]
        %v363 = vld [vmem:[%s1 + $0x90] sm:$0xff]
        %v364 = vld [vmem:[%s1 + $0x98] sm:$0xff]
        %v365 = vld [vmem:[%s1 + $0xa0] sm:$0xff]
        %v366 = vld [vmem:[%s1 + $0xa8] sm:$0xff]
        %v367 = vld [vmem:[%s1 + $0xb0] sm:$0xff]
        %v368 = vld [vmem:[%s1 + $0xb8] sm:$0xff]
        %v369 = vld [vmem:[%s1 + $0xc0] sm:$0xff]
        %v370 = vld [vmem:[%s1 + $0xc8] sm:$0xff]
        %v371 = vld [vmem:[%s1 + $0xd0] sm:$0xff]
        %v372 = vld [vmem:[%s1 + $0xd8] sm:$0xff]
        %v373 = vld [vmem:[%s1 + $0xe0] sm:$0xff]
        %v374 = vld [vmem:[%s1 + $0xe8] sm:$0xff]
        %v375 = vld [vmem:[%s1 + $0xf0] sm:$0xff]
        %v376 = vld [vmem:[%s1 + $0xf8] sm:$0xff]
        %v377 = vld [vmem:[%s1 + $0x100] sm:$0xff]
        %v378 = vld [vmem:[%s1 + $0x108] sm:$0xff]
        %v379 = vld [vmem:[%s1 + $0x110] sm:$0xff]
        %v380 = vld [vmem:[%s1 + $0x118] sm:$0xff]
        %v381 = vld [vmem:[%s1 + $0x120] sm:$0xff]
        %v382 = vld [vmem:[%s1 + $0x128] sm:$0xff]
        %v383 = vld [vmem:[%s1 + $0x130] sm:$0xff]
        %v384 = vld [vmem:[%s1 + $0x138] sm:$0xff]
        %v385 = vld [vmem:[%s1 + $0x140] sm:$0xff]
        %v386 = vld [vmem:[%s1 + $0x148] sm:$0xff]
        %v387 = vld [vmem:[%s1 + $0x150] sm:$0xff]
        %v388 = vld [vmem:[%s1 + $0x158] sm:$0xff]
        %v389 = vld [vmem:[%s1 + $0x160] sm:$0xff]
        %v390 = vld [vmem:[%s1 + $0x168] sm:$0xff]
        %v391 = vld [vmem:[%s1 + $0x170] sm:$0xff]
        %v392 = vld [vmem:[%s1 + $0x178] sm:$0xff]
        %v393 = vld [vmem:[%s1 + $0x180] sm:$0xff]
        %v394 = vld [vmem:[%s1 + $0x188] sm:$0xff]
        %v395 = vld [vmem:[%s1 + $0x190] sm:$0xff]
        %v396 = vld [vmem:[%s1 + $0x198] sm:$0xff]
        %v397 = vld [vmem:[%s1 + $0x1a0] sm:$0xff]
        %v398 = vld [vmem:[%s1 + $0x1a8] sm:$0xff]
        %v399 = vld [vmem:[%s1 + $0x1b0] sm:$0xff]
        %v400 = vld [vmem:[%s1 + $0x1b8] sm:$0xff]
        %v401 = vld [vmem:[%s1 + $0x1c0] sm:$0xff]
        %v402 = vld [vmem:[%s1 + $0x1c8] sm:$0xff]
        %v403 = vld [vmem:[%s1 + $0x1d0] sm:$0xff]
        %v404 = vld [vmem:[%s1 + $0x1d8] sm:$0xff]
        %v405 = vld [vmem:[%s1 + $0x1e0] sm:$0xff]
        %v406 = vld [vmem:[%s1 + $0x1e8] sm:$0xff]
        %v407 = vld [vmem:[%s1 + $0x1f0] sm:$0xff]
        %v408 = vld [vmem:[%s1 + $0x1f8] sm:$0xff]
        %v409 = vld [vmem:[%s2] sm:$0x3]
        %v411 = vlaneseq
        %v412 = vshrl.u32 %v411, 7
        %v413 = vsub.s32 0, %v412
        %v414 = vrot.slane %v409, %v413
        %v415 = vlaneseq
        %v416 = vshrl.u32 %v415, 7
        %v417 = vsub.s32 1, %v416
        %v418 = vrot.slane %v409, %v417
        %421 = vmatprep.subr.mxu0 %v346
        %422 = vmatpush1.msra.mxu0 %v345
        %423 = vmatprep.subr.mxu0 %v348
        %424 = vmatpush1.msra.mxu0 %v347
        %425 = vmatprep.subr.mxu0 %v350
        %426 = vmatpush1.msra.mxu0 %v349
        %427 = vmatprep.subr.mxu0 %v352
        %428 = vmatpush1.msra.mxu0 %v351
        %429 = vmatprep.subr.mxu0 %v354
        %430 = vmatpush1.msra.mxu0 %v353
        %431 = vmatprep.subr.mxu0 %v356
        %432 = vmatpush1.msra.mxu0 %v355
        %433 = vmatprep.subr.mxu0 %v358
        %434 = vmatpush1.msra.mxu0 %v357
        %435 = vmatprep.subr.mxu0 %v360
        %436 = vmatpush1.msra.mxu0 %v359
        %437 = vmatprep.subr.mxu0 %v362
        %438 = vmatpush1.msra.mxu0 %v361
        %439 = vmatprep.subr.mxu0 %v364
        %440 = vmatpush1.msra.mxu0 %v363
        %441 = vmatprep.subr.mxu0 %v366
        %442 = vmatpush1.msra.mxu0 %v365
        %443 = vmatprep.subr.mxu0 %v368
        %444 = vmatpush1.msra.mxu0 %v367
        %445 = vmatprep.subr.mxu0 %v370
        %446 = vmatpush1.msra.mxu0 %v369
        %447 = vmatprep.subr.mxu0 %v372
        %448 = vmatpush1.msra.mxu0 %v371
        %449 = vmatprep.subr.mxu0 %v374
        %450 = vmatpush1.msra.mxu0 %v373
        %451 = vmatprep.subr.mxu0 %v376
        %452 = vmatpush1.msra.mxu0 %v375
        %453 = vmatprep.subr.mxu0 %v378
        %454 = vmatpush1.msra.mxu0 %v377
        %455 = vmatprep.subr.mxu0 %v380
        %456 = vmatpush1.msra.mxu0 %v379
        %457 = vmatprep.subr.mxu0 %v382
        %458 = vmatpush1.msra.mxu0 %v381
        %459 = vmatprep.subr.mxu0 %v384
        %460 = vmatpush1.msra.mxu0 %v383
        %461 = vmatprep.subr.mxu0 %v386
        %462 = vmatpush1.msra.mxu0 %v385
        %463 = vmatprep.subr.mxu0 %v388
        %464 = vmatpush1.msra.mxu0 %v387
        %465 = vmatprep.subr.mxu0 %v390
        %466 = vmatpush1.msra.mxu0 %v389
        %467 = vmatprep.subr.mxu0 %v392
        %468 = vmatpush1.msra.mxu0 %v391
        %469 = vmatprep.subr.mxu0 %v394
        %470 = vmatpush1.msra.mxu0 %v393
        %471 = vmatprep.subr.mxu0 %v396
        %472 = vmatpush1.msra.mxu0 %v395
        %473 = vmatprep.subr.mxu0 %v398
        %474 = vmatpush1.msra.mxu0 %v397
        %475 = vmatprep.subr.mxu0 %v400
        %476 = vmatpush1.msra.mxu0 %v399
        %477 = vmatprep.subr.mxu0 %v402
        %478 = vmatpush1.msra.mxu0 %v401
        %479 = vmatprep.subr.mxu0 %v404
        %480 = vmatpush1.msra.mxu0 %v403
        %481 = vmatprep.subr.mxu0 %v406
        %482 = vmatpush1.msra.mxu0 %v405
        %483 = vmatprep.subr.mxu0 %v408
        %484 = vmatpush1.msra.mxu0 %v407
        %485 = vmatprep.mubr.f32.mxu0 %v332
        %486 = vmatmul.mubr.f32.gmra.mrb[0].mxu0 %v331
        %v487 = vpop.f32.mrb[0].mxu0
        %v488 = vadd.f32 %v414, %v487
        %v489 = vpop.f32.mrb[0].mxu0
        %v490 = vadd.f32 %v418, %v489
        %491 = vmatprep.mubr.f32.mxu0 %v334
        %492 = vmatmul.mubr.f32.gmra.mrb[0].mxu0 %v333
        %v493 = vpop.f32.mrb[0].mxu0
        %v494 = vadd.f32 %v414, %v493
        %v495 = vpop.f32.mrb[0].mxu0
        %v496 = vadd.f32 %v418, %v495
        %497 = vmatprep.mubr.f32.mxu0 %v336
        %498 = vmatmul.mubr.f32.gmra.mrb[0].mxu0 %v335
        %v499 = vpop.f32.mrb[0].mxu0
        %v500 = vadd.f32 %v414, %v499
        %v501 = vpop.f32.mrb[0].mxu0
        %v502 = vadd.f32 %v418, %v501
        %503 = vmatprep.mubr.f32.mxu0 %v338
        %504 = vmatmul.mubr.f32.gmra.mrb[0].mxu0 %v337
        %v505 = vpop.f32.mrb[0].mxu0
        %v506 = vadd.f32 %v414, %v505
        %v507 = vpop.f32.mrb[0].mxu0
        %v508 = vadd.f32 %v418, %v507
        %509 = vmatprep.mubr.f32.mxu0 %v340
        %510 = vmatmul.mubr.f32.gmra.mrb[0].mxu0 %v339
        %v511 = vpop.f32.mrb[0].mxu0
        %v512 = vadd.f32 %v414, %v511
        %v513 = vpop.f32.mrb[0].mxu0
        %v514 = vadd.f32 %v418, %v513
        %515 = vmatprep.mubr.f32.mxu0 %v342
        %516 = vmatmul.mubr.f32.gmra.mrb[0].mxu0 %v341
        %v517 = vpop.f32.mrb[0].mxu0
        %v518 = vadd.f32 %v414, %v517
        %v519 = vpop.f32.mrb[0].mxu0
        %v520 = vadd.f32 %v418, %v519
        %521 = vmatprep.mubr.f32.mxu0 %v344
        %522 = vmatmul.mubr.f32.gmra.mrb[0].mxu0 %v343
        %v523 = vpop.f32.mrb[0].mxu0
        %v524 = vadd.f32 %v414, %v523
        %v525 = vpop.f32.mrb[0].mxu0
        %v526 = vadd.f32 %v418, %v525
        %527 = vdwg.mxu0
        %v528 = vmax.f32 %v488, 0.0
        %v529 = vmax.f32 %v490, 0.0
        %v530 = vmax.f32 %v494, 0.0
        %v531 = vmax.f32 %v496, 0.0
        %v532 = vmax.f32 %v500, 0.0
        %v533 = vmax.f32 %v502, 0.0
        %v534 = vmax.f32 %v506, 0.0
        %v535 = vmax.f32 %v508, 0.0
        %v536 = vmax.f32 %v512, 0.0
        %v537 = vmax.f32 %v514, 0.0
        %v538 = vmax.f32 %v518, 0.0
        %v539 = vmax.f32 %v520, 0.0
        %v540 = vmax.f32 %v524, 0.0
        %v541 = vmax.f32 %v526, 0.0
        %v542 = vld [vmem:[%s3] sm:$0xff]
        %v543 = vld [vmem:[%s3 + $0x8] sm:$0xff]
        %v544 = vld [vmem:[%s3 + $0x10] sm:$0xff]
        %v545 = vld [vmem:[%s3 + $0x18] sm:$0xff]
        %v546 = vld [vmem:[%s3 + $0x20] sm:$0xff]
        %v547 = vld [vmem:[%s3 + $0x28] sm:$0xff]
        %v548 = vld [vmem:[%s3 + $0x30] sm:$0xff]
        %v549 = vld [vmem:[%s3 + $0x38] sm:$0xff]
        %v550 = vld [vmem:[%s3 + $0x40] sm:$0xff]
        %v551 = vld [vmem:[%s3 + $0x48] sm:$0xff]
        %v552 = vld [vmem:[%s3 + $0x50] sm:$0xff]
        %v553 = vld [vmem:[%s3 + $0x58] sm:$0xff]
        %v554 = vld [vmem:[%s3 + $0x60] sm:$0xff]
        %v555 = vld [vmem:[%s3 + $0x68] sm:$0xff]
        %v556 = vld [vmem:[%s3 + $0x70] sm:$0xff]
        %v557 = vld [vmem:[%s3 + $0x78] sm:$0xff]
        %v558 = vld [vmem:[%s3 + $0x80] sm:$0xff]
        %v559 = vld [vmem:[%s3 + $0x88] sm:$0xff]
        %v560 = vld [vmem:[%s3 + $0x90] sm:$0xff]
        %v561 = vld [vmem:[%s3 + $0x98] sm:$0xff]
        %v562 = vld [vmem:[%s3 + $0xa0] sm:$0xff]
        %v563 = vld [vmem:[%s3 + $0xa8] sm:$0xff]
        %v564 = vld [vmem:[%s3 + $0xb0] sm:$0xff]
        %v565 = vld [vmem:[%s3 + $0xb8] sm:$0xff]
        %v566 = vld [vmem:[%s3 + $0xc0] sm:$0xff]
        %v567 = vld [vmem:[%s3 + $0xc8] sm:$0xff]
        %v568 = vld [vmem:[%s3 + $0xd0] sm:$0xff]
        %v569 = vld [vmem:[%s3 + $0xd8] sm:$0xff]
        %v570 = vld [vmem:[%s3 + $0xe0] sm:$0xff]
        %v571 = vld [vmem:[%s3 + $0xe8] sm:$0xff]
        %v572 = vld [vmem:[%s3 + $0xf0] sm:$0xff]
        %v573 = vld [vmem:[%s3 + $0xf8] sm:$0xff]
        %v574 = vld [vmem:[%s3 + $0x100] sm:$0xff]
        %v575 = vld [vmem:[%s3 + $0x108] sm:$0xff]
        %v576 = vld [vmem:[%s3 + $0x110] sm:$0xff]
        %v577 = vld [vmem:[%s3 + $0x118] sm:$0xff]
        %v578 = vld [vmem:[%s3 + $0x120] sm:$0xff]
        %v579 = vld [vmem:[%s3 + $0x128] sm:$0xff]
        %v580 = vld [vmem:[%s3 + $0x130] sm:$0xff]
        %v581 = vld [vmem:[%s3 + $0x138] sm:$0xff]
        %v582 = vld [vmem:[%s3 + $0x140] sm:$0xff]
        %v583 = vld [vmem:[%s3 + $0x148] sm:$0xff]
        %v584 = vld [vmem:[%s3 + $0x150] sm:$0xff]
        %v585 = vld [vmem:[%s3 + $0x158] sm:$0xff]
        %v586 = vld [vmem:[%s3 + $0x160] sm:$0xff]
        %v587 = vld [vmem:[%s3 + $0x168] sm:$0xff]
        %v588 = vld [vmem:[%s3 + $0x170] sm:$0xff]
        %v589 = vld [vmem:[%s3 + $0x178] sm:$0xff]
        %v590 = vld [vmem:[%s3 + $0x180] sm:$0xff]
        %v591 = vld [vmem:[%s3 + $0x188] sm:$0xff]
        %v592 = vld [vmem:[%s3 + $0x190] sm:$0xff]
        %v593 = vld [vmem:[%s3 + $0x198] sm:$0xff]
        %v594 = vld [vmem:[%s3 + $0x1a0] sm:$0xff]
        %v595 = vld [vmem:[%s3 + $0x1a8] sm:$0xff]
        %v596 = vld [vmem:[%s3 + $0x1b0] sm:$0xff]
        %v597 = vld [vmem:[%s3 + $0x1b8] sm:$0xff]
        %v598 = vld [vmem:[%s3 + $0x1c0] sm:$0xff]
        %v599 = vld [vmem:[%s3 + $0x1c8] sm:$0xff]
        %v600 = vld [vmem:[%s3 + $0x1d0] sm:$0xff]
        %v601 = vld [vmem:[%s3 + $0x1d8] sm:$0xff]
        %v602 = vld [vmem:[%s3 + $0x1e0] sm:$0xff]
        %v603 = vld [vmem:[%s3 + $0x1e8] sm:$0xff]
        %v604 = vld [vmem:[%s3 + $0x1f0] sm:$0xff]
        %v605 = vld [vmem:[%s3 + $0x1f8] sm:$0xff]
        %s606 = scalar_lea.vmem %s3, 512
        %v607 = vld [vmem:[%s606] sm:$0xff]
        %v608 = vld [vmem:[%s606 + $0x8] sm:$0xff]
        %v609 = vld [vmem:[%s606 + $0x10] sm:$0xff]
        %v610 = vld [vmem:[%s606 + $0x18] sm:$0xff]
        %v611 = vld [vmem:[%s606 + $0x20] sm:$0xff]
        %v612 = vld [vmem:[%s606 + $0x28] sm:$0xff]
        %v613 = vld [vmem:[%s606 + $0x30] sm:$0xff]
        %v614 = vld [vmem:[%s606 + $0x38] sm:$0xff]
        %v615 = vld [vmem:[%s606 + $0x40] sm:$0xff]
        %v616 = vld [vmem:[%s606 + $0x48] sm:$0xff]
        %v617 = vld [vmem:[%s606 + $0x50] sm:$0xff]
        %v618 = vld [vmem:[%s606 + $0x58] sm:$0xff]
        %v619 = vld [vmem:[%s606 + $0x60] sm:$0xff]
        %v620 = vld [vmem:[%s606 + $0x68] sm:$0xff]
        %v621 = vld [vmem:[%s606 + $0x70] sm:$0xff]
        %v622 = vld [vmem:[%s606 + $0x78] sm:$0xff]
        %v623 = vld [vmem:[%s606 + $0x80] sm:$0xff]
        %v624 = vld [vmem:[%s606 + $0x88] sm:$0xff]
        %v625 = vld [vmem:[%s606 + $0x90] sm:$0xff]
        %v626 = vld [vmem:[%s606 + $0x98] sm:$0xff]
        %v627 = vld [vmem:[%s606 + $0xa0] sm:$0xff]
        %v628 = vld [vmem:[%s606 + $0xa8] sm:$0xff]
        %v629 = vld [vmem:[%s606 + $0xb0] sm:$0xff]
        %v630 = vld [vmem:[%s606 + $0xb8] sm:$0xff]
        %v631 = vld [vmem:[%s606 + $0xc0] sm:$0xff]
        %v632 = vld [vmem:[%s606 + $0xc8] sm:$0xff]
        %v633 = vld [vmem:[%s606 + $0xd0] sm:$0xff]
        %v634 = vld [vmem:[%s606 + $0xd8] sm:$0xff]
        %v635 = vld [vmem:[%s606 + $0xe0] sm:$0xff]
        %v636 = vld [vmem:[%s606 + $0xe8] sm:$0xff]
        %v637 = vld [vmem:[%s606 + $0xf0] sm:$0xff]
        %v638 = vld [vmem:[%s606 + $0xf8] sm:$0xff]
        %v639 = vld [vmem:[%s606 + $0x100] sm:$0xff]
        %v640 = vld [vmem:[%s606 + $0x108] sm:$0xff]
        %v641 = vld [vmem:[%s606 + $0x110] sm:$0xff]
        %v642 = vld [vmem:[%s606 + $0x118] sm:$0xff]
        %v643 = vld [vmem:[%s606 + $0x120] sm:$0xff]
        %v644 = vld [vmem:[%s606 + $0x128] sm:$0xff]
        %v645 = vld [vmem:[%s606 + $0x130] sm:$0xff]
        %v646 = vld [vmem:[%s606 + $0x138] sm:$0xff]
        %v647 = vld [vmem:[%s606 + $0x140] sm:$0xff]
        %v648 = vld [vmem:[%s606 + $0x148] sm:$0xff]
        %v649 = vld [vmem:[%s606 + $0x150] sm:$0xff]
        %v650 = vld [vmem:[%s606 + $0x158] sm:$0xff]
        %v651 = vld [vmem:[%s606 + $0x160] sm:$0xff]
        %v652 = vld [vmem:[%s606 + $0x168] sm:$0xff]
        %v653 = vld [vmem:[%s606 + $0x170] sm:$0xff]
        %v654 = vld [vmem:[%s606 + $0x178] sm:$0xff]
        %v655 = vld [vmem:[%s606 + $0x180] sm:$0xff]
        %v656 = vld [vmem:[%s606 + $0x188] sm:$0xff]
        %v657 = vld [vmem:[%s606 + $0x190] sm:$0xff]
        %v658 = vld [vmem:[%s606 + $0x198] sm:$0xff]
        %v659 = vld [vmem:[%s606 + $0x1a0] sm:$0xff]
        %v660 = vld [vmem:[%s606 + $0x1a8] sm:$0xff]
        %v661 = vld [vmem:[%s606 + $0x1b0] sm:$0xff]
        %v662 = vld [vmem:[%s606 + $0x1b8] sm:$0xff]
        %v663 = vld [vmem:[%s606 + $0x1c0] sm:$0xff]
        %v664 = vld [vmem:[%s606 + $0x1c8] sm:$0xff]
        %v665 = vld [vmem:[%s606 + $0x1d0] sm:$0xff]
        %v666 = vld [vmem:[%s606 + $0x1d8] sm:$0xff]
        %v667 = vld [vmem:[%s606 + $0x1e0] sm:$0xff]
        %v668 = vld [vmem:[%s606 + $0x1e8] sm:$0xff]
        %v669 = vld [vmem:[%s606 + $0x1f0] sm:$0xff]
        %v670 = vld [vmem:[%s606 + $0x1f8] sm:$0xff]
        %671 = vmatprep.subr.mxu0 %v608
        %672 = vmatpush1.msra.mxu0 %v607
        %673 = vmatprep.subr.mxu0 %v610
        %674 = vmatpush1.msra.mxu0 %v609
        %675 = vmatprep.subr.mxu0 %v612
        %676 = vmatpush1.msra.mxu0 %v611
        %677 = vmatprep.subr.mxu0 %v614
        %678 = vmatpush1.msra.mxu0 %v613
        %679 = vmatprep.subr.mxu0 %v616
        %680 = vmatpush1.msra.mxu0 %v615
        %681 = vmatprep.subr.mxu0 %v618
        %682 = vmatpush1.msra.mxu0 %v617
        %683 = vmatprep.subr.mxu0 %v620
        %684 = vmatpush1.msra.mxu0 %v619
        %685 = vmatprep.subr.mxu0 %v622
        %686 = vmatpush1.msra.mxu0 %v621
        %687 = vmatprep.subr.mxu0 %v624
        %688 = vmatpush1.msra.mxu0 %v623
        %689 = vmatprep.subr.mxu0 %v626
        %690 = vmatpush1.msra.mxu0 %v625
        %691 = vmatprep.subr.mxu0 %v628
        %692 = vmatpush1.msra.mxu0 %v627
        %693 = vmatprep.subr.mxu0 %v630
        %694 = vmatpush1.msra.mxu0 %v629
        %695 = vmatprep.subr.mxu0 %v632
        %696 = vmatpush1.msra.mxu0 %v631
        %697 = vmatprep.subr.mxu0 %v634
        %698 = vmatpush1.msra.mxu0 %v633
        %699 = vmatprep.subr.mxu0 %v636
        %700 = vmatpush1.msra.mxu0 %v635
        %701 = vmatprep.subr.mxu0 %v638
        %702 = vmatpush1.msra.mxu0 %v637
        %703 = vmatprep.subr.mxu0 %v640
        %704 = vmatpush1.msra.mxu0 %v639
        %705 = vmatprep.subr.mxu0 %v642
        %706 = vmatpush1.msra.mxu0 %v641
        %707 = vmatprep.subr.mxu0 %v644
        %708 = vmatpush1.msra.mxu0 %v643
        %709 = vmatprep.subr.mxu0 %v646
        %710 = vmatpush1.msra.mxu0 %v645
        %711 = vmatprep.subr.mxu0 %v648
        %712 = vmatpush1.msra.mxu0 %v647
        %713 = vmatprep.subr.mxu0 %v650
        %714 = vmatpush1.msra.mxu0 %v649
        %715 = vmatprep.subr.mxu0 %v652
        %716 = vmatpush1.msra.mxu0 %v651
        %717 = vmatprep.subr.mxu0 %v654
        %718 = vmatpush1.msra.mxu0 %v653
        %719 = vmatprep.subr.mxu0 %v656
        %720 = vmatpush1.msra.mxu0 %v655
        %721 = vmatprep.subr.mxu0 %v658
        %722 = vmatpush1.msra.mxu0 %v657
        %723 = vmatprep.subr.mxu0 %v660
        %724 = vmatpush1.msra.mxu0 %v659
        %725 = vmatprep.subr.mxu0 %v662
        %726 = vmatpush1.msra.mxu0 %v661
        %727 = vmatprep.subr.mxu0 %v664
        %728 = vmatpush1.msra.mxu0 %v663
        %729 = vmatprep.subr.mxu0 %v666
        %730 = vmatpush1.msra.mxu0 %v665
        %731 = vmatprep.subr.mxu0 %v668
        %732 = vmatpush1.msra.mxu0 %v667
        %733 = vmatprep.subr.mxu0 %v670
        %734 = vmatpush1.msra.mxu0 %v669
        %735 = vmatprep.mubr.f32.mxu0 %v531
        %736 = vmatmul.mubr.f32.gmra.mrb[0].mxu0 %v530
        %v737 = vpop.f32.mrb[0].mxu0
        %v738 = vadd.f32 0.0, %v737
        %v739 = vpop.f32.mrb[0].mxu0
        %v740 = vadd.f32 0.0, %v739
        %741 = vmatprep.mubr.f32.mxu0 %v533
        %742 = vmatmul.mubr.f32.gmra.mrb[0].mxu0 %v532
        %v743 = vpop.f32.mrb[0].mxu0
        %v744 = vadd.f32 0.0, %v743
        %v745 = vpop.f32.mrb[0].mxu0
        %v746 = vadd.f32 0.0, %v745
        %747 = vmatprep.mubr.f32.mxu0 %v535
        %748 = vmatmul.mubr.f32.gmra.mrb[0].mxu0 %v534
        %v749 = vpop.f32.mrb[0].mxu0
        %v750 = vadd.f32 0.0, %v749
        %v751 = vpop.f32.mrb[0].mxu0
        %v752 = vadd.f32 0.0, %v751
        %753 = vmatprep.mubr.f32.mxu0 %v537
        %754 = vmatmul.mubr.f32.gmra.mrb[0].mxu0 %v536
        %v755 = vpop.f32.mrb[0].mxu0
        %v756 = vadd.f32 0.0, %v755
        %v757 = vpop.f32.mrb[0].mxu0
        %v758 = vadd.f32 0.0, %v757
        %759 = vmatprep.mubr.f32.mxu0 %v539
        %760 = vmatmul.mubr.f32.gmra.mrb[0].mxu0 %v538
        %v761 = vpop.f32.mrb[0].mxu0
        %v762 = vadd.f32 0.0, %v761
        %v763 = vpop.f32.mrb[0].mxu0
        %v764 = vadd.f32 0.0, %v763
        %765 = vdwg.mxu0
        %766 = vmatprep.subr.mxu0 %v543
        %767 = vmatpush1.msra.mxu0 %v542
        %768 = vmatprep.subr.mxu0 %v545
        %769 = vmatpush1.msra.mxu0 %v544
        %770 = vmatprep.subr.mxu0 %v547
        %771 = vmatpush1.msra.mxu0 %v546
        %772 = vmatprep.subr.mxu0 %v549
        %773 = vmatpush1.msra.mxu0 %v548
        %774 = vmatprep.subr.mxu0 %v551
        %775 = vmatpush1.msra.mxu0 %v550
        %776 = vmatprep.subr.mxu0 %v553
        %777 = vmatpush1.msra.mxu0 %v552
        %778 = vmatprep.subr.mxu0 %v555
        %779 = vmatpush1.msra.mxu0 %v554
        %780 = vmatprep.subr.mxu0 %v557
        %781 = vmatpush1.msra.mxu0 %v556
        %782 = vmatprep.subr.mxu0 %v559
        %783 = vmatpush1.msra.mxu0 %v558
        %784 = vmatprep.subr.mxu0 %v561
        %785 = vmatpush1.msra.mxu0 %v560
        %786 = vmatprep.subr.mxu0 %v563
        %787 = vmatpush1.msra.mxu0 %v562
        %788 = vmatprep.subr.mxu0 %v565
        %789 = vmatpush1.msra.mxu0 %v564
        %790 = vmatprep.subr.mxu0 %v567
        %791 = vmatpush1.msra.mxu0 %v566
        %792 = vmatprep.subr.mxu0 %v569
        %793 = vmatpush1.msra.mxu0 %v568
        %794 = vmatprep.subr.mxu0 %v571
        %795 = vmatpush1.msra.mxu0 %v570
        %796 = vmatprep.subr.mxu0 %v573
        %797 = vmatpush1.msra.mxu0 %v572
        %798 = vmatprep.subr.mxu0 %v575
        %799 = vmatpush1.msra.mxu0 %v574
        %800 = vmatprep.subr.mxu0 %v577
        %801 = vmatpush1.msra.mxu0 %v576
        %802 = vmatprep.subr.mxu0 %v579
        %803 = vmatpush1.msra.mxu0 %v578
        %804 = vmatprep.subr.mxu0 %v581
        %805 = vmatpush1.msra.mxu0 %v580
        %806 = vmatprep.subr.mxu0 %v583
        %807 = vmatpush1.msra.mxu0 %v582
        %808 = vmatprep.subr.mxu0 %v585
        %809 = vmatpush1.msra.mxu0 %v584
        %810 = vmatprep.subr.mxu0 %v587
        %811 = vmatpush1.msra.mxu0 %v586
        %812 = vmatprep.subr.mxu0 %v589
        %813 = vmatpush1.msra.mxu0 %v588
        %814 = vmatprep.subr.mxu0 %v591
        %815 = vmatpush1.msra.mxu0 %v590
        %816 = vmatprep.subr.mxu0 %v593
        %817 = vmatpush1.msra.mxu0 %v592
        %818 = vmatprep.subr.mxu0 %v595
        %819 = vmatpush1.msra.mxu0 %v594
        %820 = vmatprep.subr.mxu0 %v597
        %821 = vmatpush1.msra.mxu0 %v596
        %822 = vmatprep.subr.mxu0 %v599
        %823 = vmatpush1.msra.mxu0 %v598
        %824 = vmatprep.subr.mxu0 %v601
        %825 = vmatpush1.msra.mxu0 %v600
        %826 = vmatprep.subr.mxu0 %v603
        %827 = vmatpush1.msra.mxu0 %v602
        %828 = vmatprep.subr.mxu0 %v605
        %829 = vmatpush1.msra.mxu0 %v604
        %830 = vmatprep.mubr.f32.mxu0 %v529
        %831 = vmatmul.mubr.f32.gmra.mrb[0].mxu0 %v528
        %v832 = vpop.f32.mrb[0].mxu0
        %v833 = vadd.f32 %v738, %v832
        %v834 = vpop.f32.mrb[0].mxu0
        %v835 = vadd.f32 %v740, %v834
        %836 = vmatprep.mubr.f32.mxu0 %v531
        %837 = vmatmul.mubr.f32.gmra.mrb[0].mxu0 %v530
        %v838 = vpop.f32.mrb[0].mxu0
        %v839 = vadd.f32 %v744, %v838
        %v840 = vpop.f32.mrb[0].mxu0
        %v841 = vadd.f32 %v746, %v840
        %842 = vmatprep.mubr.f32.mxu0 %v533
        %843 = vmatmul.mubr.f32.gmra.mrb[0].mxu0 %v532
        %v844 = vpop.f32.mrb[0].mxu0
        %v845 = vadd.f32 %v750, %v844
        %v846 = vpop.f32.mrb[0].mxu0
        %v847 = vadd.f32 %v752, %v846
        %848 = vmatprep.mubr.f32.mxu0 %v535
        %849 = vmatmul.mubr.f32.gmra.mrb[0].mxu0 %v534
        %v850 = vpop.f32.mrb[0].mxu0
        %v851 = vadd.f32 %v756, %v850
        %v852 = vpop.f32.mrb[0].mxu0
        %v853 = vadd.f32 %v758, %v852
        %854 = vmatprep.mubr.f32.mxu0 %v537
        %855 = vmatmul.mubr.f32.gmra.mrb[0].mxu0 %v536
        %v856 = vpop.f32.mrb[0].mxu0
        %v857 = vadd.f32 %v762, %v856
        %v858 = vpop.f32.mrb[0].mxu0
        %v859 = vadd.f32 %v764, %v858
        %860 = vdwg.mxu0
        %s861 = scalar_lea.vmem %s3, 1024
        %v862 = vld [vmem:[%s861] sm:$0xff]
        %v863 = vld [vmem:[%s861 + $0x8] sm:$0xff]
        %v864 = vld [vmem:[%s861 + $0x10] sm:$0xff]
        %v865 = vld [vmem:[%s861 + $0x18] sm:$0xff]
        %v866 = vld [vmem:[%s861 + $0x20] sm:$0xff]
        %v867 = vld [vmem:[%s861 + $0x28] sm:$0xff]
        %v868 = vld [vmem:[%s861 + $0x30] sm:$0xff]
        %v869 = vld [vmem:[%s861 + $0x38] sm:$0xff]
        %v870 = vld [vmem:[%s861 + $0x40] sm:$0xff]
        %v871 = vld [vmem:[%s861 + $0x48] sm:$0xff]
        %v872 = vld [vmem:[%s861 + $0x50] sm:$0xff]
        %v873 = vld [vmem:[%s861 + $0x58] sm:$0xff]
        %v874 = vld [vmem:[%s861 + $0x60] sm:$0xff]
        %v875 = vld [vmem:[%s861 + $0x68] sm:$0xff]
        %v876 = vld [vmem:[%s861 + $0x70] sm:$0xff]
        %v877 = vld [vmem:[%s861 + $0x78] sm:$0xff]
        %v878 = vld [vmem:[%s861 + $0x80] sm:$0xff]
        %v879 = vld [vmem:[%s861 + $0x88] sm:$0xff]
        %v880 = vld [vmem:[%s861 + $0x90] sm:$0xff]
        %v881 = vld [vmem:[%s861 + $0x98] sm:$0xff]
        %v882 = vld [vmem:[%s861 + $0xa0] sm:$0xff]
        %v883 = vld [vmem:[%s861 + $0xa8] sm:$0xff]
        %v884 = vld [vmem:[%s861 + $0xb0] sm:$0xff]
        %v885 = vld [vmem:[%s861 + $0xb8] sm:$0xff]
        %v886 = vld [vmem:[%s861 + $0xc0] sm:$0xff]
        %v887 = vld [vmem:[%s861 + $0xc8] sm:$0xff]
        %v888 = vld [vmem:[%s861 + $0xd0] sm:$0xff]
        %v889 = vld [vmem:[%s861 + $0xd8] sm:$0xff]
        %v890 = vld [vmem:[%s861 + $0xe0] sm:$0xff]
        %v891 = vld [vmem:[%s861 + $0xe8] sm:$0xff]
        %v892 = vld [vmem:[%s861 + $0xf0] sm:$0xff]
        %v893 = vld [vmem:[%s861 + $0xf8] sm:$0xff]
        %v894 = vld [vmem:[%s861 + $0x100] sm:$0xff]
        %v895 = vld [vmem:[%s861 + $0x108] sm:$0xff]
        %v896 = vld [vmem:[%s861 + $0x110] sm:$0xff]
        %v897 = vld [vmem:[%s861 + $0x118] sm:$0xff]
        %v898 = vld [vmem:[%s861 + $0x120] sm:$0xff]
        %v899 = vld [vmem:[%s861 + $0x128] sm:$0xff]
        %v900 = vld [vmem:[%s861 + $0x130] sm:$0xff]
        %v901 = vld [vmem:[%s861 + $0x138] sm:$0xff]
        %v902 = vld [vmem:[%s861 + $0x140] sm:$0xff]
        %v903 = vld [vmem:[%s861 + $0x148] sm:$0xff]
        %v904 = vld [vmem:[%s861 + $0x150] sm:$0xff]
        %v905 = vld [vmem:[%s861 + $0x158] sm:$0xff]
        %v906 = vld [vmem:[%s861 + $0x160] sm:$0xff]
        %v907 = vld [vmem:[%s861 + $0x168] sm:$0xff]
        %v908 = vld [vmem:[%s861 + $0x170] sm:$0xff]
        %v909 = vld [vmem:[%s861 + $0x178] sm:$0xff]
        %v910 = vld [vmem:[%s861 + $0x180] sm:$0xff]
        %v911 = vld [vmem:[%s861 + $0x188] sm:$0xff]
        %v912 = vld [vmem:[%s861 + $0x190] sm:$0xff]
        %v913 = vld [vmem:[%s861 + $0x198] sm:$0xff]
        %v914 = vld [vmem:[%s861 + $0x1a0] sm:$0xff]
        %v915 = vld [vmem:[%s861 + $0x1a8] sm:$0xff]
        %v916 = vld [vmem:[%s861 + $0x1b0] sm:$0xff]
        %v917 = vld [vmem:[%s861 + $0x1b8] sm:$0xff]
        %v918 = vld [vmem:[%s861 + $0x1c0] sm:$0xff]
        %v919 = vld [vmem:[%s861 + $0x1c8] sm:$0xff]
        %v920 = vld [vmem:[%s861 + $0x1d0] sm:$0xff]
        %v921 = vld [vmem:[%s861 + $0x1d8] sm:$0xff]
        %v922 = vld [vmem:[%s861 + $0x1e0] sm:$0xff]
        %v923 = vld [vmem:[%s861 + $0x1e8] sm:$0xff]
        %v924 = vld [vmem:[%s861 + $0x1f0] sm:$0xff]
        %v925 = vld [vmem:[%s861 + $0x1f8] sm:$0xff]
        %926 = vmatprep.subr.mxu0 %v863
        %927 = vmatpush1.msra.mxu0 %v862
        %928 = vmatprep.subr.mxu0 %v865
        %929 = vmatpush1.msra.mxu0 %v864
        %930 = vmatprep.subr.mxu0 %v867
        %931 = vmatpush1.msra.mxu0 %v866
        %932 = vmatprep.subr.mxu0 %v869
        %933 = vmatpush1.msra.mxu0 %v868
        %934 = vmatprep.subr.mxu0 %v871
        %935 = vmatpush1.msra.mxu0 %v870
        %936 = vmatprep.subr.mxu0 %v873
        %937 = vmatpush1.msra.mxu0 %v872
        %938 = vmatprep.subr.mxu0 %v875
        %939 = vmatpush1.msra.mxu0 %v874
        %940 = vmatprep.subr.mxu0 %v877
        %941 = vmatpush1.msra.mxu0 %v876
        %942 = vmatprep.subr.mxu0 %v879
        %943 = vmatpush1.msra.mxu0 %v878
        %944 = vmatprep.subr.mxu0 %v881
        %945 = vmatpush1.msra.mxu0 %v880
        %946 = vmatprep.subr.mxu0 %v883
        %947 = vmatpush1.msra.mxu0 %v882
        %948 = vmatprep.subr.mxu0 %v885
        %949 = vmatpush1.msra.mxu0 %v884
        %950 = vmatprep.subr.mxu0 %v887
        %951 = vmatpush1.msra.mxu0 %v886
        %952 = vmatprep.subr.mxu0 %v889
        %953 = vmatpush1.msra.mxu0 %v888
        %954 = vmatprep.subr.mxu0 %v891
        %955 = vmatpush1.msra.mxu0 %v890
        %956 = vmatprep.subr.mxu0 %v893
        %957 = vmatpush1.msra.mxu0 %v892
        %958 = vmatprep.subr.mxu0 %v895
        %959 = vmatpush1.msra.mxu0 %v894
        %960 = vmatprep.subr.mxu0 %v897
        %961 = vmatpush1.msra.mxu0 %v896
        %962 = vmatprep.subr.mxu0 %v899
        %963 = vmatpush1.msra.mxu0 %v898
        %964 = vmatprep.subr.mxu0 %v901
        %965 = vmatpush1.msra.mxu0 %v900
        %966 = vmatprep.subr.mxu0 %v903
        %967 = vmatpush1.msra.mxu0 %v902
        %968 = vmatprep.subr.mxu0 %v905
        %969 = vmatpush1.msra.mxu0 %v904
        %970 = vmatprep.subr.mxu0 %v907
        %971 = vmatpush1.msra.mxu0 %v906
        %972 = vmatprep.subr.mxu0 %v909
        %973 = vmatpush1.msra.mxu0 %v908
        %974 = vmatprep.subr.mxu0 %v911
        %975 = vmatpush1.msra.mxu0 %v910
        %976 = vmatprep.subr.mxu0 %v913
        %977 = vmatpush1.msra.mxu0 %v912
        %978 = vmatprep.subr.mxu0 %v915
        %979 = vmatpush1.msra.mxu0 %v914
        %980 = vmatprep.subr.mxu0 %v917
        %981 = vmatpush1.msra.mxu0 %v916
        %982 = vmatprep.subr.mxu0 %v919
        %983 = vmatpush1.msra.mxu0 %v918
        %984 = vmatprep.subr.mxu0 %v921
        %985 = vmatpush1.msra.mxu0 %v920
        %986 = vmatprep.subr.mxu0 %v923
        %987 = vmatpush1.msra.mxu0 %v922
        %988 = vmatprep.subr.mxu0 %v925
        %989 = vmatpush1.msra.mxu0 %v924
        %990 = vmatprep.mubr.f32.mxu0 %v533
        %991 = vmatmul.mubr.f32.gmra.mrb[0].mxu0 %v532
        %v992 = vpop.f32.mrb[0].mxu0
        %v993 = vadd.f32 0.0, %v992
        %v994 = vpop.f32.mrb[0].mxu0
        %v995 = vadd.f32 0.0, %v994
        %996 = vmatprep.mubr.f32.mxu0 %v535
        %997 = vmatmul.mubr.f32.gmra.mrb[0].mxu0 %v534
        %v998 = vpop.f32.mrb[0].mxu0
        %v999 = vadd.f32 0.0, %v998
        %v1000 = vpop.f32.mrb[0].mxu0
        %v1001 = vadd.f32 0.0, %v1000
        %1002 = vmatprep.mubr.f32.mxu0 %v537
        %1003 = vmatmul.mubr.f32.gmra.mrb[0].mxu0 %v536
        %v1004 = vpop.f32.mrb[0].mxu0
        %v1005 = vadd.f32 0.0, %v1004
        %v1006 = vpop.f32.mrb[0].mxu0
        %v1007 = vadd.f32 0.0, %v1006
        %1008 = vmatprep.mubr.f32.mxu0 %v539
        %1009 = vmatmul.mubr.f32.gmra.mrb[0].mxu0 %v538
        %v1010 = vpop.f32.mrb[0].mxu0
        %v1011 = vadd.f32 0.0, %v1010
        %v1012 = vpop.f32.mrb[0].mxu0
        %v1013 = vadd.f32 0.0, %v1012
        %1014 = vmatprep.mubr.f32.mxu0 %v541
        %1015 = vmatmul.mubr.f32.gmra.mrb[0].mxu0 %v540
        %v1016 = vpop.f32.mrb[0].mxu0
        %v1017 = vadd.f32 0.0, %v1016
        %v1018 = vpop.f32.mrb[0].mxu0
        %v1019 = vadd.f32 0.0, %v1018
        %1020 = vdwg.mxu0
        %v1021 = vadd.f32 %v833, %v993
        %v1022 = vadd.f32 %v835, %v995
        %v1023 = vadd.f32 %v839, %v999
        %v1024 = vadd.f32 %v841, %v1001
        %v1025 = vadd.f32 %v845, %v1005
        %v1026 = vadd.f32 %v847, %v1007
        %v1027 = vadd.f32 %v851, %v1011
        %v1028 = vadd.f32 %v853, %v1013
        %v1029 = vadd.f32 %v857, %v1017
        %v1030 = vadd.f32 %v859, %v1019
        %v1031 = vld [vmem:[%s4] sm:$0x3]
        %v1033 = vlaneseq
        %v1034 = vshrl.u32 %v1033, 7
        %v1035 = vsub.s32 0, %v1034
        %v1036 = vrot.slane %v1031, %v1035
        %v1037 = vlaneseq
        %v1038 = vshrl.u32 %v1037, 7
        %v1039 = vsub.s32 1, %v1038
        %v1040 = vrot.slane %v1031, %v1039
        %v1043 = vadd.f32 %v1021, %v1036
        %v1044 = vadd.f32 %v1022, %v1040
        %v1045 = vadd.f32 %v1023, %v1036
        %v1046 = vadd.f32 %v1024, %v1040
        %v1047 = vadd.f32 %v1025, %v1036
        %v1048 = vadd.f32 %v1026, %v1040
        %v1049 = vadd.f32 %v1027, %v1036
        %v1050 = vadd.f32 %v1028, %v1040
        %v1051 = vadd.f32 %v1029, %v1036
        %v1052 = vadd.f32 %v1030, %v1040
        %v1053 = vmax.f32 %v1043, 0.0
        %v1054 = vmax.f32 %v1044, 0.0
        %v1055 = vmax.f32 %v1045, 0.0
        %v1056 = vmax.f32 %v1046, 0.0
        %v1057 = vmax.f32 %v1047, 0.0
        %v1058 = vmax.f32 %v1048, 0.0
        %v1059 = vmax.f32 %v1049, 0.0
        %v1060 = vmax.f32 %v1050, 0.0
        %v1061 = vmax.f32 %v1051, 0.0
        %v1062 = vmax.f32 %v1052, 0.0
        %v1063 = vld [vmem:[%s5] sm:$0xff]
        %v1064 = vld [vmem:[%s5 + $0x8] sm:$0xff]
        %v1065 = vld [vmem:[%s5 + $0x10] sm:$0xff]
        %v1066 = vld [vmem:[%s5 + $0x18] sm:$0xff]
        %v1067 = vld [vmem:[%s5 + $0x20] sm:$0xff]
        %v1068 = vld [vmem:[%s5 + $0x28] sm:$0xff]
        %v1069 = vld [vmem:[%s5 + $0x30] sm:$0xff]
        %v1070 = vld [vmem:[%s5 + $0x38] sm:$0xff]
        %v1071 = vld [vmem:[%s5 + $0x40] sm:$0xff]
        %v1072 = vld [vmem:[%s5 + $0x48] sm:$0xff]
        %v1073 = vld [vmem:[%s5 + $0x50] sm:$0xff]
        %v1074 = vld [vmem:[%s5 + $0x58] sm:$0xff]
        %v1075 = vld [vmem:[%s5 + $0x60] sm:$0xff]
        %v1076 = vld [vmem:[%s5 + $0x68] sm:$0xff]
        %v1077 = vld [vmem:[%s5 + $0x70] sm:$0xff]
        %v1078 = vld [vmem:[%s5 + $0x78] sm:$0xff]
        %v1079 = vld [vmem:[%s5 + $0x80] sm:$0xff]
        %v1080 = vld [vmem:[%s5 + $0x88] sm:$0xff]
        %v1081 = vld [vmem:[%s5 + $0x90] sm:$0xff]
        %v1082 = vld [vmem:[%s5 + $0x98] sm:$0xff]
        %v1083 = vld [vmem:[%s5 + $0xa0] sm:$0xff]
        %v1084 = vld [vmem:[%s5 + $0xa8] sm:$0xff]
        %v1085 = vld [vmem:[%s5 + $0xb0] sm:$0xff]
        %v1086 = vld [vmem:[%s5 + $0xb8] sm:$0xff]
        %v1087 = vld [vmem:[%s5 + $0xc0] sm:$0xff]
        %v1088 = vld [vmem:[%s5 + $0xc8] sm:$0xff]
        %v1089 = vld [vmem:[%s5 + $0xd0] sm:$0xff]
        %v1090 = vld [vmem:[%s5 + $0xd8] sm:$0xff]
        %v1091 = vld [vmem:[%s5 + $0xe0] sm:$0xff]
        %v1092 = vld [vmem:[%s5 + $0xe8] sm:$0xff]
        %v1093 = vld [vmem:[%s5 + $0xf0] sm:$0xff]
        %v1094 = vld [vmem:[%s5 + $0xf8] sm:$0xff]
        %s1095 = scalar_lea.vmem %s5, 256
        %v1096 = vld [vmem:[%s1095] sm:$0xff]
        %v1097 = vld [vmem:[%s1095 + $0x8] sm:$0xff]
        %v1098 = vld [vmem:[%s1095 + $0x10] sm:$0xff]
        %v1099 = vld [vmem:[%s1095 + $0x18] sm:$0xff]
        %v1100 = vld [vmem:[%s1095 + $0x20] sm:$0xff]
        %v1101 = vld [vmem:[%s1095 + $0x28] sm:$0xff]
        %v1102 = vld [vmem:[%s1095 + $0x30] sm:$0xff]
        %v1103 = vld [vmem:[%s1095 + $0x38] sm:$0xff]
        %v1104 = vld [vmem:[%s1095 + $0x40] sm:$0xff]
        %v1105 = vld [vmem:[%s1095 + $0x48] sm:$0xff]
        %v1106 = vld [vmem:[%s1095 + $0x50] sm:$0xff]
        %v1107 = vld [vmem:[%s1095 + $0x58] sm:$0xff]
        %v1108 = vld [vmem:[%s1095 + $0x60] sm:$0xff]
        %v1109 = vld [vmem:[%s1095 + $0x68] sm:$0xff]
        %v1110 = vld [vmem:[%s1095 + $0x70] sm:$0xff]
        %v1111 = vld [vmem:[%s1095 + $0x78] sm:$0xff]
        %v1112 = vld [vmem:[%s1095 + $0x80] sm:$0xff]
        %v1113 = vld [vmem:[%s1095 + $0x88] sm:$0xff]
        %v1114 = vld [vmem:[%s1095 + $0x90] sm:$0xff]
        %v1115 = vld [vmem:[%s1095 + $0x98] sm:$0xff]
        %v1116 = vld [vmem:[%s1095 + $0xa0] sm:$0xff]
        %v1117 = vld [vmem:[%s1095 + $0xa8] sm:$0xff]
        %v1118 = vld [vmem:[%s1095 + $0xb0] sm:$0xff]
        %v1119 = vld [vmem:[%s1095 + $0xb8] sm:$0xff]
        %v1120 = vld [vmem:[%s1095 + $0xc0] sm:$0xff]
        %v1121 = vld [vmem:[%s1095 + $0xc8] sm:$0xff]
        %v1122 = vld [vmem:[%s1095 + $0xd0] sm:$0xff]
        %v1123 = vld [vmem:[%s1095 + $0xd8] sm:$0xff]
        %v1124 = vld [vmem:[%s1095 + $0xe0] sm:$0xff]
        %v1125 = vld [vmem:[%s1095 + $0xe8] sm:$0xff]
        %v1126 = vld [vmem:[%s1095 + $0xf0] sm:$0xff]
        %v1127 = vld [vmem:[%s1095 + $0xf8] sm:$0xff]
        %1128 = vmatprep.subr.mxu0 0.0
        %1129 = vmatpush1.msra.mxu0 %v1096
        %1130 = vmatprep.subr.mxu0 0.0
        %1131 = vmatpush1.msra.mxu0 %v1097
        %1132 = vmatprep.subr.mxu0 0.0
        %1133 = vmatpush1.msra.mxu0 %v1098
        %1134 = vmatprep.subr.mxu0 0.0
        %1135 = vmatpush1.msra.mxu0 %v1099
        %1136 = vmatprep.subr.mxu0 0.0
        %1137 = vmatpush1.msra.mxu0 %v1100
        %1138 = vmatprep.subr.mxu0 0.0
        %1139 = vmatpush1.msra.mxu0 %v1101
        %1140 = vmatprep.subr.mxu0 0.0
        %1141 = vmatpush1.msra.mxu0 %v1102
        %1142 = vmatprep.subr.mxu0 0.0
        %1143 = vmatpush1.msra.mxu0 %v1103
        %1144 = vmatprep.subr.mxu0 0.0
        %1145 = vmatpush1.msra.mxu0 %v1104
        %1146 = vmatprep.subr.mxu0 0.0
        %1147 = vmatpush1.msra.mxu0 %v1105
        %1148 = vmatprep.subr.mxu0 0.0
        %1149 = vmatpush1.msra.mxu0 %v1106
        %1150 = vmatprep.subr.mxu0 0.0
        %1151 = vmatpush1.msra.mxu0 %v1107
        %1152 = vmatprep.subr.mxu0 0.0
        %1153 = vmatpush1.msra.mxu0 %v1108
        %1154 = vmatprep.subr.mxu0 0.0
        %1155 = vmatpush1.msra.mxu0 %v1109
        %1156 = vmatprep.subr.mxu0 0.0
        %1157 = vmatpush1.msra.mxu0 %v1110
        %1158 = vmatprep.subr.mxu0 0.0
        %1159 = vmatpush1.msra.mxu0 %v1111
        %1160 = vmatprep.subr.mxu0 0.0
        %1161 = vmatpush1.msra.mxu0 %v1112
        %1162 = vmatprep.subr.mxu0 0.0
        %1163 = vmatpush1.msra.mxu0 %v1113
        %1164 = vmatprep.subr.mxu0 0.0
        %1165 = vmatpush1.msra.mxu0 %v1114
        %1166 = vmatprep.subr.mxu0 0.0
        %1167 = vmatpush1.msra.mxu0 %v1115
        %1168 = vmatprep.subr.mxu0 0.0
        %1169 = vmatpush1.msra.mxu0 %v1116
        %1170 = vmatprep.subr.mxu0 0.0
        %1171 = vmatpush1.msra.mxu0 %v1117
        %1172 = vmatprep.subr.mxu0 0.0
        %1173 = vmatpush1.msra.mxu0 %v1118
        %1174 = vmatprep.subr.mxu0 0.0
        %1175 = vmatpush1.msra.mxu0 %v1119
        %1176 = vmatprep.subr.mxu0 0.0
        %1177 = vmatpush1.msra.mxu0 %v1120
        %1178 = vmatprep.subr.mxu0 0.0
        %1179 = vmatpush1.msra.mxu0 %v1121
        %1180 = vmatprep.subr.mxu0 0.0
        %1181 = vmatpush1.msra.mxu0 %v1122
        %1182 = vmatprep.subr.mxu0 0.0
        %1183 = vmatpush1.msra.mxu0 %v1123
        %1184 = vmatprep.subr.mxu0 0.0
        %1185 = vmatpush1.msra.mxu0 %v1124
        %1186 = vmatprep.subr.mxu0 0.0
        %1187 = vmatpush1.msra.mxu0 %v1125
        %1188 = vmatprep.subr.mxu0 0.0
        %1189 = vmatpush1.msra.mxu0 %v1126
        %1190 = vmatprep.subr.mxu0 0.0
        %1191 = vmatpush1.msra.mxu0 %v1127
        %1192 = vmatprep.mubr.f32.mxu0 %v1056
        %1193 = vmatmul.mubr.f32.gmra.mrb[0].mxu0 %v1055
        %v1194 = vpop.f32.mrb[0].mxu0
        %v1195 = vadd.f32 0.0, %v1194
        %v1196 = vpop.f32.mrb[0].mxu0
        %1197 = vdwg.mxu0
        %1198 = vmatprep.subr.mxu0 0.0
        %1199 = vmatpush1.msra.mxu0 %v1063
        %1200 = vmatprep.subr.mxu0 0.0
        %1201 = vmatpush1.msra.mxu0 %v1064
        %1202 = vmatprep.subr.mxu0 0.0
        %1203 = vmatpush1.msra.mxu0 %v1065
        %1204 = vmatprep.subr.mxu0 0.0
        %1205 = vmatpush1.msra.mxu0 %v1066
        %1206 = vmatprep.subr.mxu0 0.0
        %1207 = vmatpush1.msra.mxu0 %v1067
        %1208 = vmatprep.subr.mxu0 0.0
        %1209 = vmatpush1.msra.mxu0 %v1068
        %1210 = vmatprep.subr.mxu0 0.0
        %1211 = vmatpush1.msra.mxu0 %v1069
        %1212 = vmatprep.subr.mxu0 0.0
        %1213 = vmatpush1.msra.mxu0 %v1070
        %1214 = vmatprep.subr.mxu0 0.0
        %1215 = vmatpush1.msra.mxu0 %v1071
        %1216 = vmatprep.subr.mxu0 0.0
        %1217 = vmatpush1.msra.mxu0 %v1072
        %1218 = vmatprep.subr.mxu0 0.0
        %1219 = vmatpush1.msra.mxu0 %v1073
        %1220 = vmatprep.subr.mxu0 0.0
        %1221 = vmatpush1.msra.mxu0 %v1074
        %1222 = vmatprep.subr.mxu0 0.0
        %1223 = vmatpush1.msra.mxu0 %v1075
        %1224 = vmatprep.subr.mxu0 0.0
        %1225 = vmatpush1.msra.mxu0 %v1076
        %1226 = vmatprep.subr.mxu0 0.0
        %1227 = vmatpush1.msra.mxu0 %v1077
        %1228 = vmatprep.subr.mxu0 0.0
        %1229 = vmatpush1.msra.mxu0 %v1078
        %1230 = vmatprep.subr.mxu0 0.0
        %1231 = vmatpush1.msra.mxu0 %v1079
        %1232 = vmatprep.subr.mxu0 0.0
        %1233 = vmatpush1.msra.mxu0 %v1080
        %1234 = vmatprep.subr.mxu0 0.0
        %1235 = vmatpush1.msra.mxu0 %v1081
        %1236 = vmatprep.subr.mxu0 0.0
        %1237 = vmatpush1.msra.mxu0 %v1082
        %1238 = vmatprep.subr.mxu0 0.0
        %1239 = vmatpush1.msra.mxu0 %v1083
        %1240 = vmatprep.subr.mxu0 0.0
        %1241 = vmatpush1.msra.mxu0 %v1084
        %1242 = vmatprep.subr.mxu0 0.0
        %1243 = vmatpush1.msra.mxu0 %v1085
        %1244 = vmatprep.subr.mxu0 0.0
        %1245 = vmatpush1.msra.mxu0 %v1086
        %1246 = vmatprep.subr.mxu0 0.0
        %1247 = vmatpush1.msra.mxu0 %v1087
        %1248 = vmatprep.subr.mxu0 0.0
        %1249 = vmatpush1.msra.mxu0 %v1088
        %1250 = vmatprep.subr.mxu0 0.0
        %1251 = vmatpush1.msra.mxu0 %v1089
        %1252 = vmatprep.subr.mxu0 0.0
        %1253 = vmatpush1.msra.mxu0 %v1090
        %1254 = vmatprep.subr.mxu0 0.0
        %1255 = vmatpush1.msra.mxu0 %v1091
        %1256 = vmatprep.subr.mxu0 0.0
        %1257 = vmatpush1.msra.mxu0 %v1092
        %1258 = vmatprep.subr.mxu0 0.0
        %1259 = vmatpush1.msra.mxu0 %v1093
        %1260 = vmatprep.subr.mxu0 0.0
        %1261 = vmatpush1.msra.mxu0 %v1094
        %1262 = vmatprep.mubr.f32.mxu0 %v1054
        %1263 = vmatmul.mubr.f32.gmra.mrb[0].mxu0 %v1053
        %v1264 = vpop.f32.mrb[0].mxu0
        %v1265 = vadd.f32 %v1195, %v1264
        %v1266 = vpop.f32.mrb[0].mxu0
        %1267 = vdwg.mxu0
        %s1268 = scalar_lea.vmem %s5, 512
        %v1269 = vld [vmem:[%s1268] sm:$0xff]
        %v1270 = vld [vmem:[%s1268 + $0x8] sm:$0xff]
        %v1271 = vld [vmem:[%s1268 + $0x10] sm:$0xff]
        %v1272 = vld [vmem:[%s1268 + $0x18] sm:$0xff]
        %v1273 = vld [vmem:[%s1268 + $0x20] sm:$0xff]
        %v1274 = vld [vmem:[%s1268 + $0x28] sm:$0xff]
        %v1275 = vld [vmem:[%s1268 + $0x30] sm:$0xff]
        %v1276 = vld [vmem:[%s1268 + $0x38] sm:$0xff]
        %v1277 = vld [vmem:[%s1268 + $0x40] sm:$0xff]
        %v1278 = vld [vmem:[%s1268 + $0x48] sm:$0xff]
        %v1279 = vld [vmem:[%s1268 + $0x50] sm:$0xff]
        %v1280 = vld [vmem:[%s1268 + $0x58] sm:$0xff]
        %v1281 = vld [vmem:[%s1268 + $0x60] sm:$0xff]
        %v1282 = vld [vmem:[%s1268 + $0x68] sm:$0xff]
        %v1283 = vld [vmem:[%s1268 + $0x70] sm:$0xff]
        %v1284 = vld [vmem:[%s1268 + $0x78] sm:$0xff]
        %v1285 = vld [vmem:[%s1268 + $0x80] sm:$0xff]
        %v1286 = vld [vmem:[%s1268 + $0x88] sm:$0xff]
        %v1287 = vld [vmem:[%s1268 + $0x90] sm:$0xff]
        %v1288 = vld [vmem:[%s1268 + $0x98] sm:$0xff]
        %v1289 = vld [vmem:[%s1268 + $0xa0] sm:$0xff]
        %v1290 = vld [vmem:[%s1268 + $0xa8] sm:$0xff]
        %v1291 = vld [vmem:[%s1268 + $0xb0] sm:$0xff]
        %v1292 = vld [vmem:[%s1268 + $0xb8] sm:$0xff]
        %v1293 = vld [vmem:[%s1268 + $0xc0] sm:$0xff]
        %v1294 = vld [vmem:[%s1268 + $0xc8] sm:$0xff]
        %v1295 = vld [vmem:[%s1268 + $0xd0] sm:$0xff]
        %v1296 = vld [vmem:[%s1268 + $0xd8] sm:$0xff]
        %v1297 = vld [vmem:[%s1268 + $0xe0] sm:$0xff]
        %v1298 = vld [vmem:[%s1268 + $0xe8] sm:$0xff]
        %v1299 = vld [vmem:[%s1268 + $0xf0] sm:$0xff]
        %v1300 = vld [vmem:[%s1268 + $0xf8] sm:$0xff]
        %1301 = vmatprep.subr.mxu0 0.0
        %1302 = vmatpush1.msra.mxu0 %v1269
        %1303 = vmatprep.subr.mxu0 0.0
        %1304 = vmatpush1.msra.mxu0 %v1270
        %1305 = vmatprep.subr.mxu0 0.0
        %1306 = vmatpush1.msra.mxu0 %v1271
        %1307 = vmatprep.subr.mxu0 0.0
        %1308 = vmatpush1.msra.mxu0 %v1272
        %1309 = vmatprep.subr.mxu0 0.0
        %1310 = vmatpush1.msra.mxu0 %v1273
        %1311 = vmatprep.subr.mxu0 0.0
        %1312 = vmatpush1.msra.mxu0 %v1274
        %1313 = vmatprep.subr.mxu0 0.0
        %1314 = vmatpush1.msra.mxu0 %v1275
        %1315 = vmatprep.subr.mxu0 0.0
        %1316 = vmatpush1.msra.mxu0 %v1276
        %1317 = vmatprep.subr.mxu0 0.0
        %1318 = vmatpush1.msra.mxu0 %v1277
        %1319 = vmatprep.subr.mxu0 0.0
        %1320 = vmatpush1.msra.mxu0 %v1278
        %1321 = vmatprep.subr.mxu0 0.0
        %1322 = vmatpush1.msra.mxu0 %v1279
        %1323 = vmatprep.subr.mxu0 0.0
        %1324 = vmatpush1.msra.mxu0 %v1280
        %1325 = vmatprep.subr.mxu0 0.0
        %1326 = vmatpush1.msra.mxu0 %v1281
        %1327 = vmatprep.subr.mxu0 0.0
        %1328 = vmatpush1.msra.mxu0 %v1282
        %1329 = vmatprep.subr.mxu0 0.0
        %1330 = vmatpush1.msra.mxu0 %v1283
        %1331 = vmatprep.subr.mxu0 0.0
        %1332 = vmatpush1.msra.mxu0 %v1284
        %1333 = vmatprep.subr.mxu0 0.0
        %1334 = vmatpush1.msra.mxu0 %v1285
        %1335 = vmatprep.subr.mxu0 0.0
        %1336 = vmatpush1.msra.mxu0 %v1286
        %1337 = vmatprep.subr.mxu0 0.0
        %1338 = vmatpush1.msra.mxu0 %v1287
        %1339 = vmatprep.subr.mxu0 0.0
        %1340 = vmatpush1.msra.mxu0 %v1288
        %1341 = vmatprep.subr.mxu0 0.0
        %1342 = vmatpush1.msra.mxu0 %v1289
        %1343 = vmatprep.subr.mxu0 0.0
        %1344 = vmatpush1.msra.mxu0 %v1290
        %1345 = vmatprep.subr.mxu0 0.0
        %1346 = vmatpush1.msra.mxu0 %v1291
        %1347 = vmatprep.subr.mxu0 0.0
        %1348 = vmatpush1.msra.mxu0 %v1292
        %1349 = vmatprep.subr.mxu0 0.0
        %1350 = vmatpush1.msra.mxu0 %v1293
        %1351 = vmatprep.subr.mxu0 0.0
        %1352 = vmatpush1.msra.mxu0 %v1294
        %1353 = vmatprep.subr.mxu0 0.0
        %1354 = vmatpush1.msra.mxu0 %v1295
        %1355 = vmatprep.subr.mxu0 0.0
        %1356 = vmatpush1.msra.mxu0 %v1296
        %1357 = vmatprep.subr.mxu0 0.0
        %1358 = vmatpush1.msra.mxu0 %v1297
        %1359 = vmatprep.subr.mxu0 0.0
        %1360 = vmatpush1.msra.mxu0 %v1298
        %1361 = vmatprep.subr.mxu0 0.0
        %1362 = vmatpush1.msra.mxu0 %v1299
        %1363 = vmatprep.subr.mxu0 0.0
        %1364 = vmatpush1.msra.mxu0 %v1300
        %1365 = vmatprep.mubr.f32.mxu0 %v1058
        %1366 = vmatmul.mubr.f32.gmra.mrb[0].mxu0 %v1057
        %v1367 = vpop.f32.mrb[0].mxu0
        %v1368 = vadd.f32 0.0, %v1367
        %v1369 = vpop.f32.mrb[0].mxu0
        %1370 = vdwg.mxu0
        %v1371 = vadd.f32 %v1265, %v1368
        %s1372 = scalar_lea.vmem %s5, 768
        %v1373 = vld [vmem:[%s1372] sm:$0xff]
        %v1374 = vld [vmem:[%s1372 + $0x8] sm:$0xff]
        %v1375 = vld [vmem:[%s1372 + $0x10] sm:$0xff]
        %v1376 = vld [vmem:[%s1372 + $0x18] sm:$0xff]
        %v1377 = vld [vmem:[%s1372 + $0x20] sm:$0xff]
        %v1378 = vld [vmem:[%s1372 + $0x28] sm:$0xff]
        %v1379 = vld [vmem:[%s1372 + $0x30] sm:$0xff]
        %v1380 = vld [vmem:[%s1372 + $0x38] sm:$0xff]
        %v1381 = vld [vmem:[%s1372 + $0x40] sm:$0xff]
        %v1382 = vld [vmem:[%s1372 + $0x48] sm:$0xff]
        %v1383 = vld [vmem:[%s1372 + $0x50] sm:$0xff]
        %v1384 = vld [vmem:[%s1372 + $0x58] sm:$0xff]
        %v1385 = vld [vmem:[%s1372 + $0x60] sm:$0xff]
        %v1386 = vld [vmem:[%s1372 + $0x68] sm:$0xff]
        %v1387 = vld [vmem:[%s1372 + $0x70] sm:$0xff]
        %v1388 = vld [vmem:[%s1372 + $0x78] sm:$0xff]
        %v1389 = vld [vmem:[%s1372 + $0x80] sm:$0xff]
        %v1390 = vld [vmem:[%s1372 + $0x88] sm:$0xff]
        %v1391 = vld [vmem:[%s1372 + $0x90] sm:$0xff]
        %v1392 = vld [vmem:[%s1372 + $0x98] sm:$0xff]
        %v1393 = vld [vmem:[%s1372 + $0xa0] sm:$0xff]
        %v1394 = vld [vmem:[%s1372 + $0xa8] sm:$0xff]
        %v1395 = vld [vmem:[%s1372 + $0xb0] sm:$0xff]
        %v1396 = vld [vmem:[%s1372 + $0xb8] sm:$0xff]
        %v1397 = vld [vmem:[%s1372 + $0xc0] sm:$0xff]
        %v1398 = vld [vmem:[%s1372 + $0xc8] sm:$0xff]
        %v1399 = vld [vmem:[%s1372 + $0xd0] sm:$0xff]
        %v1400 = vld [vmem:[%s1372 + $0xd8] sm:$0xff]
        %v1401 = vld [vmem:[%s1372 + $0xe0] sm:$0xff]
        %v1402 = vld [vmem:[%s1372 + $0xe8] sm:$0xff]
        %v1403 = vld [vmem:[%s1372 + $0xf0] sm:$0xff]
        %v1404 = vld [vmem:[%s1372 + $0xf8] sm:$0xff]
        %1405 = vmatprep.subr.mxu0 0.0
        %1406 = vmatpush1.msra.mxu0 %v1373
        %1407 = vmatprep.subr.mxu0 0.0
        %1408 = vmatpush1.msra.mxu0 %v1374
        %1409 = vmatprep.subr.mxu0 0.0
        %1410 = vmatpush1.msra.mxu0 %v1375
        %1411 = vmatprep.subr.mxu0 0.0
        %1412 = vmatpush1.msra.mxu0 %v1376
        %1413 = vmatprep.subr.mxu0 0.0
        %1414 = vmatpush1.msra.mxu0 %v1377
        %1415 = vmatprep.subr.mxu0 0.0
        %1416 = vmatpush1.msra.mxu0 %v1378
        %1417 = vmatprep.subr.mxu0 0.0
        %1418 = vmatpush1.msra.mxu0 %v1379
        %1419 = vmatprep.subr.mxu0 0.0
        %1420 = vmatpush1.msra.mxu0 %v1380
        %1421 = vmatprep.subr.mxu0 0.0
        %1422 = vmatpush1.msra.mxu0 %v1381
        %1423 = vmatprep.subr.mxu0 0.0
        %1424 = vmatpush1.msra.mxu0 %v1382
        %1425 = vmatprep.subr.mxu0 0.0
        %1426 = vmatpush1.msra.mxu0 %v1383
        %1427 = vmatprep.subr.mxu0 0.0
        %1428 = vmatpush1.msra.mxu0 %v1384
        %1429 = vmatprep.subr.mxu0 0.0
        %1430 = vmatpush1.msra.mxu0 %v1385
        %1431 = vmatprep.subr.mxu0 0.0
        %1432 = vmatpush1.msra.mxu0 %v1386
        %1433 = vmatprep.subr.mxu0 0.0
        %1434 = vmatpush1.msra.mxu0 %v1387
        %1435 = vmatprep.subr.mxu0 0.0
        %1436 = vmatpush1.msra.mxu0 %v1388
        %1437 = vmatprep.subr.mxu0 0.0
        %1438 = vmatpush1.msra.mxu0 %v1389
        %1439 = vmatprep.subr.mxu0 0.0
        %1440 = vmatpush1.msra.mxu0 %v1390
        %1441 = vmatprep.subr.mxu0 0.0
        %1442 = vmatpush1.msra.mxu0 %v1391
        %1443 = vmatprep.subr.mxu0 0.0
        %1444 = vmatpush1.msra.mxu0 %v1392
        %1445 = vmatprep.subr.mxu0 0.0
        %1446 = vmatpush1.msra.mxu0 %v1393
        %1447 = vmatprep.subr.mxu0 0.0
        %1448 = vmatpush1.msra.mxu0 %v1394
        %1449 = vmatprep.subr.mxu0 0.0
        %1450 = vmatpush1.msra.mxu0 %v1395
        %1451 = vmatprep.subr.mxu0 0.0
        %1452 = vmatpush1.msra.mxu0 %v1396
        %1453 = vmatprep.subr.mxu0 0.0
        %1454 = vmatpush1.msra.mxu0 %v1397
        %1455 = vmatprep.subr.mxu0 0.0
        %1456 = vmatpush1.msra.mxu0 %v1398
        %1457 = vmatprep.subr.mxu0 0.0
        %1458 = vmatpush1.msra.mxu0 %v1399
        %1459 = vmatprep.subr.mxu0 0.0
        %1460 = vmatpush1.msra.mxu0 %v1400
        %1461 = vmatprep.subr.mxu0 0.0
        %1462 = vmatpush1.msra.mxu0 %v1401
        %1463 = vmatprep.subr.mxu0 0.0
        %1464 = vmatpush1.msra.mxu0 %v1402
        %1465 = vmatprep.subr.mxu0 0.0
        %1466 = vmatpush1.msra.mxu0 %v1403
        %1467 = vmatprep.subr.mxu0 0.0
        %1468 = vmatpush1.msra.mxu0 %v1404
        %1469 = vmatprep.mubr.f32.mxu0 %v1060
        %1470 = vmatmul.mubr.f32.gmra.mrb[0].mxu0 %v1059
        %v1471 = vpop.f32.mrb[0].mxu0
        %v1472 = vadd.f32 0.0, %v1471
        %v1473 = vpop.f32.mrb[0].mxu0
        %1474 = vdwg.mxu0
        %v1475 = vadd.f32 %v1371, %v1472
        %s1476 = scalar_lea.vmem %s5, 1024
        %v1477 = vld [vmem:[%s1476] sm:$0xff]
        %v1478 = vld [vmem:[%s1476 + $0x8] sm:$0xff]
        %v1479 = vld [vmem:[%s1476 + $0x10] sm:$0xff]
        %v1480 = vld [vmem:[%s1476 + $0x18] sm:$0xff]
        %v1481 = vld [vmem:[%s1476 + $0x20] sm:$0xff]
        %v1482 = vld [vmem:[%s1476 + $0x28] sm:$0xff]
        %v1483 = vld [vmem:[%s1476 + $0x30] sm:$0xff]
        %v1484 = vld [vmem:[%s1476 + $0x38] sm:$0xff]
        %v1485 = vld [vmem:[%s1476 + $0x40] sm:$0xff]
        %v1486 = vld [vmem:[%s1476 + $0x48] sm:$0xff]
        %v1487 = vld [vmem:[%s1476 + $0x50] sm:$0xff]
        %v1488 = vld [vmem:[%s1476 + $0x58] sm:$0xff]
        %v1489 = vld [vmem:[%s1476 + $0x60] sm:$0xff]
        %v1490 = vld [vmem:[%s1476 + $0x68] sm:$0xff]
        %v1491 = vld [vmem:[%s1476 + $0x70] sm:$0xff]
        %v1492 = vld [vmem:[%s1476 + $0x78] sm:$0xff]
        %v1493 = vld [vmem:[%s1476 + $0x80] sm:$0xff]
        %v1494 = vld [vmem:[%s1476 + $0x88] sm:$0xff]
        %v1495 = vld [vmem:[%s1476 + $0x90] sm:$0xff]
        %v1496 = vld [vmem:[%s1476 + $0x98] sm:$0xff]
        %v1497 = vld [vmem:[%s1476 + $0xa0] sm:$0xff]
        %v1498 = vld [vmem:[%s1476 + $0xa8] sm:$0xff]
        %v1499 = vld [vmem:[%s1476 + $0xb0] sm:$0xff]
        %v1500 = vld [vmem:[%s1476 + $0xb8] sm:$0xff]
        %v1501 = vld [vmem:[%s1476 + $0xc0] sm:$0xff]
        %v1502 = vld [vmem:[%s1476 + $0xc8] sm:$0xff]
        %v1503 = vld [vmem:[%s1476 + $0xd0] sm:$0xff]
        %v1504 = vld [vmem:[%s1476 + $0xd8] sm:$0xff]
        %v1505 = vld [vmem:[%s1476 + $0xe0] sm:$0xff]
        %v1506 = vld [vmem:[%s1476 + $0xe8] sm:$0xff]
        %v1507 = vld [vmem:[%s1476 + $0xf0] sm:$0xff]
        %v1508 = vld [vmem:[%s1476 + $0xf8] sm:$0xff]
        %1509 = vmatprep.subr.mxu0 0.0
        %1510 = vmatpush1.msra.mxu0 %v1477
        %1511 = vmatprep.subr.mxu0 0.0
        %1512 = vmatpush1.msra.mxu0 %v1478
        %1513 = vmatprep.subr.mxu0 0.0
        %1514 = vmatpush1.msra.mxu0 %v1479
        %1515 = vmatprep.subr.mxu0 0.0
        %1516 = vmatpush1.msra.mxu0 %v1480
        %1517 = vmatprep.subr.mxu0 0.0
        %1518 = vmatpush1.msra.mxu0 %v1481
        %1519 = vmatprep.subr.mxu0 0.0
        %1520 = vmatpush1.msra.mxu0 %v1482
        %1521 = vmatprep.subr.mxu0 0.0
        %1522 = vmatpush1.msra.mxu0 %v1483
        %1523 = vmatprep.subr.mxu0 0.0
        %1524 = vmatpush1.msra.mxu0 %v1484
        %1525 = vmatprep.subr.mxu0 0.0
        %1526 = vmatpush1.msra.mxu0 %v1485
        %1527 = vmatprep.subr.mxu0 0.0
        %1528 = vmatpush1.msra.mxu0 %v1486
        %1529 = vmatprep.subr.mxu0 0.0
        %1530 = vmatpush1.msra.mxu0 %v1487
        %1531 = vmatprep.subr.mxu0 0.0
        %1532 = vmatpush1.msra.mxu0 %v1488
        %1533 = vmatprep.subr.mxu0 0.0
        %1534 = vmatpush1.msra.mxu0 %v1489
        %1535 = vmatprep.subr.mxu0 0.0
        %1536 = vmatpush1.msra.mxu0 %v1490
        %1537 = vmatprep.subr.mxu0 0.0
        %1538 = vmatpush1.msra.mxu0 %v1491
        %1539 = vmatprep.subr.mxu0 0.0
        %1540 = vmatpush1.msra.mxu0 %v1492
        %1541 = vmatprep.subr.mxu0 0.0
        %1542 = vmatpush1.msra.mxu0 %v1493
        %1543 = vmatprep.subr.mxu0 0.0
        %1544 = vmatpush1.msra.mxu0 %v1494
        %1545 = vmatprep.subr.mxu0 0.0
        %1546 = vmatpush1.msra.mxu0 %v1495
        %1547 = vmatprep.subr.mxu0 0.0
        %1548 = vmatpush1.msra.mxu0 %v1496
        %1549 = vmatprep.subr.mxu0 0.0
        %1550 = vmatpush1.msra.mxu0 %v1497
        %1551 = vmatprep.subr.mxu0 0.0
        %1552 = vmatpush1.msra.mxu0 %v1498
        %1553 = vmatprep.subr.mxu0 0.0
        %1554 = vmatpush1.msra.mxu0 %v1499
        %1555 = vmatprep.subr.mxu0 0.0
        %1556 = vmatpush1.msra.mxu0 %v1500
        %1557 = vmatprep.subr.mxu0 0.0
        %1558 = vmatpush1.msra.mxu0 %v1501
        %1559 = vmatprep.subr.mxu0 0.0
        %1560 = vmatpush1.msra.mxu0 %v1502
        %1561 = vmatprep.subr.mxu0 0.0
        %1562 = vmatpush1.msra.mxu0 %v1503
        %1563 = vmatprep.subr.mxu0 0.0
        %1564 = vmatpush1.msra.mxu0 %v1504
        %1565 = vmatprep.subr.mxu0 0.0
        %1566 = vmatpush1.msra.mxu0 %v1505
        %1567 = vmatprep.subr.mxu0 0.0
        %1568 = vmatpush1.msra.mxu0 %v1506
        %1569 = vmatprep.subr.mxu0 0.0
        %1570 = vmatpush1.msra.mxu0 %v1507
        %1571 = vmatprep.subr.mxu0 0.0
        %1572 = vmatpush1.msra.mxu0 %v1508
        %1573 = vmatprep.mubr.f32.mxu0 %v1062
        %1574 = vmatmul.mubr.f32.gmra.mrb[0].mxu0 %v1061
        %v1575 = vpop.f32.mrb[0].mxu0
        %v1576 = vadd.f32 0.0, %v1575
        %v1577 = vpop.f32.mrb[0].mxu0
        %1578 = vdwg.mxu0
        %v1579 = vadd.f32 %v1475, %v1576
        %v1580 = vld [vmem:[%s6] sm:$0x1]
        %v1582 = vlaneseq
        %v1583 = vshrl.u32 %v1582, 7
        %v1584 = vsub.s32 0, %v1583
        %v1585 = vrot.slane %v1580, %v1584
        %v1587 = vadd.f32 %v1579, %v1585
        %vm1588 = vcmask 261120
        %v1589 = vsel %vm1588, %v1587, 0.0
        %1590 = vadd.xlane.f32.xlu0 %v1589
        %v1591 = vpop.xlane.xlu0 %1590
        %v1592 = vrcp.pop 32.0
        %v1593 = vmul.f32 %v1591, %v1592
        %v1594 = vsub.f32 %v1587, %v1593
        %v1595 = vmul.f32 %v1594, %v1594
        %v1596 = vsel %vm1588, %v1595, 0.0
        %1597 = vadd.xlane.f32.xlu0 %v1596
        %v1598 = vpop.xlane.xlu0 %1597
        %v1599 = vmul.f32 %v1598, %v1592
        %v1600 = vadd.f32 %v1599, 1e-05
        %v1601 = vrsqrt.pop %v1600
        %v1602 = vmul.f32 %v1594, %v1601
        %v1603 = vld [vmem:[%s7] sm:$0x1]
        %v1605 = vlaneseq
        %v1606 = vshrl.u32 %v1605, 7
        %v1607 = vsub.s32 0, %v1606
        %v1608 = vrot.slane %v1603, %v1607
        %v1610 = vmul.f32 %v1602, %v1608
        %v1611 = vld [vmem:[%s8] sm:$0x1]
        %v1613 = vlaneseq
        %v1614 = vshrl.u32 %v1613, 7
        %v1615 = vsub.s32 0, %v1614
        %v1616 = vrot.slane %v1611, %v1615
        %v1618 = vadd.f32 %v1610, %v1616
        %1619 = vst.msk [vmem:[%s325] sm:$0xff] %vm1588, %v1618
        %s1620 = sand.u32 %s225, 1
        %s1621 = scalar_lea.sflag [#allocation3], %s1620
        %s1622 = sand.u32 %s225, 1
        %s1623 = smul.addr %s1622, 8
        %s1624 = scalar_lea.vmem [#allocation2], %s1623
        // Predicated region
        $region57: #{pixel_encoder_forward.1} parent=55 // pred_check
          %p1625 = pneg %p235
        $region58: #{pixel_encoder_forward.1} parent=55 // pred_check_branch
          %1627 = sbr.rel (%p1625) target = $region60
        $region59: #{pixel_encoder_forward.1} parent=55 // pred_region
          %s1629 = ssub.s32 128, 128
          %1630 = vsyncadd %s1621, %s1629
          %s1631 = smul.addr %s23, 128
          %s1632 = scalar_lea.hbm %s9, %s1631
          %s1634 = sshll.u32 %s1624, 4
          %s1635 = int_to_ptr.vmem [resolvable:$true] %s1634
          %1637 = dma.vmem_to_hbm [thread:$0]  %s1635, 128, %s1632, %s1621
        $region60: #{pixel_encoder_forward.1} parent=55 // pred_fallthru
          _
      $region56: #{pixel_encoder_forward.1} parent=5 // pred_fallthru
        _
      %p1638 = scmp.le.s32.totalorder 2, %s18
      // Predicated region
      $region61: #{pixel_encoder_forward.1} parent=5 // pred_check
        %p1639 = pneg %p1638
      $region62: #{pixel_encoder_forward.1} parent=5 // pred_check_branch
        %1641 = sbr.rel (%p1639) target = $region64
      $region63: #{pixel_encoder_forward.1} parent=5 // pred_region
        %s1642 = ssub.s32 %s18, 2
        // Predicated region
        $region65: #{pixel_encoder_forward.1} parent=63 // pred_check
          %p1643 = pneg %p241
        $region66: #{pixel_encoder_forward.1} parent=63 // pred_check_branch
          %1645 = sbr.rel (%p1643) target = $region68
        $region67: #{pixel_encoder_forward.1} parent=63 // pred_region
          %s1646 = sand.u32 %s226, 1
          %s1647 = scalar_lea.sflag [#allocation3], %s1646
          %s1648 = sand.u32 %s226, 1
          %s1649 = smul.addr %s1648, 8
          %s1650 = scalar_lea.vmem [#allocation2], %s1649
          %1651 = dma.done %s1647, 128
        $region68: #{pixel_encoder_forward.1} parent=63 // pred_fallthru
          _
      $region64: #{pixel_encoder_forward.1} parent=5 // pred_fallthru
        _
    $region6: #{pixel_encoder_forward.1} parent=1 // loop_footer
      %s22 = sadd.s32 1, %s18
    $region7: #{pixel_encoder_forward.1} parent=1 // loop_footer_branch
      %17 = sbr.rel target = $region3
    $region8: #{pixel_encoder_forward.1} parent=1 // loop_exit
      _
    %1652 = vsyncpa [#allocation3], 1
    %s1653 = scalar_lea.sflag [#allocation3], 1
    %1654 = vsyncpa %s1653, 1

// kernel: pixel_encoder_forward.1
$region0: #{pixel_encoder_forward.1}
  #allocation0 [shape = 'u32[]', space=smem, size = 0x4, offset = 0x4, fixed_abs, tag = 'smem constant byte address 0x4 - core index']
  #allocation1 [shape = 'u32[144,128]{1,0:T(1,128)}', space=vmem, size = 0x12000, scoped, tag = 'internal scratch']
  %s0 = inlined_call_operand.vmem [shape: f32[2,56,256], index: 0, kind: input, shape index: {}]
  %s1 = inlined_call_operand.vmem [shape: f32[256,256], index: 1, kind: input, shape index: {}]
  %s2 = inlined_call_operand.vmem [shape: f32[1,256], index: 2, kind: input, shape index: {}]
  %s3 = inlined_call_operand.vmem [shape: f32[3,256,256], index: 3, kind: input, shape index: {}]
  %s4 = inlined_call_operand.vmem [shape: f32[1,256], index: 4, kind: input, shape index: {}]
  %s5 = inlined_call_operand.vmem [shape: f32[5,256,32], index: 5, kind: input, shape index: {}]
  %s6 = inlined_call_operand.vmem [shape: f32[1,32], index: 6, kind: input, shape index: {}]
  %s7 = inlined_call_operand.vmem [shape: f32[1,32], index: 7, kind: input, shape index: {}]
  %s8 = inlined_call_operand.vmem [shape: f32[1,32], index: 8, kind: input, shape index: {}]
  %s9 = inlined_call_operand.hbm [shape: f32[16,32], index: 9, kind: output, shape index: {}]
  %s10 = sld [smem:[#allocation0]]
  $region69: #{pixel_encoder_forward.1} parent=0
    _
  %s12 = ssub.s32 1, %s10
  %s13 = scalar_select 0, %s12, %s10
  $region1: #{pixel_encoder_forward.1} parent=0
    #allocation2 [shape = 'u8[8192]{0}', space=vmem, size = 0x2000, scoped, tag = 'output window, operand 0']
    #allocation3 [shape = 's32[2]{0}', space=sflag, size = 0x8, scoped, tag = 'scoped memory for pixel_encoder_forward.1']
    %14 = vsyncpa [#allocation3], 0
    %s15 = scalar_lea.sflag [#allocation3], 1
    %16 = vsyncpa %s15, 0
    loop: start=0, step=1, limit=4
    $region2: #{pixel_encoder_forward.1} parent=1 // loop_pre_header
      _
    $region3: #{pixel_encoder_forward.1} parent=1 // loop_header
      %s18 = sphi 0, %s22
      %p19 = scmp.ge.s32.totalorder %s18, 4
      %s28 = sphi 0, %s30
      %s31 = sphi 0, %s28
      %s32 = sphi 0, %s31
      %s48 = sphi 0, %s32
      %s52 = sphi 0, %s52
      %s54 = sphi 0, %s52
      %s55 = sphi 0, %s54
      %s69 = sphi 0, %s55
      %s73 = sphi 0, %s73
      %s75 = sphi 0, %s73
      %s76 = sphi 0, %s75
      %s90 = sphi 0, %s76
      %s94 = sphi 0, %s94
      %s96 = sphi 0, %s94
      %s97 = sphi 0, %s96
      %s111 = sphi 0, %s97
      %s115 = sphi 0, %s115
      %s117 = sphi 0, %s115
      %s118 = sphi 0, %s117
      %s132 = sphi 0, %s118
      %s136 = sphi 0, %s136
      %s138 = sphi 0, %s136
      %s139 = sphi 0, %s138
      %s153 = sphi 0, %s139
      %s157 = sphi 0, %s157
      %s159 = sphi 0, %s157
      %s160 = sphi 0, %s159
      %s174 = sphi 0, %s160
      %s178 = sphi 0, %s178
      %s180 = sphi 0, %s178
      %s181 = sphi 0, %s180
      %s195 = sphi 0, %s181
      %s199 = sphi 0, %s199
      %s201 = sphi 0, %s199
      %s202 = sphi 0, %s201
      %s216 = sphi 0, %s202
      %s222 = sphi 0, %s224
      %s225 = sphi 0, %s222
      %s226 = sphi 0, %s225
      %s242 = sphi 0, %s226
    $region4: #{pixel_encoder_forward.1} parent=1 // loop_header_branch
      %21 = sbr.rel (%p19) target = $region8
    $region5: #{pixel_encoder_forward.1} parent=1 // loop_body
      %s23 = ssub.s32 %s18, 1
      %s24 = ssub.s32 %s18, 2
      %s25 = sadd.s32 %s18, 1
      %s26 = ssub.s32 %s18, %s25
      %p27 = scmp.eq.s32.totalorder %s26, 0
      %s29 = sadd.s32 %s28, 1
      %s30 = scalar_select %p27, %s28, %s29
      %p33 = pneg %p27
      %p34 = scmp.eq.s32.totalorder %s18, 1
      %p35 = por %p33, %p34
      %p36 = scmp.ne.s32.totalorder %s28, %s31
      %p37 = scmp.eq.s32.totalorder %s18, 0
      %p38 = por %p36, %p37
      %p39 = scmp.ne.s32.totalorder %s28, %s31
      %p40 = scmp.eq.s32.totalorder %s23, 1
      %p41 = por %p39, %p40
      %p42 = scmp.ne.s32.totalorder %s31, %s32
      %p43 = scmp.eq.s32.totalorder %s23, 0
      %p44 = por %p42, %p43
      %p45 = scmp.ne.s32.totalorder %s31, %s32
      %p46 = scmp.eq.s32.totalorder %s24, 1
      %p47 = por %p45, %p46
      %p49 = scmp.ne.s32.totalorder %s32, %s48
      %p50 = scmp.eq.s32.totalorder %s24, 0
      %p51 = por %p49, %p50
      %s53 = sadd.s32 %s52, 1
      %p56 = scmp.eq.s32.totalorder %s18, 1
      %p57 = scmp.ne.s32.totalorder %s52, %s54
      %p58 = scmp.eq.s32.totalorder %s18, 0
      %p59 = por %p57, %p58
      %p60 = scmp.ne.s32.totalorder %s52, %s54
      %p61 = scmp.eq.s32.totalorder %s23, 1
      %p62 = por %p60, %p61
      %p63 = scmp.ne.s32.totalorder %s54, %s55
      %p64 = scmp.eq.s32.totalorder %s23, 0
      %p65 = por %p63, %p64
      %p66 = scmp.ne.s32.totalorder %s54, %s55
      %p67 = scmp.eq.s32.totalorder %s24, 1
      %p68 = por %p66, %p67
      %p70 = scmp.ne.s32.totalorder %s55, %s69
      %p71 = scmp.eq.s32.totalorder %s24, 0
      %p72 = por %p70, %p71
      %s74 = sadd.s32 %s73, 1
      %p77 = scmp.eq.s32.totalorder %s18, 1
      %p78 = scmp.ne.s32.totalorder %s73, %s75
      %p79 = scmp.eq.s32.totalorder %s18, 0
      %p80 = por %p78, %p79
      %p81 = scmp.ne.s32.totalorder %s73, %s75
      %p82 = scmp.eq.s32.totalorder %s23, 1
      %p83 = por %p81, %p82
      %p84 = scmp.ne.s32.totalorder %s75, %s76
      %p85 = scmp.eq.s32.totalorder %s23, 0
      %p86 = por %p84, %p85
      %p87 = scmp.ne.s32.totalorder %s75, %s76
      %p88 = scmp.eq.s32.totalorder %s24, 1
      %p89 = por %p87, %p88
      %p91 = scmp.ne.s32.totalorder %s76, %s90
      %p92 = scmp.eq.s32.totalorder %s24, 0
      %p93 = por %p91, %p92
      %s95 = sadd.s32 %s94, 1
      %p98 = scmp.eq.s32.totalorder %s18, 1
      %p99 = scmp.ne.s32.totalorder %s94, %s96
      %p100 = scmp.eq.s32.totalorder %s18, 0
      %p101 = por %p99, %p100
      %p102 = scmp.ne.s32.totalorder %s94, %s96
      %p103 = scmp.eq.s32.totalorder %s23, 1
      %p104 = por %p102, %p103
      %p105 = scmp.ne.s32.totalorder %s96, %s97
      %p106 = scmp.eq.s32.totalorder %s23, 0
      %p107 = por %p105, %p106
      %p108 = scmp.ne.s32.totalorder %s96, %s97
      %p109 = scmp.eq.s32.totalorder %s24, 1
      %p110 = por %p108, %p109
      %p112 = scmp.ne.s32.totalorder %s97, %s111
      %p113 = scmp.eq.s32.totalorder %s24, 0
      %p114 = por %p112, %p113
      %s116 = sadd.s32 %s115, 1
      %p119 = scmp.eq.s32.totalorder %s18, 1
      %p120 = scmp.ne.s32.totalorder %s115, %s117
      %p121 = scmp.eq.s32.totalorder %s18, 0
      %p122 = por %p120, %p121
      %p123 = scmp.ne.s32.totalorder %s115, %s117
      %p124 = scmp.eq.s32.totalorder %s23, 1
      %p125 = por %p123, %p124
      %p126 = scmp.ne.s32.totalorder %s117, %s118
      %p127 = scmp.eq.s32.totalorder %s23, 0
      %p128 = por %p126, %p127
      %p129 = scmp.ne.s32.totalorder %s117, %s118
      %p130 = scmp.eq.s32.totalorder %s24, 1
      %p131 = por %p129, %p130
      %p133 = scmp.ne.s32.totalorder %s118, %s132
      %p134 = scmp.eq.s32.totalorder %s24, 0
      %p135 = por %p133, %p134
      %s137 = sadd.s32 %s136, 1
      %p140 = scmp.eq.s32.totalorder %s18, 1
      %p141 = scmp.ne.s32.totalorder %s136, %s138
      %p142 = scmp.eq.s32.totalorder %s18, 0
      %p143 = por %p141, %p142
      %p144 = scmp.ne.s32.totalorder %s136, %s138
      %p145 = scmp.eq.s32.totalorder %s23, 1
      %p146 = por %p144, %p145
      %p147 = scmp.ne.s32.totalorder %s138, %s139
      %p148 = scmp.eq.s32.totalorder %s23, 0
      %p149 = por %p147, %p148
      %p150 = scmp.ne.s32.totalorder %s138, %s139
      %p151 = scmp.eq.s32.totalorder %s24, 1
      %p152 = por %p150, %p151
      %p154 = scmp.ne.s32.totalorder %s139, %s153
      %p155 = scmp.eq.s32.totalorder %s24, 0
      %p156 = por %p154, %p155
      %s158 = sadd.s32 %s157, 1
      %p161 = scmp.eq.s32.totalorder %s18, 1
      %p162 = scmp.ne.s32.totalorder %s157, %s159
      %p163 = scmp.eq.s32.totalorder %s18, 0
      %p164 = por %p162, %p163
      %p165 = scmp.ne.s32.totalorder %s157, %s159
      %p166 = scmp.eq.s32.totalorder %s23, 1
      %p167 = por %p165, %p166
      %p168 = scmp.ne.s32.totalorder %s159, %s160
      %p169 = scmp.eq.s32.totalorder %s23, 0
      %p170 = por %p168, %p169
      %p171 = scmp.ne.s32.totalorder %s159, %s160
      %p172 = scmp.eq.s32.totalorder %s24, 1
      %p173 = por %p171, %p172
      %p175 = scmp.ne.s32.totalorder %s160, %s174
      %p176 = scmp.eq.s32.totalorder %s24, 0
      %p177 = por %p175, %p176
      %s179 = sadd.s32 %s178, 1
      %p182 = scmp.eq.s32.totalorder %s18, 1
      %p183 = scmp.ne.s32.totalorder %s178, %s180
      %p184 = scmp.eq.s32.totalorder %s18, 0
      %p185 = por %p183, %p184
      %p186 = scmp.ne.s32.totalorder %s178, %s180
      %p187 = scmp.eq.s32.totalorder %s23, 1
      %p188 = por %p186, %p187
      %p189 = scmp.ne.s32.totalorder %s180, %s181
      %p190 = scmp.eq.s32.totalorder %s23, 0
      %p191 = por %p189, %p190
      %p192 = scmp.ne.s32.totalorder %s180, %s181
      %p193 = scmp.eq.s32.totalorder %s24, 1
      %p194 = por %p192, %p193
      %p196 = scmp.ne.s32.totalorder %s181, %s195
      %p197 = scmp.eq.s32.totalorder %s24, 0
      %p198 = por %p196, %p197
      %s200 = sadd.s32 %s199, 1
      %p203 = scmp.eq.s32.totalorder %s18, 1
      %p204 = scmp.ne.s32.totalorder %s199, %s201
      %p205 = scmp.eq.s32.totalorder %s18, 0
      %p206 = por %p204, %p205
      %p207 = scmp.ne.s32.totalorder %s199, %s201
      %p208 = scmp.eq.s32.totalorder %s23, 1
      %p209 = por %p207, %p208
      %p210 = scmp.ne.s32.totalorder %s201, %s202
      %p211 = scmp.eq.s32.totalorder %s23, 0
      %p212 = por %p210, %p211
      %p213 = scmp.ne.s32.totalorder %s201, %s202
      %p214 = scmp.eq.s32.totalorder %s24, 1
      %p215 = por %p213, %p214
      %p217 = scmp.ne.s32.totalorder %s202, %s216
      %p218 = scmp.eq.s32.totalorder %s24, 0
      %p219 = por %p217, %p218
      %s220 = ssub.s32 %s18, %s25
      %p221 = scmp.eq.s32.totalorder %s220, 0
      %s223 = sadd.s32 %s222, 1
      %s224 = scalar_select %p221, %s222, %s223
      %p227 = pneg %p221
      %p228 = scmp.eq.s32.totalorder %s18, 1
      %p229 = por %p227, %p228
      %p230 = scmp.ne.s32.totalorder %s222, %s225
      %p231 = scmp.eq.s32.totalorder %s18, 0
      %p232 = por %p230, %p231
      %p233 = scmp.ne.s32.totalorder %s222, %s225
      %p234 = scmp.eq.s32.totalorder %s23, 1
      %p235 = por %p233, %p234
      %p236 = scmp.ne.s32.totalorder %s225, %s226
      %p237 = scmp.eq.s32.totalorder %s23, 0
      %p238 = por %p236, %p237
      %p239 = scmp.ne.s32.totalorder %s225, %s226
      %p240 = scmp.eq.s32.totalorder %s24, 1
      %p241 = por %p239, %p240
      %p243 = scmp.ne.s32.totalorder %s226, %s242
      %p244 = scmp.eq.s32.totalorder %s24, 0
      %p245 = por %p243, %p244
      %p246 = scmp.le.s32.totalorder 1, %s18
      %p247 = scmp.lt.s32.totalorder %s18, 3
      %p248 = pnand %p246, %p247
      %p249 = pneg %p248
      // Predicated region
      $region9: #{pixel_encoder_forward.1} parent=5 // pred_check
        _
      $region10: #{pixel_encoder_forward.1} parent=5 // pred_check_branch
        %251 = sbr.rel (%p248) target = $region12
      $region11: #{pixel_encoder_forward.1} parent=5 // pred_region
        %s252 = ssub.s32 %s18, 1
        // Predicated region
        $region13: #{pixel_encoder_forward.1} parent=11 // pred_check
          %p253 = pneg %p65
        $region14: #{pixel_encoder_forward.1} parent=11 // pred_check_branch
          %255 = sbr.rel (%p253) target = $region16
        $region15: #{pixel_encoder_forward.1} parent=11 // pred_region
          _
        $region16: #{pixel_encoder_forward.1} parent=11 // pred_fallthru
          _
        // Predicated region
        $region17: #{pixel_encoder_forward.1} parent=11 // pred_check
          %p256 = pneg %p86
        $region18: #{pixel_encoder_forward.1} parent=11 // pred_check_branch
          %258 = sbr.rel (%p256) target = $region20
        $region19: #{pixel_encoder_forward.1} parent=11 // pred_region
          _
        $region20: #{pixel_encoder_forward.1} parent=11 // pred_fallthru
          _
        // Predicated region
        $region21: #{pixel_encoder_forward.1} parent=11 // pred_check
          %p259 = pneg %p107
        $region22: #{pixel_encoder_forward.1} parent=11 // pred_check_branch
          %261 = sbr.rel (%p259) target = $region24
        $region23: #{pixel_encoder_forward.1} parent=11 // pred_region
          _
        $region24: #{pixel_encoder_forward.1} parent=11 // pred_fallthru
          _
        // Predicated region
        $region25: #{pixel_encoder_forward.1} parent=11 // pred_check
          %p262 = pneg %p128
        $region26: #{pixel_encoder_forward.1} parent=11 // pred_check_branch
          %264 = sbr.rel (%p262) target = $region28
        $region27: #{pixel_encoder_forward.1} parent=11 // pred_region
          _
        $region28: #{pixel_encoder_forward.1} parent=11 // pred_fallthru
          _
        // Predicated region
        $region29: #{pixel_encoder_forward.1} parent=11 // pred_check
          %p265 = pneg %p149
        $region30: #{pixel_encoder_forward.1} parent=11 // pred_check_branch
          %267 = sbr.rel (%p265) target = $region32
        $region31: #{pixel_encoder_forward.1} parent=11 // pred_region
          _
        $region32: #{pixel_encoder_forward.1} parent=11 // pred_fallthru
          _
        // Predicated region
        $region33: #{pixel_encoder_forward.1} parent=11 // pred_check
          %p268 = pneg %p170
        $region34: #{pixel_encoder_forward.1} parent=11 // pred_check_branch
          %270 = sbr.rel (%p268) target = $region36
        $region35: #{pixel_encoder_forward.1} parent=11 // pred_region
          _
        $region36: #{pixel_encoder_forward.1} parent=11 // pred_fallthru
          _
        // Predicated region
        $region37: #{pixel_encoder_forward.1} parent=11 // pred_check
          %p271 = pneg %p191
        $region38: #{pixel_encoder_forward.1} parent=11 // pred_check_branch
          %273 = sbr.rel (%p271) target = $region40
        $region39: #{pixel_encoder_forward.1} parent=11 // pred_region
          _
        $region40: #{pixel_encoder_forward.1} parent=11 // pred_fallthru
          _
        // Predicated region
        $region41: #{pixel_encoder_forward.1} parent=11 // pred_check
          %p274 = pneg %p212
        $region42: #{pixel_encoder_forward.1} parent=11 // pred_check_branch
          %276 = sbr.rel (%p274) target = $region44
        $region43: #{pixel_encoder_forward.1} parent=11 // pred_region
          _
        $region44: #{pixel_encoder_forward.1} parent=11 // pred_fallthru
          _
      $region12: #{pixel_encoder_forward.1} parent=5 // pred_fallthru
        _
      %p277 = scmp.lt.s32.totalorder %s18, 2
      // Predicated region
      $region45: #{pixel_encoder_forward.1} parent=5 // pred_check
        %p278 = pneg %p277
      $region46: #{pixel_encoder_forward.1} parent=5 // pred_check_branch
        %280 = sbr.rel (%p278) target = $region48
      $region47: #{pixel_encoder_forward.1} parent=5 // pred_region
        // Predicated region
        $region49: #{pixel_encoder_forward.1} parent=47 // pred_check
          %p281 = pneg %p38
        $region50: #{pixel_encoder_forward.1} parent=47 // pred_check_branch
          %283 = sbr.rel (%p281) target = $region52
        $region51: #{pixel_encoder_forward.1} parent=47 // pred_region
          %p284 = scmp.lt.s32.totalorder %s18, 1
          %s285 = scalar_select %p284, %s18, 1
          %s286 = smul.addr %s285, 14
          %s287 = smul.addr %s286, 8
          %s288 = scalar_lea.vmem %s0, %s287
        $region52: #{pixel_encoder_forward.1} parent=47 // pred_fallthru
          _
      $region48: #{pixel_encoder_forward.1} parent=5 // pred_fallthru
        _
      %p289 = scmp.le.s32.totalorder 1, %s18
      %p290 = scmp.lt.s32.totalorder %s18, 3
      %p291 = pnand %p289, %p290
      %p292 = pneg %p291
      // Predicated region
      $region53: #{pixel_encoder_forward.1} parent=5 // pred_check
        _
      $region54: #{pixel_encoder_forward.1} parent=5 // pred_check_branch
        %294 = sbr.rel (%p291) target = $region56
      $region55: #{pixel_encoder_forward.1} parent=5 // pred_region
        %s295 = ssub.s32 %s18, 1
        %p296 = scmp.lt.s32.totalorder %s23, 1
        %s297 = scalar_select %p296, %s23, 1
        %s298 = smul.addr %s297, 14
        %s299 = smul.addr %s298, 8
        %s300 = scalar_lea.vmem %s0, %s299
        %p301 = pneg %p44
        %p302 = pneg %p41
        %p303 = pneg %p65
        %p304 = pneg %p62
        %p305 = pneg %p86
        %p306 = pneg %p83
        %p307 = pneg %p107
        %p308 = pneg %p104
        %p309 = pneg %p128
        %p310 = pneg %p125
        %p311 = pneg %p149
        %p312 = pneg %p146
        %p313 = pneg %p170
        %p314 = pneg %p167
        %p315 = pneg %p191
        %p316 = pneg %p188
        %p317 = pneg %p212
        %p318 = pneg %p209
        %p319 = pneg %p238
        %p320 = pneg %p235
        %s321 = sand.u32 %s225, 1
        %s322 = scalar_lea.sflag [#allocation3], %s321
        %s323 = sand.u32 %s225, 1
        %s324 = smul.addr %s323, 8
        %s325 = scalar_lea.vmem [#allocation2], %s324
        %p326 = scmp.lt.s32.totalorder %s23, 1
        %s327 = scalar_select %p326, %s23, 1
        %s328 = smul.addr %s327, 14
        %s329 = smul.addr %s328, 8
        %s330 = scalar_lea.vmem %s0, %s329
        %v331 = vld [vmem:[%s330] sm:$0xff]
        %v332 = vld [vmem:[%s330 + $0x8] sm:$0xff]
        %v333 = vld [vmem:[%s330 + $0x10] sm:$0xff]
        %v334 = vld [vmem:[%s330 + $0x18] sm:$0xff]
        %v335 = vld [vmem:[%s330 + $0x20] sm:$0xff]
        %v336 = vld [vmem:[%s330 + $0x28] sm:$0xff]
        %v337 = vld [vmem:[%s330 + $0x30] sm:$0xff]
        %v338 = vld [vmem:[%s330 + $0x38] sm:$0xff]
        %v339 = vld [vmem:[%s330 + $0x40] sm:$0xff]
        %v340 = vld [vmem:[%s330 + $0x48] sm:$0xff]
        %v341 = vld [vmem:[%s330 + $0x50] sm:$0xff]
        %v342 = vld [vmem:[%s330 + $0x58] sm:$0xff]
        %v343 = vld [vmem:[%s330 + $0x60] sm:$0xff]
        %v344 = vld [vmem:[%s330 + $0x68] sm:$0xff]
        %v345 = vld [vmem:[%s1] sm:$0xff]
        %v346 = vld [vmem:[%s1 + $0x8] sm:$0xff]
        %v347 = vld [vmem:[%s1 + $0x10] sm:$0xff]
        %v348 = vld [vmem:[%s1 + $0x18] sm:$0xff]
        %v349 = vld [vmem:[%s1 + $0x20] sm:$0xff]
        %v350 = vld [vmem:[%s1 + $0x28] sm:$0xff]
        %v351 = vld [vmem:[%s1 + $0x30] sm:$0xff]
        %v352 = vld [vmem:[%s1 + $0x38] sm:$0xff]
        %v353 = vld [vmem:[%s1 + $0x40] sm:$0xff]
        %v354 = vld [vmem:[%s1 + $0x48] sm:$0xff]
        %v355 = vld [vmem:[%s1 + $0x50] sm:$0xff]
        %v356 = vld [vmem:[%s1 + $0x58] sm:$0xff]
        %v357 = vld [vmem:[%s1 + $0x60] sm:$0xff]
        %v358 = vld [vmem:[%s1 + $0x68] sm:$0xff]
        %v359 = vld [vmem:[%s1 + $0x70] sm:$0xff]
        %v360 = vld [vmem:[%s1 + $0x78] sm:$0xff]
        %v361 = vld [vmem:[%s1 + $0x80] sm:$0xff]
        %v362 = vld [vmem:[%s1 + $0x88] sm:$0xff]
        %v363 = vld [vmem:[%s1 + $0x90] sm:$0xff]
        %v364 = vld [vmem:[%s1 + $0x98] sm:$0xff]
        %v365 = vld [vmem:[%s1 + $0xa0] sm:$0xff]
        %v366 = vld [vmem:[%s1 + $0xa8] sm:$0xff]
        %v367 = vld [vmem:[%s1 + $0xb0] sm:$0xff]
        %v368 = vld [vmem:[%s1 + $0xb8] sm:$0xff]
        %v369 = vld [vmem:[%s1 + $0xc0] sm:$0xff]
        %v370 = vld [vmem:[%s1 + $0xc8] sm:$0xff]
        %v371 = vld [vmem:[%s1 + $0xd0] sm:$0xff]
        %v372 = vld [vmem:[%s1 + $0xd8] sm:$0xff]
        %v373 = vld [vmem:[%s1 + $0xe0] sm:$0xff]
        %v374 = vld [vmem:[%s1 + $0xe8] sm:$0xff]
        %v375 = vld [vmem:[%s1 + $0xf0] sm:$0xff]
        %v376 = vld [vmem:[%s1 + $0xf8] sm:$0xff]
        %v377 = vld [vmem:[%s1 + $0x100] sm:$0xff]
        %v378 = vld [vmem:[%s1 + $0x108] sm:$0xff]
        %v379 = vld [vmem:[%s1 + $0x110] sm:$0xff]
        %v380 = vld [vmem:[%s1 + $0x118] sm:$0xff]
        %v381 = vld [vmem:[%s1 + $0x120] sm:$0xff]
        %v382 = vld [vmem:[%s1 + $0x128] sm:$0xff]
        %v383 = vld [vmem:[%s1 + $0x130] sm:$0xff]
        %v384 = vld [vmem:[%s1 + $0x138] sm:$0xff]
        %v385 = vld [vmem:[%s1 + $0x140] sm:$0xff]
        %v386 = vld [vmem:[%s1 + $0x148] sm:$0xff]
        %v387 = vld [vmem:[%s1 + $0x150] sm:$0xff]
        %v388 = vld [vmem:[%s1 + $0x158] sm:$0xff]
        %v389 = vld [vmem:[%s1 + $0x160] sm:$0xff]
        %v390 = vld [vmem:[%s1 + $0x168] sm:$0xff]
        %v391 = vld [vmem:[%s1 + $0x170] sm:$0xff]
        %v392 = vld [vmem:[%s1 + $0x178] sm:$0xff]
        %v393 = vld [vmem:[%s1 + $0x180] sm:$0xff]
        %v394 = vld [vmem:[%s1 + $0x188] sm:$0xff]
        %v395 = vld [vmem:[%s1 + $0x190] sm:$0xff]
        %v396 = vld [vmem:[%s1 + $0x198] sm:$0xff]
        %v397 = vld [vmem:[%s1 + $0x1a0] sm:$0xff]
        %v398 = vld [vmem:[%s1 + $0x1a8] sm:$0xff]
        %v399 = vld [vmem:[%s1 + $0x1b0] sm:$0xff]
        %v400 = vld [vmem:[%s1 + $0x1b8] sm:$0xff]
        %v401 = vld [vmem:[%s1 + $0x1c0] sm:$0xff]
        %v402 = vld [vmem:[%s1 + $0x1c8] sm:$0xff]
        %v403 = vld [vmem:[%s1 + $0x1d0] sm:$0xff]
        %v404 = vld [vmem:[%s1 + $0x1d8] sm:$0xff]
        %v405 = vld [vmem:[%s1 + $0x1e0] sm:$0xff]
        %v406 = vld [vmem:[%s1 + $0x1e8] sm:$0xff]
        %v407 = vld [vmem:[%s1 + $0x1f0] sm:$0xff]
        %v408 = vld [vmem:[%s1 + $0x1f8] sm:$0xff]
        %v409 = vld [vmem:[%s2] sm:$0x3]
        %v411 = vlaneseq
        %v412 = vshrl.u32 %v411, 7
        %v413 = vsub.s32 0, %v412
        %v414 = vrot.slane %v409, %v413
        %v415 = vlaneseq
        %v416 = vshrl.u32 %v415, 7
        %v417 = vsub.s32 1, %v416
        %v418 = vrot.slane %v409, %v417
        %421 = vmatprep.subr.mxu0 %v346
        %422 = vmatpush1.msra.mxu0 %v345
        %423 = vmatprep.subr.mxu0 %v348
        %424 = vmatpush1.msra.mxu0 %v347
        %425 = vmatprep.subr.mxu0 %v350
        %426 = vmatpush1.msra.mxu0 %v349
        %427 = vmatprep.subr.mxu0 %v352
        %428 = vmatpush1.msra.mxu0 %v351
        %429 = vmatprep.subr.mxu0 %v354
        %430 = vmatpush1.msra.mxu0 %v353
        %431 = vmatprep.subr.mxu0 %v356
        %432 = vmatpush1.msra.mxu0 %v355
        %433 = vmatprep.subr.mxu0 %v358
        %434 = vmatpush1.msra.mxu0 %v357
        %435 = vmatprep.subr.mxu0 %v360
        %436 = vmatpush1.msra.mxu0 %v359
        %437 = vmatprep.subr.mxu0 %v362
        %438 = vmatpush1.msra.mxu0 %v361
        %439 = vmatprep.subr.mxu0 %v364
        %440 = vmatpush1.msra.mxu0 %v363
        %441 = vmatprep.subr.mxu0 %v366
        %442 = vmatpush1.msra.mxu0 %v365
        %443 = vmatprep.subr.mxu0 %v368
        %444 = vmatpush1.msra.mxu0 %v367
        %445 = vmatprep.subr.mxu0 %v370
        %446 = vmatpush1.msra.mxu0 %v369
        %447 = vmatprep.subr.mxu0 %v372
        %448 = vmatpush1.msra.mxu0 %v371
        %449 = vmatprep.subr.mxu0 %v374
        %450 = vmatpush1.msra.mxu0 %v373
        %451 = vmatprep.subr.mxu0 %v376
        %452 = vmatpush1.msra.mxu0 %v375
        %453 = vmatprep.subr.mxu0 %v378
        %454 = vmatpush1.msra.mxu0 %v377
        %455 = vmatprep.subr.mxu0 %v380
        %456 = vmatpush1.msra.mxu0 %v379
        %457 = vmatprep.subr.mxu0 %v382
        %458 = vmatpush1.msra.mxu0 %v381
        %459 = vmatprep.subr.mxu0 %v384
        %460 = vmatpush1.msra.mxu0 %v383
        %461 = vmatprep.subr.mxu0 %v386
        %462 = vmatpush1.msra.mxu0 %v385
        %463 = vmatprep.subr.mxu0 %v388
        %464 = vmatpush1.msra.mxu0 %v387
        %465 = vmatprep.subr.mxu0 %v390
        %466 = vmatpush1.msra.mxu0 %v389
        %467 = vmatprep.subr.mxu0 %v392
        %468 = vmatpush1.msra.mxu0 %v391
        %469 = vmatprep.subr.mxu0 %v394
        %470 = vmatpush1.msra.mxu0 %v393
        %471 = vmatprep.subr.mxu0 %v396
        %472 = vmatpush1.msra.mxu0 %v395
        %473 = vmatprep.subr.mxu0 %v398
        %474 = vmatpush1.msra.mxu0 %v397
        %475 = vmatprep.subr.mxu0 %v400
        %476 = vmatpush1.msra.mxu0 %v399
        %477 = vmatprep.subr.mxu0 %v402
        %478 = vmatpush1.msra.mxu0 %v401
        %479 = vmatprep.subr.mxu0 %v404
        %480 = vmatpush1.msra.mxu0 %v403
        %481 = vmatprep.subr.mxu0 %v406
        %482 = vmatpush1.msra.mxu0 %v405
        %483 = vmatprep.subr.mxu0 %v408
        %484 = vmatpush1.msra.mxu0 %v407
        %485 = vmatprep.mubr.f32.mxu0 %v332
        %486 = vmatmul.mubr.f32.gmra.mrb[0].mxu0 %v331
        %v487 = vpop.f32.mrb[0].mxu0
        %v488 = vadd.f32 %v414, %v487
        %v489 = vpop.f32.mrb[0].mxu0
        %v490 = vadd.f32 %v418, %v489
        %491 = vmatprep.mubr.f32.mxu0 %v334
        %492 = vmatmul.mubr.f32.gmra.mrb[0].mxu0 %v333
        %v493 = vpop.f32.mrb[0].mxu0
        %v494 = vadd.f32 %v414, %v493
        %v495 = vpop.f32.mrb[0].mxu0
        %v496 = vadd.f32 %v418, %v495
        %497 = vmatprep.mubr.f32.mxu0 %v336
        %498 = vmatmul.mubr.f32.gmra.mrb[0].mxu0 %v335
        %v499 = vpop.f32.mrb[0].mxu0
        %v500 = vadd.f32 %v414, %v499
        %v501 = vpop.f32.mrb[0].mxu0
        %v502 = vadd.f32 %v418, %v501
        %503 = vmatprep.mubr.f32.mxu0 %v338
        %504 = vmatmul.mubr.f32.gmra.mrb[0].mxu0 %v337
        %v505 = vpop.f32.mrb[0].mxu0
        %v506 = vadd.f32 %v414, %v505
        %v507 = vpop.f32.mrb[0].mxu0
        %v508 = vadd.f32 %v418, %v507
        %509 = vmatprep.mubr.f32.mxu0 %v340
        %510 = vmatmul.mubr.f32.gmra.mrb[0].mxu0 %v339
        %v511 = vpop.f32.mrb[0].mxu0
        %v512 = vadd.f32 %v414, %v511
        %v513 = vpop.f32.mrb[0].mxu0
        %v514 = vadd.f32 %v418, %v513
        %515 = vmatprep.mubr.f32.mxu0 %v342
        %516 = vmatmul.mubr.f32.gmra.mrb[0].mxu0 %v341
        %v517 = vpop.f32.mrb[0].mxu0
        %v518 = vadd.f32 %v414, %v517
        %v519 = vpop.f32.mrb[0].mxu0
        %v520 = vadd.f32 %v418, %v519
        %521 = vmatprep.mubr.f32.mxu0 %v344
        %522 = vmatmul.mubr.f32.gmra.mrb[0].mxu0 %v343
        %v523 = vpop.f32.mrb[0].mxu0
        %v524 = vadd.f32 %v414, %v523
        %v525 = vpop.f32.mrb[0].mxu0
        %v526 = vadd.f32 %v418, %v525
        %527 = vdwg.mxu0
        %v528 = vmax.f32 %v488, 0.0
        %v529 = vmax.f32 %v490, 0.0
        %v530 = vmax.f32 %v494, 0.0
        %v531 = vmax.f32 %v496, 0.0
        %v532 = vmax.f32 %v500, 0.0
        %v533 = vmax.f32 %v502, 0.0
        %v534 = vmax.f32 %v506, 0.0
        %v535 = vmax.f32 %v508, 0.0
        %v536 = vmax.f32 %v512, 0.0
        %v537 = vmax.f32 %v514, 0.0
        %v538 = vmax.f32 %v518, 0.0
        %v539 = vmax.f32 %v520, 0.0
        %v540 = vmax.f32 %v524, 0.0
        %v541 = vmax.f32 %v526, 0.0
        %v542 = vld [vmem:[%s3] sm:$0xff]
        %v543 = vld [vmem:[%s3 + $0x8] sm:$0xff]
        %v544 = vld [vmem:[%s3 + $0x10] sm:$0xff]
        %v545 = vld [vmem:[%s3 + $0x18] sm:$0xff]
        %v546 = vld [vmem:[%s3 + $0x20] sm:$0xff]
        %v547 = vld [vmem:[%s3 + $0x28] sm:$0xff]
        %v548 = vld [vmem:[%s3 + $0x30] sm:$0xff]
        %v549 = vld [vmem:[%s3 + $0x38] sm:$0xff]
        %v550 = vld [vmem:[%s3 + $0x40] sm:$0xff]
        %v551 = vld [vmem:[%s3 + $0x48] sm:$0xff]
        %v552 = vld [vmem:[%s3 + $0x50] sm:$0xff]
        %v553 = vld [vmem:[%s3 + $0x58] sm:$0xff]
        %v554 = vld [vmem:[%s3 + $0x60] sm:$0xff]
        %v555 = vld [vmem:[%s3 + $0x68] sm:$0xff]
        %v556 = vld [vmem:[%s3 + $0x70] sm:$0xff]
        %v557 = vld [vmem:[%s3 + $0x78] sm:$0xff]
        %v558 = vld [vmem:[%s3 + $0x80] sm:$0xff]
        %v559 = vld [vmem:[%s3 + $0x88] sm:$0xff]
        %v560 = vld [vmem:[%s3 + $0x90] sm:$0xff]
        %v561 = vld [vmem:[%s3 + $0x98] sm:$0xff]
        %v562 = vld [vmem:[%s3 + $0xa0] sm:$0xff]
        %v563 = vld [vmem:[%s3 + $0xa8] sm:$0xff]
        %v564 = vld [vmem:[%s3 + $0xb0] sm:$0xff]
        %v565 = vld [vmem:[%s3 + $0xb8] sm:$0xff]
        %v566 = vld [vmem:[%s3 + $0xc0] sm:$0xff]
        %v567 = vld [vmem:[%s3 + $0xc8] sm:$0xff]
        %v568 = vld [vmem:[%s3 + $0xd0] sm:$0xff]
        %v569 = vld [vmem:[%s3 + $0xd8] sm:$0xff]
        %v570 = vld [vmem:[%s3 + $0xe0] sm:$0xff]
        %v571 = vld [vmem:[%s3 + $0xe8] sm:$0xff]
        %v572 = vld [vmem:[%s3 + $0xf0] sm:$0xff]
        %v573 = vld [vmem:[%s3 + $0xf8] sm:$0xff]
        %v574 = vld [vmem:[%s3 + $0x100] sm:$0xff]
        %v575 = vld [vmem:[%s3 + $0x108] sm:$0xff]
        %v576 = vld [vmem:[%s3 + $0x110] sm:$0xff]
        %v577 = vld [vmem:[%s3 + $0x118] sm:$0xff]
        %v578 = vld [vmem:[%s3 + $0x120] sm:$0xff]
        %v579 = vld [vmem:[%s3 + $0x128] sm:$0xff]
        %v580 = vld [vmem:[%s3 + $0x130] sm:$0xff]
        %v581 = vld [vmem:[%s3 + $0x138] sm:$0xff]
        %v582 = vld [vmem:[%s3 + $0x140] sm:$0xff]
        %v583 = vld [vmem:[%s3 + $0x148] sm:$0xff]
        %v584 = vld [vmem:[%s3 + $0x150] sm:$0xff]
        %v585 = vld [vmem:[%s3 + $0x158] sm:$0xff]
        %v586 = vld [vmem:[%s3 + $0x160] sm:$0xff]
        %v587 = vld [vmem:[%s3 + $0x168] sm:$0xff]
        %v588 = vld [vmem:[%s3 + $0x170] sm:$0xff]
        %v589 = vld [vmem:[%s3 + $0x178] sm:$0xff]
        %v590 = vld [vmem:[%s3 + $0x180] sm:$0xff]
        %v591 = vld [vmem:[%s3 + $0x188] sm:$0xff]
        %v592 = vld [vmem:[%s3 + $0x190] sm:$0xff]
        %v593 = vld [vmem:[%s3 + $0x198] sm:$0xff]
        %v594 = vld [vmem:[%s3 + $0x1a0] sm:$0xff]
        %v595 = vld [vmem:[%s3 + $0x1a8] sm:$0xff]
        %v596 = vld [vmem:[%s3 + $0x1b0] sm:$0xff]
        %v597 = vld [vmem:[%s3 + $0x1b8] sm:$0xff]
        %v598 = vld [vmem:[%s3 + $0x1c0] sm:$0xff]
        %v599 = vld [vmem:[%s3 + $0x1c8] sm:$0xff]
        %v600 = vld [vmem:[%s3 + $0x1d0] sm:$0xff]
        %v601 = vld [vmem:[%s3 + $0x1d8] sm:$0xff]
        %v602 = vld [vmem:[%s3 + $0x1e0] sm:$0xff]
        %v603 = vld [vmem:[%s3 + $0x1e8] sm:$0xff]
        %v604 = vld [vmem:[%s3 + $0x1f0] sm:$0xff]
        %v605 = vld [vmem:[%s3 + $0x1f8] sm:$0xff]
        %s606 = scalar_lea.vmem %s3, 512
        %v607 = vld [vmem:[%s606] sm:$0xff]
        %v608 = vld [vmem:[%s606 + $0x8] sm:$0xff]
        %v609 = vld [vmem:[%s606 + $0x10] sm:$0xff]
        %v610 = vld [vmem:[%s606 + $0x18] sm:$0xff]
        %v611 = vld [vmem:[%s606 + $0x20] sm:$0xff]
        %v612 = vld [vmem:[%s606 + $0x28] sm:$0xff]
        %v613 = vld [vmem:[%s606 + $0x30] sm:$0xff]
        %v614 = vld [vmem:[%s606 + $0x38] sm:$0xff]
        %v615 = vld [vmem:[%s606 + $0x40] sm:$0xff]
        %v616 = vld [vmem:[%s606 + $0x48] sm:$0xff]
        %v617 = vld [vmem:[%s606 + $0x50] sm:$0xff]
        %v618 = vld [vmem:[%s606 + $0x58] sm:$0xff]
        %v619 = vld [vmem:[%s606 + $0x60] sm:$0xff]
        %v620 = vld [vmem:[%s606 + $0x68] sm:$0xff]
        %v621 = vld [vmem:[%s606 + $0x70] sm:$0xff]
        %v622 = vld [vmem:[%s606 + $0x78] sm:$0xff]
        %v623 = vld [vmem:[%s606 + $0x80] sm:$0xff]
        %v624 = vld [vmem:[%s606 + $0x88] sm:$0xff]
        %v625 = vld [vmem:[%s606 + $0x90] sm:$0xff]
        %v626 = vld [vmem:[%s606 + $0x98] sm:$0xff]
        %v627 = vld [vmem:[%s606 + $0xa0] sm:$0xff]
        %v628 = vld [vmem:[%s606 + $0xa8] sm:$0xff]
        %v629 = vld [vmem:[%s606 + $0xb0] sm:$0xff]
        %v630 = vld [vmem:[%s606 + $0xb8] sm:$0xff]
        %v631 = vld [vmem:[%s606 + $0xc0] sm:$0xff]
        %v632 = vld [vmem:[%s606 + $0xc8] sm:$0xff]
        %v633 = vld [vmem:[%s606 + $0xd0] sm:$0xff]
        %v634 = vld [vmem:[%s606 + $0xd8] sm:$0xff]
        %v635 = vld [vmem:[%s606 + $0xe0] sm:$0xff]
        %v636 = vld [vmem:[%s606 + $0xe8] sm:$0xff]
        %v637 = vld [vmem:[%s606 + $0xf0] sm:$0xff]
        %v638 = vld [vmem:[%s606 + $0xf8] sm:$0xff]
        %v639 = vld [vmem:[%s606 + $0x100] sm:$0xff]
        %v640 = vld [vmem:[%s606 + $0x108] sm:$0xff]
        %v641 = vld [vmem:[%s606 + $0x110] sm:$0xff]
        %v642 = vld [vmem:[%s606 + $0x118] sm:$0xff]
        %v643 = vld [vmem:[%s606 + $0x120] sm:$0xff]
        %v644 = vld [vmem:[%s606 + $0x128] sm:$0xff]
        %v645 = vld [vmem:[%s606 + $0x130] sm:$0xff]
        %v646 = vld [vmem:[%s606 + $0x138] sm:$0xff]
        %v647 = vld [vmem:[%s606 + $0x140] sm:$0xff]
        %v648 = vld [vmem:[%s606 + $0x148] sm:$0xff]
        %v649 = vld [vmem:[%s606 + $0x150] sm:$0xff]
        %v650 = vld [vmem:[%s606 + $0x158] sm:$0xff]
        %v651 = vld [vmem:[%s606 + $0x160] sm:$0xff]
        %v652 = vld [vmem:[%s606 + $0x168] sm:$0xff]
        %v653 = vld [vmem:[%s606 + $0x170] sm:$0xff]
        %v654 = vld [vmem:[%s606 + $0x178] sm:$0xff]
        %v655 = vld [vmem:[%s606 + $0x180] sm:$0xff]
        %v656 = vld [vmem:[%s606 + $0x188] sm:$0xff]
        %v657 = vld [vmem:[%s606 + $0x190] sm:$0xff]
        %v658 = vld [vmem:[%s606 + $0x198] sm:$0xff]
        %v659 = vld [vmem:[%s606 + $0x1a0] sm:$0xff]
        %v660 = vld [vmem:[%s606 + $0x1a8] sm:$0xff]
        %v661 = vld [vmem:[%s606 + $0x1b0] sm:$0xff]
        %v662 = vld [vmem:[%s606 + $0x1b8] sm:$0xff]
        %v663 = vld [vmem:[%s606 + $0x1c0] sm:$0xff]
        %v664 = vld [vmem:[%s606 + $0x1c8] sm:$0xff]
        %v665 = vld [vmem:[%s606 + $0x1d0] sm:$0xff]
        %v666 = vld [vmem:[%s606 + $0x1d8] sm:$0xff]
        %v667 = vld [vmem:[%s606 + $0x1e0] sm:$0xff]
        %v668 = vld [vmem:[%s606 + $0x1e8] sm:$0xff]
        %v669 = vld [vmem:[%s606 + $0x1f0] sm:$0xff]
        %v670 = vld [vmem:[%s606 + $0x1f8] sm:$0xff]
        %671 = vmatprep.subr.mxu0 %v608
        %672 = vmatpush1.msra.mxu0 %v607
        %673 = vmatprep.subr.mxu0 %v610
        %674 = vmatpush1.msra.mxu0 %v609
        %675 = vmatprep.subr.mxu0 %v612
        %676 = vmatpush1.msra.mxu0 %v611
        %677 = vmatprep.subr.mxu0 %v614
        %678 = vmatpush1.msra.mxu0 %v613
        %679 = vmatprep.subr.mxu0 %v616
        %680 = vmatpush1.msra.mxu0 %v615
        %681 = vmatprep.subr.mxu0 %v618
        %682 = vmatpush1.msra.mxu0 %v617
        %683 = vmatprep.subr.mxu0 %v620
        %684 = vmatpush1.msra.mxu0 %v619
        %685 = vmatprep.subr.mxu0 %v622
        %686 = vmatpush1.msra.mxu0 %v621
        %687 = vmatprep.subr.mxu0 %v624
        %688 = vmatpush1.msra.mxu0 %v623
        %689 = vmatprep.subr.mxu0 %v626
        %690 = vmatpush1.msra.mxu0 %v625
        %691 = vmatprep.subr.mxu0 %v628
        %692 = vmatpush1.msra.mxu0 %v627
        %693 = vmatprep.subr.mxu0 %v630
        %694 = vmatpush1.msra.mxu0 %v629
        %695 = vmatprep.subr.mxu0 %v632
        %696 = vmatpush1.msra.mxu0 %v631
        %697 = vmatprep.subr.mxu0 %v634
        %698 = vmatpush1.msra.mxu0 %v633
        %699 = vmatprep.subr.mxu0 %v636
        %700 = vmatpush1.msra.mxu0 %v635
        %701 = vmatprep.subr.mxu0 %v638
        %702 = vmatpush1.msra.mxu0 %v637
        %703 = vmatprep.subr.mxu0 %v640
        %704 = vmatpush1.msra.mxu0 %v639
        %705 = vmatprep.subr.mxu0 %v642
        %706 = vmatpush1.msra.mxu0 %v641
        %707 = vmatprep.subr.mxu0 %v644
        %708 = vmatpush1.msra.mxu0 %v643
        %709 = vmatprep.subr.mxu0 %v646
        %710 = vmatpush1.msra.mxu0 %v645
        %711 = vmatprep.subr.mxu0 %v648
        %712 = vmatpush1.msra.mxu0 %v647
        %713 = vmatprep.subr.mxu0 %v650
        %714 = vmatpush1.msra.mxu0 %v649
        %715 = vmatprep.subr.mxu0 %v652
        %716 = vmatpush1.msra.mxu0 %v651
        %717 = vmatprep.subr.mxu0 %v654
        %718 = vmatpush1.msra.mxu0 %v653
        %719 = vmatprep.subr.mxu0 %v656
        %720 = vmatpush1.msra.mxu0 %v655
        %721 = vmatprep.subr.mxu0 %v658
        %722 = vmatpush1.msra.mxu0 %v657
        %723 = vmatprep.subr.mxu0 %v660
        %724 = vmatpush1.msra.mxu0 %v659
        %725 = vmatprep.subr.mxu0 %v662
        %726 = vmatpush1.msra.mxu0 %v661
        %727 = vmatprep.subr.mxu0 %v664
        %728 = vmatpush1.msra.mxu0 %v663
        %729 = vmatprep.subr.mxu0 %v666
        %730 = vmatpush1.msra.mxu0 %v665
        %731 = vmatprep.subr.mxu0 %v668
        %732 = vmatpush1.msra.mxu0 %v667
        %733 = vmatprep.subr.mxu0 %v670
        %734 = vmatpush1.msra.mxu0 %v669
        %735 = vmatprep.mubr.f32.mxu0 %v531
        %736 = vmatmul.mubr.f32.gmra.mrb[0].mxu0 %v530
        %v737 = vpop.f32.mrb[0].mxu0
        %v738 = vadd.f32 0.0, %v737
        %v739 = vpop.f32.mrb[0].mxu0
        %v740 = vadd.f32 0.0, %v739
        %741 = vmatprep.mubr.f32.mxu0 %v533
        %742 = vmatmul.mubr.f32.gmra.mrb[0].mxu0 %v532
        %v743 = vpop.f32.mrb[0].mxu0
        %v744 = vadd.f32 0.0, %v743
        %v745 = vpop.f32.mrb[0].mxu0
        %v746 = vadd.f32 0.0, %v745
        %747 = vmatprep.mubr.f32.mxu0 %v535
        %748 = vmatmul.mubr.f32.gmra.mrb[0].mxu0 %v534
        %v749 = vpop.f32.mrb[0].mxu0
        %v750 = vadd.f32 0.0, %v749
        %v751 = vpop.f32.mrb[0].mxu0
        %v752 = vadd.f32 0.0, %v751
        %753 = vmatprep.mubr.f32.mxu0 %v537
        %754 = vmatmul.mubr.f32.gmra.mrb[0].mxu0 %v536
        %v755 = vpop.f32.mrb[0].mxu0
        %v756 = vadd.f32 0.0, %v755
        %v757 = vpop.f32.mrb[0].mxu0
        %v758 = vadd.f32 0.0, %v757
        %759 = vmatprep.mubr.f32.mxu0 %v539
        %760 = vmatmul.mubr.f32.gmra.mrb[0].mxu0 %v538
        %v761 = vpop.f32.mrb[0].mxu0
        %v762 = vadd.f32 0.0, %v761
        %v763 = vpop.f32.mrb[0].mxu0
        %v764 = vadd.f32 0.0, %v763
        %765 = vdwg.mxu0
        %766 = vmatprep.subr.mxu0 %v543
        %767 = vmatpush1.msra.mxu0 %v542
        %768 = vmatprep.subr.mxu0 %v545
        %769 = vmatpush1.msra.mxu0 %v544
        %770 = vmatprep.subr.mxu0 %v547
        %771 = vmatpush1.msra.mxu0 %v546
        %772 = vmatprep.subr.mxu0 %v549
        %773 = vmatpush1.msra.mxu0 %v548
        %774 = vmatprep.subr.mxu0 %v551
        %775 = vmatpush1.msra.mxu0 %v550
        %776 = vmatprep.subr.mxu0 %v553
        %777 = vmatpush1.msra.mxu0 %v552
        %778 = vmatprep.subr.mxu0 %v555
        %779 = vmatpush1.msra.mxu0 %v554
        %780 = vmatprep.subr.mxu0 %v557
        %781 = vmatpush1.msra.mxu0 %v556
        %782 = vmatprep.subr.mxu0 %v559
        %783 = vmatpush1.msra.mxu0 %v558
        %784 = vmatprep.subr.mxu0 %v561
        %785 = vmatpush1.msra.mxu0 %v560
        %786 = vmatprep.subr.mxu0 %v563
        %787 = vmatpush1.msra.mxu0 %v562
        %788 = vmatprep.subr.mxu0 %v565
        %789 = vmatpush1.msra.mxu0 %v564
        %790 = vmatprep.subr.mxu0 %v567
        %791 = vmatpush1.msra.mxu0 %v566
        %792 = vmatprep.subr.mxu0 %v569
        %793 = vmatpush1.msra.mxu0 %v568
        %794 = vmatprep.subr.mxu0 %v571
        %795 = vmatpush1.msra.mxu0 %v570
        %796 = vmatprep.subr.mxu0 %v573
        %797 = vmatpush1.msra.mxu0 %v572
        %798 = vmatprep.subr.mxu0 %v575
        %799 = vmatpush1.msra.mxu0 %v574
        %800 = vmatprep.subr.mxu0 %v577
        %801 = vmatpush1.msra.mxu0 %v576
        %802 = vmatprep.subr.mxu0 %v579
        %803 = vmatpush1.msra.mxu0 %v578
        %804 = vmatprep.subr.mxu0 %v581
        %805 = vmatpush1.msra.mxu0 %v580
        %806 = vmatprep.subr.mxu0 %v583
        %807 = vmatpush1.msra.mxu0 %v582
        %808 = vmatprep.subr.mxu0 %v585
        %809 = vmatpush1.msra.mxu0 %v584
        %810 = vmatprep.subr.mxu0 %v587
        %811 = vmatpush1.msra.mxu0 %v586
        %812 = vmatprep.subr.mxu0 %v589
        %813 = vmatpush1.msra.mxu0 %v588
        %814 = vmatprep.subr.mxu0 %v591
        %815 = vmatpush1.msra.mxu0 %v590
        %816 = vmatprep.subr.mxu0 %v593
        %817 = vmatpush1.msra.mxu0 %v592
        %818 = vmatprep.subr.mxu0 %v595
        %819 = vmatpush1.msra.mxu0 %v594
        %820 = vmatprep.subr.mxu0 %v597
        %821 = vmatpush1.msra.mxu0 %v596
        %822 = vmatprep.subr.mxu0 %v599
        %823 = vmatpush1.msra.mxu0 %v598
        %824 = vmatprep.subr.mxu0 %v601
        %825 = vmatpush1.msra.mxu0 %v600
        %826 = vmatprep.subr.mxu0 %v603
        %827 = vmatpush1.msra.mxu0 %v602
        %828 = vmatprep.subr.mxu0 %v605
        %829 = vmatpush1.msra.mxu0 %v604
        %830 = vmatprep.mubr.f32.mxu0 %v529
        %831 = vmatmul.mubr.f32.gmra.mrb[0].mxu0 %v528
        %v832 = vpop.f32.mrb[0].mxu0
        %v833 = vadd.f32 %v738, %v832
        %v834 = vpop.f32.mrb[0].mxu0
        %v835 = vadd.f32 %v740, %v834
        %836 = vmatprep.mubr.f32.mxu0 %v531
        %837 = vmatmul.mubr.f32.gmra.mrb[0].mxu0 %v530
        %v838 = vpop.f32.mrb[0].mxu0
        %v839 = vadd.f32 %v744, %v838
        %v840 = vpop.f32.mrb[0].mxu0
        %v841 = vadd.f32 %v746, %v840
        %842 = vmatprep.mubr.f32.mxu0 %v533
        %843 = vmatmul.mubr.f32.gmra.mrb[0].mxu0 %v532
        %v844 = vpop.f32.mrb[0].mxu0
        %v845 = vadd.f32 %v750, %v844
        %v846 = vpop.f32.mrb[0].mxu0
        %v847 = vadd.f32 %v752, %v846
        %848 = vmatprep.mubr.f32.mxu0 %v535
        %849 = vmatmul.mubr.f32.gmra.mrb[0].mxu0 %v534
        %v850 = vpop.f32.mrb[0].mxu0
        %v851 = vadd.f32 %v756, %v850
        %v852 = vpop.f32.mrb[0].mxu0
        %v853 = vadd.f32 %v758, %v852
        %854 = vmatprep.mubr.f32.mxu0 %v537
        %855 = vmatmul.mubr.f32.gmra.mrb[0].mxu0 %v536
        %v856 = vpop.f32.mrb[0].mxu0
        %v857 = vadd.f32 %v762, %v856
        %v858 = vpop.f32.mrb[0].mxu0
        %v859 = vadd.f32 %v764, %v858
        %860 = vdwg.mxu0
        %s861 = scalar_lea.vmem %s3, 1024
        %v862 = vld [vmem:[%s861] sm:$0xff]
        %v863 = vld [vmem:[%s861 + $0x8] sm:$0xff]
        %v864 = vld [vmem:[%s861 + $0x10] sm:$0xff]
        %v865 = vld [vmem:[%s861 + $0x18] sm:$0xff]
        %v866 = vld [vmem:[%s861 + $0x20] sm:$0xff]
        %v867 = vld [vmem:[%s861 + $0x28] sm:$0xff]
        %v868 = vld [vmem:[%s861 + $0x30] sm:$0xff]
        %v869 = vld [vmem:[%s861 + $0x38] sm:$0xff]
        %v870 = vld [vmem:[%s861 + $0x40] sm:$0xff]
        %v871 = vld [vmem:[%s861 + $0x48] sm:$0xff]
        %v872 = vld [vmem:[%s861 + $0x50] sm:$0xff]
        %v873 = vld [vmem:[%s861 + $0x58] sm:$0xff]
        %v874 = vld [vmem:[%s861 + $0x60] sm:$0xff]
        %v875 = vld [vmem:[%s861 + $0x68] sm:$0xff]
        %v876 = vld [vmem:[%s861 + $0x70] sm:$0xff]
        %v877 = vld [vmem:[%s861 + $0x78] sm:$0xff]
        %v878 = vld [vmem:[%s861 + $0x80] sm:$0xff]
        %v879 = vld [vmem:[%s861 + $0x88] sm:$0xff]
        %v880 = vld [vmem:[%s861 + $0x90] sm:$0xff]
        %v881 = vld [vmem:[%s861 + $0x98] sm:$0xff]
        %v882 = vld [vmem:[%s861 + $0xa0] sm:$0xff]
        %v883 = vld [vmem:[%s861 + $0xa8] sm:$0xff]
        %v884 = vld [vmem:[%s861 + $0xb0] sm:$0xff]
        %v885 = vld [vmem:[%s861 + $0xb8] sm:$0xff]
        %v886 = vld [vmem:[%s861 + $0xc0] sm:$0xff]
        %v887 = vld [vmem:[%s861 + $0xc8] sm:$0xff]
        %v888 = vld [vmem:[%s861 + $0xd0] sm:$0xff]
        %v889 = vld [vmem:[%s861 + $0xd8] sm:$0xff]
        %v890 = vld [vmem:[%s861 + $0xe0] sm:$0xff]
        %v891 = vld [vmem:[%s861 + $0xe8] sm:$0xff]
        %v892 = vld [vmem:[%s861 + $0xf0] sm:$0xff]
        %v893 = vld [vmem:[%s861 + $0xf8] sm:$0xff]
        %v894 = vld [vmem:[%s861 + $0x100] sm:$0xff]
        %v895 = vld [vmem:[%s861 + $0x108] sm:$0xff]
        %v896 = vld [vmem:[%s861 + $0x110] sm:$0xff]
        %v897 = vld [vmem:[%s861 + $0x118] sm:$0xff]
        %v898 = vld [vmem:[%s861 + $0x120] sm:$0xff]
        %v899 = vld [vmem:[%s861 + $0x128] sm:$0xff]
        %v900 = vld [vmem:[%s861 + $0x130] sm:$0xff]
        %v901 = vld [vmem:[%s861 + $0x138] sm:$0xff]
        %v902 = vld [vmem:[%s861 + $0x140] sm:$0xff]
        %v903 = vld [vmem:[%s861 + $0x148] sm:$0xff]
        %v904 = vld [vmem:[%s861 + $0x150] sm:$0xff]
        %v905 = vld [vmem:[%s861 + $0x158] sm:$0xff]
        %v906 = vld [vmem:[%s861 + $0x160] sm:$0xff]
        %v907 = vld [vmem:[%s861 + $0x168] sm:$0xff]
        %v908 = vld [vmem:[%s861 + $0x170] sm:$0xff]
        %v909 = vld [vmem:[%s861 + $0x178] sm:$0xff]
        %v910 = vld [vmem:[%s861 + $0x180] sm:$0xff]
        %v911 = vld [vmem:[%s861 + $0x188] sm:$0xff]
        %v912 = vld [vmem:[%s861 + $0x190] sm:$0xff]
        %v913 = vld [vmem:[%s861 + $0x198] sm:$0xff]
        %v914 = vld [vmem:[%s861 + $0x1a0] sm:$0xff]
        %v915 = vld [vmem:[%s861 + $0x1a8] sm:$0xff]
        %v916 = vld [vmem:[%s861 + $0x1b0] sm:$0xff]
        %v917 = vld [vmem:[%s861 + $0x1b8] sm:$0xff]
        %v918 = vld [vmem:[%s861 + $0x1c0] sm:$0xff]
        %v919 = vld [vmem:[%s861 + $0x1c8] sm:$0xff]
        %v920 = vld [vmem:[%s861 + $0x1d0] sm:$0xff]
        %v921 = vld [vmem:[%s861 + $0x1d8] sm:$0xff]
        %v922 = vld [vmem:[%s861 + $0x1e0] sm:$0xff]
        %v923 = vld [vmem:[%s861 + $0x1e8] sm:$0xff]
        %v924 = vld [vmem:[%s861 + $0x1f0] sm:$0xff]
        %v925 = vld [vmem:[%s861 + $0x1f8] sm:$0xff]
        %926 = vmatprep.subr.mxu0 %v863
        %927 = vmatpush1.msra.mxu0 %v862
        %928 = vmatprep.subr.mxu0 %v865
        %929 = vmatpush1.msra.mxu0 %v864
        %930 = vmatprep.subr.mxu0 %v867
        %931 = vmatpush1.msra.mxu0 %v866
        %932 = vmatprep.subr.mxu0 %v869
        %933 = vmatpush1.msra.mxu0 %v868
        %934 = vmatprep.subr.mxu0 %v871
        %935 = vmatpush1.msra.mxu0 %v870
        %936 = vmatprep.subr.mxu0 %v873
        %937 = vmatpush1.msra.mxu0 %v872
        %938 = vmatprep.subr.mxu0 %v875
        %939 = vmatpush1.msra.mxu0 %v874
        %940 = vmatprep.subr.mxu0 %v877
        %941 = vmatpush1.msra.mxu0 %v876
        %942 = vmatprep.subr.mxu0 %v879
        %943 = vmatpush1.msra.mxu0 %v878
        %944 = vmatprep.subr.mxu0 %v881
        %945 = vmatpush1.msra.mxu0 %v880
        %946 = vmatprep.subr.mxu0 %v883
        %947 = vmatpush1.msra.mxu0 %v882
        %948 = vmatprep.subr.mxu0 %v885
        %949 = vmatpush1.msra.mxu0 %v884
        %950 = vmatprep.subr.mxu0 %v887
        %951 = vmatpush1.msra.mxu0 %v886
        %952 = vmatprep.subr.mxu0 %v889
        %953 = vmatpush1.msra.mxu0 %v888
        %954 = vmatprep.subr.mxu0 %v891
        %955 = vmatpush1.msra.mxu0 %v890
        %956 = vmatprep.subr.mxu0 %v893
        %957 = vmatpush1.msra.mxu0 %v892
        %958 = vmatprep.subr.mxu0 %v895
        %959 = vmatpush1.msra.mxu0 %v894
        %960 = vmatprep.subr.mxu0 %v897
        %961 = vmatpush1.msra.mxu0 %v896
        %962 = vmatprep.subr.mxu0 %v899
        %963 = vmatpush1.msra.mxu0 %v898
        %964 = vmatprep.subr.mxu0 %v901
        %965 = vmatpush1.msra.mxu0 %v900
        %966 = vmatprep.subr.mxu0 %v903
        %967 = vmatpush1.msra.mxu0 %v902
        %968 = vmatprep.subr.mxu0 %v905
        %969 = vmatpush1.msra.mxu0 %v904
        %970 = vmatprep.subr.mxu0 %v907
        %971 = vmatpush1.msra.mxu0 %v906
        %972 = vmatprep.subr.mxu0 %v909
        %973 = vmatpush1.msra.mxu0 %v908
        %974 = vmatprep.subr.mxu0 %v911
        %975 = vmatpush1.msra.mxu0 %v910
        %976 = vmatprep.subr.mxu0 %v913
        %977 = vmatpush1.msra.mxu0 %v912
        %978 = vmatprep.subr.mxu0 %v915
        %979 = vmatpush1.msra.mxu0 %v914
        %980 = vmatprep.subr.mxu0 %v917
        %981 = vmatpush1.msra.mxu0 %v916
        %982 = vmatprep.subr.mxu0 %v919
        %983 = vmatpush1.msra.mxu0 %v918
        %984 = vmatprep.subr.mxu0 %v921
        %985 = vmatpush1.msra.mxu0 %v920
        %986 = vmatprep.subr.mxu0 %v923
        %987 = vmatpush1.msra.mxu0 %v922
        %988 = vmatprep.subr.mxu0 %v925
        %989 = vmatpush1.msra.mxu0 %v924
        %990 = vmatprep.mubr.f32.mxu0 %v533
        %991 = vmatmul.mubr.f32.gmra.mrb[0].mxu0 %v532
        %v992 = vpop.f32.mrb[0].mxu0
        %v993 = vadd.f32 0.0, %v992
        %v994 = vpop.f32.mrb[0].mxu0
        %v995 = vadd.f32 0.0, %v994
        %996 = vmatprep.mubr.f32.mxu0 %v535
        %997 = vmatmul.mubr.f32.gmra.mrb[0].mxu0 %v534
        %v998 = vpop.f32.mrb[0].mxu0
        %v999 = vadd.f32 0.0, %v998
        %v1000 = vpop.f32.mrb[0].mxu0
        %v1001 = vadd.f32 0.0, %v1000
        %1002 = vmatprep.mubr.f32.mxu0 %v537
        %1003 = vmatmul.mubr.f32.gmra.mrb[0].mxu0 %v536
        %v1004 = vpop.f32.mrb[0].mxu0
        %v1005 = vadd.f32 0.0, %v1004
        %v1006 = vpop.f32.mrb[0].mxu0
        %v1007 = vadd.f32 0.0, %v1006
        %1008 = vmatprep.mubr.f32.mxu0 %v539
        %1009 = vmatmul.mubr.f32.gmra.mrb[0].mxu0 %v538
        %v1010 = vpop.f32.mrb[0].mxu0
        %v1011 = vadd.f32 0.0, %v1010
        %v1012 = vpop.f32.mrb[0].mxu0
        %v1013 = vadd.f32 0.0, %v1012
        %1014 = vmatprep.mubr.f32.mxu0 %v541
        %1015 = vmatmul.mubr.f32.gmra.mrb[0].mxu0 %v540
        %v1016 = vpop.f32.mrb[0].mxu0
        %v1017 = vadd.f32 0.0, %v1016
        %v1018 = vpop.f32.mrb[0].mxu0
        %v1019 = vadd.f32 0.0, %v1018
        %1020 = vdwg.mxu0
        %v1021 = vadd.f32 %v833, %v993
        %v1022 = vadd.f32 %v835, %v995
        %v1023 = vadd.f32 %v839, %v999
        %v1024 = vadd.f32 %v841, %v1001
        %v1025 = vadd.f32 %v845, %v1005
        %v1026 = vadd.f32 %v847, %v1007
        %v1027 = vadd.f32 %v851, %v1011
        %v1028 = vadd.f32 %v853, %v1013
        %v1029 = vadd.f32 %v857, %v1017
        %v1030 = vadd.f32 %v859, %v1019
        %v1031 = vld [vmem:[%s4] sm:$0x3]
        %v1033 = vlaneseq
        %v1034 = vshrl.u32 %v1033, 7
        %v1035 = vsub.s32 0, %v1034
        %v1036 = vrot.slane %v1031, %v1035
        %v1037 = vlaneseq
        %v1038 = vshrl.u32 %v1037, 7
        %v1039 = vsub.s32 1, %v1038
        %v1040 = vrot.slane %v1031, %v1039
        %v1043 = vadd.f32 %v1021, %v1036
        %v1044 = vadd.f32 %v1022, %v1040
        %v1045 = vadd.f32 %v1023, %v1036
        %v1046 = vadd.f32 %v1024, %v1040
        %v1047 = vadd.f32 %v1025, %v1036
        %v1048 = vadd.f32 %v1026, %v1040
        %v1049 = vadd.f32 %v1027, %v1036
        %v1050 = vadd.f32 %v1028, %v1040
        %v1051 = vadd.f32 %v1029, %v1036
        %v1052 = vadd.f32 %v1030, %v1040
        %v1053 = vmax.f32 %v1043, 0.0
        %v1054 = vmax.f32 %v1044, 0.0
        %v1055 = vmax.f32 %v1045, 0.0
        %v1056 = vmax.f32 %v1046, 0.0
        %v1057 = vmax.f32 %v1047, 0.0
        %v1058 = vmax.f32 %v1048, 0.0
        %v1059 = vmax.f32 %v1049, 0.0
        %v1060 = vmax.f32 %v1050, 0.0
        %v1061 = vmax.f32 %v1051, 0.0
        %v1062 = vmax.f32 %v1052, 0.0
        %v1063 = vld [vmem:[%s5] sm:$0xff]
        %v1064 = vld [vmem:[%s5 + $0x8] sm:$0xff]
        %v1065 = vld [vmem:[%s5 + $0x10] sm:$0xff]
        %v1066 = vld [vmem:[%s5 + $0x18] sm:$0xff]
        %v1067 = vld [vmem:[%s5 + $0x20] sm:$0xff]
        %v1068 = vld [vmem:[%s5 + $0x28] sm:$0xff]
        %v1069 = vld [vmem:[%s5 + $0x30] sm:$0xff]
        %v1070 = vld [vmem:[%s5 + $0x38] sm:$0xff]
        %v1071 = vld [vmem:[%s5 + $0x40] sm:$0xff]
        %v1072 = vld [vmem:[%s5 + $0x48] sm:$0xff]
        %v1073 = vld [vmem:[%s5 + $0x50] sm:$0xff]
        %v1074 = vld [vmem:[%s5 + $0x58] sm:$0xff]
        %v1075 = vld [vmem:[%s5 + $0x60] sm:$0xff]
        %v1076 = vld [vmem:[%s5 + $0x68] sm:$0xff]
        %v1077 = vld [vmem:[%s5 + $0x70] sm:$0xff]
        %v1078 = vld [vmem:[%s5 + $0x78] sm:$0xff]
        %v1079 = vld [vmem:[%s5 + $0x80] sm:$0xff]
        %v1080 = vld [vmem:[%s5 + $0x88] sm:$0xff]
        %v1081 = vld [vmem:[%s5 + $0x90] sm:$0xff]
        %v1082 = vld [vmem:[%s5 + $0x98] sm:$0xff]
        %v1083 = vld [vmem:[%s5 + $0xa0] sm:$0xff]
        %v1084 = vld [vmem:[%s5 + $0xa8] sm:$0xff]
        %v1085 = vld [vmem:[%s5 + $0xb0] sm:$0xff]
        %v1086 = vld [vmem:[%s5 + $0xb8] sm:$0xff]
        %v1087 = vld [vmem:[%s5 + $0xc0] sm:$0xff]
        %v1088 = vld [vmem:[%s5 + $0xc8] sm:$0xff]
        %v1089 = vld [vmem:[%s5 + $0xd0] sm:$0xff]
        %v1090 = vld [vmem:[%s5 + $0xd8] sm:$0xff]
        %v1091 = vld [vmem:[%s5 + $0xe0] sm:$0xff]
        %v1092 = vld [vmem:[%s5 + $0xe8] sm:$0xff]
        %v1093 = vld [vmem:[%s5 + $0xf0] sm:$0xff]
        %v1094 = vld [vmem:[%s5 + $0xf8] sm:$0xff]
        %s1095 = scalar_lea.vmem %s5, 256
        %v1096 = vld [vmem:[%s1095] sm:$0xff]
        %v1097 = vld [vmem:[%s1095 + $0x8] sm:$0xff]
        %v1098 = vld [vmem:[%s1095 + $0x10] sm:$0xff]
        %v1099 = vld [vmem:[%s1095 + $0x18] sm:$0xff]
        %v1100 = vld [vmem:[%s1095 + $0x20] sm:$0xff]
        %v1101 = vld [vmem:[%s1095 + $0x28] sm:$0xff]
        %v1102 = vld [vmem:[%s1095 + $0x30] sm:$0xff]
        %v1103 = vld [vmem:[%s1095 + $0x38] sm:$0xff]
        %v1104 = vld [vmem:[%s1095 + $0x40] sm:$0xff]
        %v1105 = vld [vmem:[%s1095 + $0x48] sm:$0xff]
        %v1106 = vld [vmem:[%s1095 + $0x50] sm:$0xff]
        %v1107 = vld [vmem:[%s1095 + $0x58] sm:$0xff]
        %v1108 = vld [vmem:[%s1095 + $0x60] sm:$0xff]
        %v1109 = vld [vmem:[%s1095 + $0x68] sm:$0xff]
        %v1110 = vld [vmem:[%s1095 + $0x70] sm:$0xff]
        %v1111 = vld [vmem:[%s1095 + $0x78] sm:$0xff]
        %v1112 = vld [vmem:[%s1095 + $0x80] sm:$0xff]
        %v1113 = vld [vmem:[%s1095 + $0x88] sm:$0xff]
        %v1114 = vld [vmem:[%s1095 + $0x90] sm:$0xff]
        %v1115 = vld [vmem:[%s1095 + $0x98] sm:$0xff]
        %v1116 = vld [vmem:[%s1095 + $0xa0] sm:$0xff]
        %v1117 = vld [vmem:[%s1095 + $0xa8] sm:$0xff]
        %v1118 = vld [vmem:[%s1095 + $0xb0] sm:$0xff]
        %v1119 = vld [vmem:[%s1095 + $0xb8] sm:$0xff]
        %v1120 = vld [vmem:[%s1095 + $0xc0] sm:$0xff]
        %v1121 = vld [vmem:[%s1095 + $0xc8] sm:$0xff]
        %v1122 = vld [vmem:[%s1095 + $0xd0] sm:$0xff]
        %v1123 = vld [vmem:[%s1095 + $0xd8] sm:$0xff]
        %v1124 = vld [vmem:[%s1095 + $0xe0] sm:$0xff]
        %v1125 = vld [vmem:[%s1095 + $0xe8] sm:$0xff]
        %v1126 = vld [vmem:[%s1095 + $0xf0] sm:$0xff]
        %v1127 = vld [vmem:[%s1095 + $0xf8] sm:$0xff]
        %1128 = vmatprep.subr.mxu0 0.0
        %1129 = vmatpush1.msra.mxu0 %v1096
        %1130 = vmatprep.subr.mxu0 0.0
        %1131 = vmatpush1.msra.mxu0 %v1097
        %1132 = vmatprep.subr.mxu0 0.0
        %1133 = vmatpush1.msra.mxu0 %v1098
        %1134 = vmatprep.subr.mxu0 0.0
        %1135 = vmatpush1.msra.mxu0 %v1099
        %1136 = vmatprep.subr.mxu0 0.0
        %1137 = vmatpush1.msra.mxu0 %v1100
        %1138 = vmatprep.subr.mxu0 0.0
        %1139 = vmatpush1.msra.mxu0 %v1101
        %1140 = vmatprep.subr.mxu0 0.0
        %1141 = vmatpush1.msra.mxu0 %v1102
        %1142 = vmatprep.subr.mxu0 0.0
        %1143 = vmatpush1.msra.mxu0 %v1103
        %1144 = vmatprep.subr.mxu0 0.0
        %1145 = vmatpush1.msra.mxu0 %v1104
        %1146 = vmatprep.subr.mxu0 0.0
        %1147 = vmatpush1.msra.mxu0 %v1105
        %1148 = vmatprep.subr.mxu0 0.0
        %1149 = vmatpush1.msra.mxu0 %v1106
        %1150 = vmatprep.subr.mxu0 0.0
        %1151 = vmatpush1.msra.mxu0 %v1107
        %1152 = vmatprep.subr.mxu0 0.0
        %1153 = vmatpush1.msra.mxu0 %v1108
        %1154 = vmatprep.subr.mxu0 0.0
        %1155 = vmatpush1.msra.mxu0 %v1109
        %1156 = vmatprep.subr.mxu0 0.0
        %1157 = vmatpush1.msra.mxu0 %v1110
        %1158 = vmatprep.subr.mxu0 0.0
        %1159 = vmatpush1.msra.mxu0 %v1111
        %1160 = vmatprep.subr.mxu0 0.0
        %1161 = vmatpush1.msra.mxu0 %v1112
        %1162 = vmatprep.subr.mxu0 0.0
        %1163 = vmatpush1.msra.mxu0 %v1113
        %1164 = vmatprep.subr.mxu0 0.0
        %1165 = vmatpush1.msra.mxu0 %v1114
        %1166 = vmatprep.subr.mxu0 0.0
        %1167 = vmatpush1.msra.mxu0 %v1115
        %1168 = vmatprep.subr.mxu0 0.0
        %1169 = vmatpush1.msra.mxu0 %v1116
        %1170 = vmatprep.subr.mxu0 0.0
        %1171 = vmatpush1.msra.mxu0 %v1117
        %1172 = vmatprep.subr.mxu0 0.0
        %1173 = vmatpush1.msra.mxu0 %v1118
        %1174 = vmatprep.subr.mxu0 0.0
        %1175 = vmatpush1.msra.mxu0 %v1119
        %1176 = vmatprep.subr.mxu0 0.0
        %1177 = vmatpush1.msra.mxu0 %v1120
        %1178 = vmatprep.subr.mxu0 0.0
        %1179 = vmatpush1.msra.mxu0 %v1121
        %1180 = vmatprep.subr.mxu0 0.0
        %1181 = vmatpush1.msra.mxu0 %v1122
        %1182 = vmatprep.subr.mxu0 0.0
        %1183 = vmatpush1.msra.mxu0 %v1123
        %1184 = vmatprep.subr.mxu0 0.0
        %1185 = vmatpush1.msra.mxu0 %v1124
        %1186 = vmatprep.subr.mxu0 0.0
        %1187 = vmatpush1.msra.mxu0 %v1125
        %1188 = vmatprep.subr.mxu0 0.0
        %1189 = vmatpush1.msra.mxu0 %v1126
        %1190 = vmatprep.subr.mxu0 0.0
        %1191 = vmatpush1.msra.mxu0 %v1127
        %1192 = vmatprep.mubr.f32.mxu0 %v1056
        %1193 = vmatmul.mubr.f32.gmra.mrb[0].mxu0 %v1055
        %v1194 = vpop.f32.mrb[0].mxu0
        %v1195 = vadd.f32 0.0, %v1194
        %v1196 = vpop.f32.mrb[0].mxu0
        %1197 = vdwg.mxu0
        %1198 = vmatprep.subr.mxu0 0.0
        %1199 = vmatpush1.msra.mxu0 %v1063
        %1200 = vmatprep.subr.mxu0 0.0
        %1201 = vmatpush1.msra.mxu0 %v1064
        %1202 = vmatprep.subr.mxu0 0.0
        %1203 = vmatpush1.msra.mxu0 %v1065
        %1204 = vmatprep.subr.mxu0 0.0
        %1205 = vmatpush1.msra.mxu0 %v1066
        %1206 = vmatprep.subr.mxu0 0.0
        %1207 = vmatpush1.msra.mxu0 %v1067
        %1208 = vmatprep.subr.mxu0 0.0
        %1209 = vmatpush1.msra.mxu0 %v1068
        %1210 = vmatprep.subr.mxu0 0.0
        %1211 = vmatpush1.msra.mxu0 %v1069
        %1212 = vmatprep.subr.mxu0 0.0
        %1213 = vmatpush1.msra.mxu0 %v1070
        %1214 = vmatprep.subr.mxu0 0.0
        %1215 = vmatpush1.msra.mxu0 %v1071
        %1216 = vmatprep.subr.mxu0 0.0
        %1217 = vmatpush1.msra.mxu0 %v1072
        %1218 = vmatprep.subr.mxu0 0.0
        %1219 = vmatpush1.msra.mxu0 %v1073
        %1220 = vmatprep.subr.mxu0 0.0
        %1221 = vmatpush1.msra.mxu0 %v1074
        %1222 = vmatprep.subr.mxu0 0.0
        %1223 = vmatpush1.msra.mxu0 %v1075
        %1224 = vmatprep.subr.mxu0 0.0
        %1225 = vmatpush1.msra.mxu0 %v1076
        %1226 = vmatprep.subr.mxu0 0.0
        %1227 = vmatpush1.msra.mxu0 %v1077
        %1228 = vmatprep.subr.mxu0 0.0
        %1229 = vmatpush1.msra.mxu0 %v1078
        %1230 = vmatprep.subr.mxu0 0.0
        %1231 = vmatpush1.msra.mxu0 %v1079
        %1232 = vmatprep.subr.mxu0 0.0
        %1233 = vmatpush1.msra.mxu0 %v1080
        %1234 = vmatprep.subr.mxu0 0.0
        %1235 = vmatpush1.msra.mxu0 %v1081
        %1236 = vmatprep.subr.mxu0 0.0
        %1237 = vmatpush1.msra.mxu0 %v1082
        %1238 = vmatprep.subr.mxu0 0.0
        %1239 = vmatpush1.msra.mxu0 %v1083
        %1240 = vmatprep.subr.mxu0 0.0
        %1241 = vmatpush1.msra.mxu0 %v1084
        %1242 = vmatprep.subr.mxu0 0.0
        %1243 = vmatpush1.msra.mxu0 %v1085
        %1244 = vmatprep.subr.mxu0 0.0
        %1245 = vmatpush1.msra.mxu0 %v1086
        %1246 = vmatprep.subr.mxu0 0.0
        %1247 = vmatpush1.msra.mxu0 %v1087
        %1248 = vmatprep.subr.mxu0 0.0
        %1249 = vmatpush1.msra.mxu0 %v1088
        %1250 = vmatprep.subr.mxu0 0.0
        %1251 = vmatpush1.msra.mxu0 %v1089
        %1252 = vmatprep.subr.mxu0 0.0
        %1253 = vmatpush1.msra.mxu0 %v1090
        %1254 = vmatprep.subr.mxu0 0.0
        %1255 = vmatpush1.msra.mxu0 %v1091
        %1256 = vmatprep.subr.mxu0 0.0
        %1257 = vmatpush1.msra.mxu0 %v1092
        %1258 = vmatprep.subr.mxu0 0.0
        %1259 = vmatpush1.msra.mxu0 %v1093
        %1260 = vmatprep.subr.mxu0 0.0
        %1261 = vmatpush1.msra.mxu0 %v1094
        %1262 = vmatprep.mubr.f32.mxu0 %v1054
        %1263 = vmatmul.mubr.f32.gmra.mrb[0].mxu0 %v1053
        %v1264 = vpop.f32.mrb[0].mxu0
        %v1265 = vadd.f32 %v1195, %v1264
        %v1266 = vpop.f32.mrb[0].mxu0
        %1267 = vdwg.mxu0
        %s1268 = scalar_lea.vmem %s5, 512
        %v1269 = vld [vmem:[%s1268] sm:$0xff]
        %v1270 = vld [vmem:[%s1268 + $0x8] sm:$0xff]
        %v1271 = vld [vmem:[%s1268 + $0x10] sm:$0xff]
        %v1272 = vld [vmem:[%s1268 + $0x18] sm:$0xff]
        %v1273 = vld [vmem:[%s1268 + $0x20] sm:$0xff]
        %v1274 = vld [vmem:[%s1268 + $0x28] sm:$0xff]
        %v1275 = vld [vmem:[%s1268 + $0x30] sm:$0xff]
        %v1276 = vld [vmem:[%s1268 + $0x38] sm:$0xff]
        %v1277 = vld [vmem:[%s1268 + $0x40] sm:$0xff]
        %v1278 = vld [vmem:[%s1268 + $0x48] sm:$0xff]
        %v1279 = vld [vmem:[%s1268 + $0x50] sm:$0xff]
        %v1280 = vld [vmem:[%s1268 + $0x58] sm:$0xff]
        %v1281 = vld [vmem:[%s1268 + $0x60] sm:$0xff]
        %v1282 = vld [vmem:[%s1268 + $0x68] sm:$0xff]
        %v1283 = vld [vmem:[%s1268 + $0x70] sm:$0xff]
        %v1284 = vld [vmem:[%s1268 + $0x78] sm:$0xff]
        %v1285 = vld [vmem:[%s1268 + $0x80] sm:$0xff]
        %v1286 = vld [vmem:[%s1268 + $0x88] sm:$0xff]
        %v1287 = vld [vmem:[%s1268 + $0x90] sm:$0xff]
        %v1288 = vld [vmem:[%s1268 + $0x98] sm:$0xff]
        %v1289 = vld [vmem:[%s1268 + $0xa0] sm:$0xff]
        %v1290 = vld [vmem:[%s1268 + $0xa8] sm:$0xff]
        %v1291 = vld [vmem:[%s1268 + $0xb0] sm:$0xff]
        %v1292 = vld [vmem:[%s1268 + $0xb8] sm:$0xff]
        %v1293 = vld [vmem:[%s1268 + $0xc0] sm:$0xff]
        %v1294 = vld [vmem:[%s1268 + $0xc8] sm:$0xff]
        %v1295 = vld [vmem:[%s1268 + $0xd0] sm:$0xff]
        %v1296 = vld [vmem:[%s1268 + $0xd8] sm:$0xff]
        %v1297 = vld [vmem:[%s1268 + $0xe0] sm:$0xff]
        %v1298 = vld [vmem:[%s1268 + $0xe8] sm:$0xff]
        %v1299 = vld [vmem:[%s1268 + $0xf0] sm:$0xff]
        %v1300 = vld [vmem:[%s1268 + $0xf8] sm:$0xff]
        %1301 = vmatprep.subr.mxu0 0.0
        %1302 = vmatpush1.msra.mxu0 %v1269
        %1303 = vmatprep.subr.mxu0 0.0
        %1304 = vmatpush1.msra.mxu0 %v1270
        %1305 = vmatprep.subr.mxu0 0.0
        %1306 = vmatpush1.msra.mxu0 %v1271
        %1307 = vmatprep.subr.mxu0 0.0
        %1308 = vmatpush1.msra.mxu0 %v1272
        %1309 = vmatprep.subr.mxu0 0.0
        %1310 = vmatpush1.msra.mxu0 %v1273
        %1311 = vmatprep.subr.mxu0 0.0
        %1312 = vmatpush1.msra.mxu0 %v1274
        %1313 = vmatprep.subr.mxu0 0.0
        %1314 = vmatpush1.msra.mxu0 %v1275
        %1315 = vmatprep.subr.mxu0 0.0
        %1316 = vmatpush1.msra.mxu0 %v1276
        %1317 = vmatprep.subr.mxu0 0.0
        %1318 = vmatpush1.msra.mxu0 %v1277
        %1319 = vmatprep.subr.mxu0 0.0
        %1320 = vmatpush1.msra.mxu0 %v1278
        %1321 = vmatprep.subr.mxu0 0.0
        %1322 = vmatpush1.msra.mxu0 %v1279
        %1323 = vmatprep.subr.mxu0 0.0
        %1324 = vmatpush1.msra.mxu0 %v1280
        %1325 = vmatprep.subr.mxu0 0.0
        %1326 = vmatpush1.msra.mxu0 %v1281
        %1327 = vmatprep.subr.mxu0 0.0
        %1328 = vmatpush1.msra.mxu0 %v1282
        %1329 = vmatprep.subr.mxu0 0.0
        %1330 = vmatpush1.msra.mxu0 %v1283
        %1331 = vmatprep.subr.mxu0 0.0
        %1332 = vmatpush1.msra.mxu0 %v1284
        %1333 = vmatprep.subr.mxu0 0.0
        %1334 = vmatpush1.msra.mxu0 %v1285
        %1335 = vmatprep.subr.mxu0 0.0
        %1336 = vmatpush1.msra.mxu0 %v1286
        %1337 = vmatprep.subr.mxu0 0.0
        %1338 = vmatpush1.msra.mxu0 %v1287
        %1339 = vmatprep.subr.mxu0 0.0
        %1340 = vmatpush1.msra.mxu0 %v1288
        %1341 = vmatprep.subr.mxu0 0.0
        %1342 = vmatpush1.msra.mxu0 %v1289
        %1343 = vmatprep.subr.mxu0 0.0
        %1344 = vmatpush1.msra.mxu0 %v1290
        %1345 = vmatprep.subr.mxu0 0.0
        %1346 = vmatpush1.msra.mxu0 %v1291
        %1347 = vmatprep.subr.mxu0 0.0
        %1348 = vmatpush1.msra.mxu0 %v1292
        %1349 = vmatprep.subr.mxu0 0.0
        %1350 = vmatpush1.msra.mxu0 %v1293
        %1351 = vmatprep.subr.mxu0 0.0
        %1352 = vmatpush1.msra.mxu0 %v1294
        %1353 = vmatprep.subr.mxu0 0.0
        %1354 = vmatpush1.msra.mxu0 %v1295
        %1355 = vmatprep.subr.mxu0 0.0
        %1356 = vmatpush1.msra.mxu0 %v1296
        %1357 = vmatprep.subr.mxu0 0.0
        %1358 = vmatpush1.msra.mxu0 %v1297
        %1359 = vmatprep.subr.mxu0 0.0
        %1360 = vmatpush1.msra.mxu0 %v1298
        %1361 = vmatprep.subr.mxu0 0.0
        %1362 = vmatpush1.msra.mxu0 %v1299
        %1363 = vmatprep.subr.mxu0 0.0
        %1364 = vmatpush1.msra.mxu0 %v1300
        %1365 = vmatprep.mubr.f32.mxu0 %v1058
        %1366 = vmatmul.mubr.f32.gmra.mrb[0].mxu0 %v1057
        %v1367 = vpop.f32.mrb[0].mxu0
        %v1368 = vadd.f32 0.0, %v1367
        %v1369 = vpop.f32.mrb[0].mxu0
        %1370 = vdwg.mxu0
        %v1371 = vadd.f32 %v1265, %v1368
        %s1372 = scalar_lea.vmem %s5, 768
        %v1373 = vld [vmem:[%s1372] sm:$0xff]
        %v1374 = vld [vmem:[%s1372 + $0x8] sm:$0xff]
        %v1375 = vld [vmem:[%s1372 + $0x10] sm:$0xff]
        %v1376 = vld [vmem:[%s1372 + $0x18] sm:$0xff]
        %v1377 = vld [vmem:[%s1372 + $0x20] sm:$0xff]
        %v1378 = vld [vmem:[%s1372 + $0x28] sm:$0xff]
        %v1379 = vld [vmem:[%s1372 + $0x30] sm:$0xff]
        %v1380 = vld [vmem:[%s1372 + $0x38] sm:$0xff]
        %v1381 = vld [vmem:[%s1372 + $0x40] sm:$0xff]
        %v1382 = vld [vmem:[%s1372 + $0x48] sm:$0xff]
        %v1383 = vld [vmem:[%s1372 + $0x50] sm:$0xff]
        %v1384 = vld [vmem:[%s1372 + $0x58] sm:$0xff]
        %v1385 = vld [vmem:[%s1372 + $0x60] sm:$0xff]
        %v1386 = vld [vmem:[%s1372 + $0x68] sm:$0xff]
        %v1387 = vld [vmem:[%s1372 + $0x70] sm:$0xff]
        %v1388 = vld [vmem:[%s1372 + $0x78] sm:$0xff]
        %v1389 = vld [vmem:[%s1372 + $0x80] sm:$0xff]
        %v1390 = vld [vmem:[%s1372 + $0x88] sm:$0xff]
        %v1391 = vld [vmem:[%s1372 + $0x90] sm:$0xff]
        %v1392 = vld [vmem:[%s1372 + $0x98] sm:$0xff]
        %v1393 = vld [vmem:[%s1372 + $0xa0] sm:$0xff]
        %v1394 = vld [vmem:[%s1372 + $0xa8] sm:$0xff]
        %v1395 = vld [vmem:[%s1372 + $0xb0] sm:$0xff]
        %v1396 = vld [vmem:[%s1372 + $0xb8] sm:$0xff]
        %v1397 = vld [vmem:[%s1372 + $0xc0] sm:$0xff]
        %v1398 = vld [vmem:[%s1372 + $0xc8] sm:$0xff]
        %v1399 = vld [vmem:[%s1372 + $0xd0] sm:$0xff]
        %v1400 = vld [vmem:[%s1372 + $0xd8] sm:$0xff]
        %v1401 = vld [vmem:[%s1372 + $0xe0] sm:$0xff]
        %v1402 = vld [vmem:[%s1372 + $0xe8] sm:$0xff]
        %v1403 = vld [vmem:[%s1372 + $0xf0] sm:$0xff]
        %v1404 = vld [vmem:[%s1372 + $0xf8] sm:$0xff]
        %1405 = vmatprep.subr.mxu0 0.0
        %1406 = vmatpush1.msra.mxu0 %v1373
        %1407 = vmatprep.subr.mxu0 0.0
        %1408 = vmatpush1.msra.mxu0 %v1374
        %1409 = vmatprep.subr.mxu0 0.0
        %1410 = vmatpush1.msra.mxu0 %v1375
        %1411 = vmatprep.subr.mxu0 0.0
        %1412 = vmatpush1.msra.mxu0 %v1376
        %1413 = vmatprep.subr.mxu0 0.0
        %1414 = vmatpush1.msra.mxu0 %v1377
        %1415 = vmatprep.subr.mxu0 0.0
        %1416 = vmatpush1.msra.mxu0 %v1378
        %1417 = vmatprep.subr.mxu0 0.0
        %1418 = vmatpush1.msra.mxu0 %v1379
        %1419 = vmatprep.subr.mxu0 0.0
        %1420 = vmatpush1.msra.mxu0 %v1380
        %1421 = vmatprep.subr.mxu0 0.0
        %1422 = vmatpush1.msra.mxu0 %v1381
        %1423 = vmatprep.subr.mxu0 0.0
        %1424 = vmatpush1.msra.mxu0 %v1382
        %1425 = vmatprep.subr.mxu0 0.0
        %1426 = vmatpush1.msra.mxu0 %v1383
        %1427 = vmatprep.subr.mxu0 0.0
        %1428 = vmatpush1.msra.mxu0 %v1384
        %1429 = vmatprep.subr.mxu0 0.0
        %1430 = vmatpush1.msra.mxu0 %v1385
        %1431 = vmatprep.subr.mxu0 0.0
        %1432 = vmatpush1.msra.mxu0 %v1386
        %1433 = vmatprep.subr.mxu0 0.0
        %1434 = vmatpush1.msra.mxu0 %v1387
        %1435 = vmatprep.subr.mxu0 0.0
        %1436 = vmatpush1.msra.mxu0 %v1388
        %1437 = vmatprep.subr.mxu0 0.0
        %1438 = vmatpush1.msra.mxu0 %v1389
        %1439 = vmatprep.subr.mxu0 0.0
        %1440 = vmatpush1.msra.mxu0 %v1390
        %1441 = vmatprep.subr.mxu0 0.0
        %1442 = vmatpush1.msra.mxu0 %v1391
        %1443 = vmatprep.subr.mxu0 0.0
        %1444 = vmatpush1.msra.mxu0 %v1392
        %1445 = vmatprep.subr.mxu0 0.0
        %1446 = vmatpush1.msra.mxu0 %v1393
        %1447 = vmatprep.subr.mxu0 0.0
        %1448 = vmatpush1.msra.mxu0 %v1394
        %1449 = vmatprep.subr.mxu0 0.0
        %1450 = vmatpush1.msra.mxu0 %v1395
        %1451 = vmatprep.subr.mxu0 0.0
        %1452 = vmatpush1.msra.mxu0 %v1396
        %1453 = vmatprep.subr.mxu0 0.0
        %1454 = vmatpush1.msra.mxu0 %v1397
        %1455 = vmatprep.subr.mxu0 0.0
        %1456 = vmatpush1.msra.mxu0 %v1398
        %1457 = vmatprep.subr.mxu0 0.0
        %1458 = vmatpush1.msra.mxu0 %v1399
        %1459 = vmatprep.subr.mxu0 0.0
        %1460 = vmatpush1.msra.mxu0 %v1400
        %1461 = vmatprep.subr.mxu0 0.0
        %1462 = vmatpush1.msra.mxu0 %v1401
        %1463 = vmatprep.subr.mxu0 0.0
        %1464 = vmatpush1.msra.mxu0 %v1402
        %1465 = vmatprep.subr.mxu0 0.0
        %1466 = vmatpush1.msra.mxu0 %v1403
        %1467 = vmatprep.subr.mxu0 0.0
        %1468 = vmatpush1.msra.mxu0 %v1404
        %1469 = vmatprep.mubr.f32.mxu0 %v1060
        %1470 = vmatmul.mubr.f32.gmra.mrb[0].mxu0 %v1059
        %v1471 = vpop.f32.mrb[0].mxu0
        %v1472 = vadd.f32 0.0, %v1471
        %v1473 = vpop.f32.mrb[0].mxu0
        %1474 = vdwg.mxu0
        %v1475 = vadd.f32 %v1371, %v1472
        %s1476 = scalar_lea.vmem %s5, 1024
        %v1477 = vld [vmem:[%s1476] sm:$0xff]
        %v1478 = vld [vmem:[%s1476 + $0x8] sm:$0xff]
        %v1479 = vld [vmem:[%s1476 + $0x10] sm:$0xff]
        %v1480 = vld [vmem:[%s1476 + $0x18] sm:$0xff]
        %v1481 = vld [vmem:[%s1476 + $0x20] sm:$0xff]
        %v1482 = vld [vmem:[%s1476 + $0x28] sm:$0xff]
        %v1483 = vld [vmem:[%s1476 + $0x30] sm:$0xff]
        %v1484 = vld [vmem:[%s1476 + $0x38] sm:$0xff]
        %v1485 = vld [vmem:[%s1476 + $0x40] sm:$0xff]
        %v1486 = vld [vmem:[%s1476 + $0x48] sm:$0xff]
        %v1487 = vld [vmem:[%s1476 + $0x50] sm:$0xff]
        %v1488 = vld [vmem:[%s1476 + $0x58] sm:$0xff]
        %v1489 = vld [vmem:[%s1476 + $0x60] sm:$0xff]
        %v1490 = vld [vmem:[%s1476 + $0x68] sm:$0xff]
        %v1491 = vld [vmem:[%s1476 + $0x70] sm:$0xff]
        %v1492 = vld [vmem:[%s1476 + $0x78] sm:$0xff]
        %v1493 = vld [vmem:[%s1476 + $0x80] sm:$0xff]
        %v1494 = vld [vmem:[%s1476 + $0x88] sm:$0xff]
        %v1495 = vld [vmem:[%s1476 + $0x90] sm:$0xff]
        %v1496 = vld [vmem:[%s1476 + $0x98] sm:$0xff]
        %v1497 = vld [vmem:[%s1476 + $0xa0] sm:$0xff]
        %v1498 = vld [vmem:[%s1476 + $0xa8] sm:$0xff]
        %v1499 = vld [vmem:[%s1476 + $0xb0] sm:$0xff]
        %v1500 = vld [vmem:[%s1476 + $0xb8] sm:$0xff]
        %v1501 = vld [vmem:[%s1476 + $0xc0] sm:$0xff]
        %v1502 = vld [vmem:[%s1476 + $0xc8] sm:$0xff]
        %v1503 = vld [vmem:[%s1476 + $0xd0] sm:$0xff]
        %v1504 = vld [vmem:[%s1476 + $0xd8] sm:$0xff]
        %v1505 = vld [vmem:[%s1476 + $0xe0] sm:$0xff]
        %v1506 = vld [vmem:[%s1476 + $0xe8] sm:$0xff]
        %v1507 = vld [vmem:[%s1476 + $0xf0] sm:$0xff]
        %v1508 = vld [vmem:[%s1476 + $0xf8] sm:$0xff]
        %1509 = vmatprep.subr.mxu0 0.0
        %1510 = vmatpush1.msra.mxu0 %v1477
        %1511 = vmatprep.subr.mxu0 0.0
        %1512 = vmatpush1.msra.mxu0 %v1478
        %1513 = vmatprep.subr.mxu0 0.0
        %1514 = vmatpush1.msra.mxu0 %v1479
        %1515 = vmatprep.subr.mxu0 0.0
        %1516 = vmatpush1.msra.mxu0 %v1480
        %1517 = vmatprep.subr.mxu0 0.0
        %1518 = vmatpush1.msra.mxu0 %v1481
        %1519 = vmatprep.subr.mxu0 0.0
        %1520 = vmatpush1.msra.mxu0 %v1482
        %1521 = vmatprep.subr.mxu0 0.0
        %1522 = vmatpush1.msra.mxu0 %v1483
        %1523 = vmatprep.subr.mxu0 0.0
        %1524 = vmatpush1.msra.mxu0 %v1484
        %1525 = vmatprep.subr.mxu0 0.0
        %1526 = vmatpush1.msra.mxu0 %v1485
        %1527 = vmatprep.subr.mxu0 0.0
        %1528 = vmatpush1.msra.mxu0 %v1486
        %1529 = vmatprep.subr.mxu0 0.0
        %1530 = vmatpush1.msra.mxu0 %v1487
        %1531 = vmatprep.subr.mxu0 0.0
        %1532 = vmatpush1.msra.mxu0 %v1488
        %1533 = vmatprep.subr.mxu0 0.0
        %1534 = vmatpush1.msra.mxu0 %v1489
        %1535 = vmatprep.subr.mxu0 0.0
        %1536 = vmatpush1.msra.mxu0 %v1490
        %1537 = vmatprep.subr.mxu0 0.0
        %1538 = vmatpush1.msra.mxu0 %v1491
        %1539 = vmatprep.subr.mxu0 0.0
        %1540 = vmatpush1.msra.mxu0 %v1492
        %1541 = vmatprep.subr.mxu0 0.0
        %1542 = vmatpush1.msra.mxu0 %v1493
        %1543 = vmatprep.subr.mxu0 0.0
        %1544 = vmatpush1.msra.mxu0 %v1494
        %1545 = vmatprep.subr.mxu0 0.0
        %1546 = vmatpush1.msra.mxu0 %v1495
        %1547 = vmatprep.subr.mxu0 0.0
        %1548 = vmatpush1.msra.mxu0 %v1496
        %1549 = vmatprep.subr.mxu0 0.0
        %1550 = vmatpush1.msra.mxu0 %v1497
        %1551 = vmatprep.subr.mxu0 0.0
        %1552 = vmatpush1.msra.mxu0 %v1498
        %1553 = vmatprep.subr.mxu0 0.0
        %1554 = vmatpush1.msra.mxu0 %v1499
        %1555 = vmatprep.subr.mxu0 0.0
        %1556 = vmatpush1.msra.mxu0 %v1500
        %1557 = vmatprep.subr.mxu0 0.0
        %1558 = vmatpush1.msra.mxu0 %v1501
        %1559 = vmatprep.subr.mxu0 0.0
        %1560 = vmatpush1.msra.mxu0 %v1502
        %1561 = vmatprep.subr.mxu0 0.0
        %1562 = vmatpush1.msra.mxu0 %v1503
        %1563 = vmatprep.subr.mxu0 0.0
        %1564 = vmatpush1.msra.mxu0 %v1504
        %1565 = vmatprep.subr.mxu0 0.0
        %1566 = vmatpush1.msra.mxu0 %v1505
        %1567 = vmatprep.subr.mxu0 0.0
        %1568 = vmatpush1.msra.mxu0 %v1506
        %1569 = vmatprep.subr.mxu0 0.0
        %1570 = vmatpush1.msra.mxu0 %v1507
        %1571 = vmatprep.subr.mxu0 0.0
        %1572 = vmatpush1.msra.mxu0 %v1508
        %1573 = vmatprep.mubr.f32.mxu0 %v1062
        %1574 = vmatmul.mubr.f32.gmra.mrb[0].mxu0 %v1061
        %v1575 = vpop.f32.mrb[0].mxu0
        %v1576 = vadd.f32 0.0, %v1575
        %v1577 = vpop.f32.mrb[0].mxu0
        %1578 = vdwg.mxu0
        %v1579 = vadd.f32 %v1475, %v1576
        %v1580 = vld [vmem:[%s6] sm:$0x1]
        %v1582 = vlaneseq
        %v1583 = vshrl.u32 %v1582, 7
        %v1584 = vsub.s32 0, %v1583
        %v1585 = vrot.slane %v1580, %v1584
        %v1587 = vadd.f32 %v1579, %v1585
        %vm1588 = vcmask 261120
        %v1589 = vsel %vm1588, %v1587, 0.0
        %1590 = vadd.xlane.f32.xlu0 %v1589
        %v1591 = vpop.xlane.xlu0 %1590
        %v1592 = vrcp.pop 32.0
        %v1593 = vmul.f32 %v1591, %v1592
        %v1594 = vsub.f32 %v1587, %v1593
        %v1595 = vmul.f32 %v1594, %v1594
        %v1596 = vsel %vm1588, %v1595, 0.0
        %1597 = vadd.xlane.f32.xlu0 %v1596
        %v1598 = vpop.xlane.xlu0 %1597
        %v1599 = vmul.f32 %v1598, %v1592
        %v1600 = vadd.f32 %v1599, 1e-05
        %v1601 = vrsqrt.pop %v1600
        %v1602 = vmul.f32 %v1594, %v1601
        %v1603 = vld [vmem:[%s7] sm:$0x1]
        %v1605 = vlaneseq
        %v1606 = vshrl.u32 %v1605, 7
        %v1607 = vsub.s32 0, %v1606
        %v1608 = vrot.slane %v1603, %v1607
        %v1610 = vmul.f32 %v1602, %v1608
        %v1611 = vld [vmem:[%s8] sm:$0x1]
        %v1613 = vlaneseq
        %v1614 = vshrl.u32 %v1613, 7
        %v1615 = vsub.s32 0, %v1614
        %v1616 = vrot.slane %v1611, %v1615
        %v1618 = vadd.f32 %v1610, %v1616
        %1619 = vst.msk [vmem:[%s325] sm:$0xff] %vm1588, %v1618
        %s1620 = sand.u32 %s225, 1
        %s1621 = scalar_lea.sflag [#allocation3], %s1620
        %s1622 = sand.u32 %s225, 1
        %s1623 = smul.addr %s1622, 8
        %s1624 = scalar_lea.vmem [#allocation2], %s1623
        // Predicated region
        $region57: #{pixel_encoder_forward.1} parent=55 // pred_check
          %p1625 = pneg %p235
        $region58: #{pixel_encoder_forward.1} parent=55 // pred_check_branch
          %1627 = sbr.rel (%p1625) target = $region60
        $region59: #{pixel_encoder_forward.1} parent=55 // pred_region
          %s1629 = ssub.s32 128, 128
          %1630 = vsyncadd %s1621, %s1629
          %s1631 = smul.addr %s23, 128
          %s1632 = scalar_lea.hbm %s9, %s1631
          %s1634 = sshll.u32 %s1624, 4
          %s1635 = int_to_ptr.vmem [resolvable:$true] %s1634
          %1637 = dma.vmem_to_hbm [thread:$0]  %s1635, 128, %s1632, %s1621
        $region60: #{pixel_encoder_forward.1} parent=55 // pred_fallthru
          _
      $region56: #{pixel_encoder_forward.1} parent=5 // pred_fallthru
        _
      %p1638 = scmp.le.s32.totalorder 2, %s18
      // Predicated region
      $region61: #{pixel_encoder_forward.1} parent=5 // pred_check
        %p1639 = pneg %p1638
      $region62: #{pixel_encoder_forward.1} parent=5 // pred_check_branch
        %1641 = sbr.rel (%p1639) target = $region64
      $region63: #{pixel_encoder_forward.1} parent=5 // pred_region
        %s1642 = ssub.s32 %s18, 2
        // Predicated region
        $region65: #{pixel_encoder_forward.1} parent=63 // pred_check
          %p1643 = pneg %p241
        $region66: #{pixel_encoder_forward.1} parent=63 // pred_check_branch
          %1645 = sbr.rel (%p1643) target = $region68
        $region67: #{pixel_encoder_forward.1} parent=63 // pred_region
          %s1646 = sand.u32 %s226, 1
          %s1647 = scalar_lea.sflag [#allocation3], %s1646
          %s1648 = sand.u32 %s226, 1
          %s1649 = smul.addr %s1648, 8
          %s1650 = scalar_lea.vmem [#allocation2], %s1649
          %1651 = dma.done %s1647, 128
        $region68: #{pixel_encoder_forward.1} parent=63 // pred_fallthru
          _
      $region64: #{pixel_encoder_forward.1} parent=5 // pred_fallthru
        _
    $region6: #{pixel_encoder_forward.1} parent=1 // loop_footer
      %s22 = sadd.s32 1, %s18
    $region7: #{pixel_encoder_forward.1} parent=1 // loop_footer_branch
      %17 = sbr.rel target = $region3
    $region8: #{pixel_encoder_forward.1} parent=1 // loop_exit
      _
    %1652 = vsyncpa [#allocation3], 1
    %s1653 = scalar_lea.sflag [#allocation3], 1
    %1654 = vsyncpa %s1653, 1

</llo_original>
